<compile_context>
chip_gen: v6e
topology: v6e:2x2x1
jax: 0.10.0
libtpu: 0.0.40
codegen_flags: <defaults>
</compile_context>

<pallas_src>
import jax
import jax.numpy as jnp
from jax import lax
from jax.experimental import pallas as pl
from jax.experimental.pallas import tpu as pltpu

NUM_STOCKS = 503          # fixed module-level constant in the PyTorch code
NUM_LAYERS = 2            # small config for the demo
HIDDEN = 128              # keeps the 4 LSTM gates lane-aligned (4*H = 512)
WINDOW = 8                # seq length (window_size)
BATCH = 2
INPUT_SIZE = 2 * NUM_STOCKS


def _round_up(x, m):
    return (x + m - 1) // m * m


def _make_kernel(num_layers, hidden, seq, batch):
    """Builds the Pallas kernel body for fixed (num_layers, hidden, seq, batch)."""
    H = hidden
    B = batch
    T = seq
    n_fused = 2 * (num_layers - 1)

    def lstm_cell(gates, c_prev):
        # PyTorch gate ordering: i, f, g, o  (lane slices at 128-multiples)
        i_g = jax.nn.sigmoid(gates[:, 0:H])
        f_g = jax.nn.sigmoid(gates[:, H:2 * H])
        g_g = jnp.tanh(gates[:, 2 * H:3 * H])
        o_g = jax.nn.sigmoid(gates[:, 3 * H:4 * H])
        c_new = f_g * c_prev + i_g * g_g
        h_new = o_g * jnp.tanh(c_new)
        return h_new, c_new

    def kernel(x_ref, wih0_ref, whh0_ref, b0_ref, *rest):
        fused_refs = rest[:n_fused]              # per layer l>=1: (2H,4H) bf16, (1,4H) f32
        wlin_ref = rest[n_fused]                 # (L*H, S_pad) bf16
        blin_ref = rest[n_fused + 1]             # (1, S_pad)   f32 (-1e30 in padded lanes)
        out_ref = rest[n_fused + 2]              # (B, S_pad)   f32
        gx_ref = rest[n_fused + 3]               # scratch (T*B, 4H) f32

        # Hoisted layer-0 input projection: the only large-K contraction, done once,
        # off the serial h/c dependency chain.  Bias b_ih0 + b_hh0 folded in here.
        gx_ref[...] = (
            jnp.dot(x_ref[...], wih0_ref[...], preferred_element_type=jnp.float32)
            + b0_ref[...])

        # Pre-broadcast the tiny per-layer biases once (JAX does not CSE broadcasts).
        b_fused = [jnp.broadcast_to(fused_refs[2 * i + 1][...], (B, 4 * H))
                   for i in range(num_layers - 1)]

        hs = [jnp.zeros((B, H), jnp.float32) for _ in range(num_layers)]
        cs = [jnp.zeros((B, H), jnp.float32) for _ in range(num_layers)]

        # Fully unrolled time loop: only small-K recurrent matmuls on the serial path.
        for t in range(T):
            # Layer 0: precomputed input gates + h @ W_hh  (K = H = 128).
            g0 = gx_ref[pl.ds(t * B, B), :] + jnp.dot(
                hs[0].astype(jnp.bfloat16), whh0_ref[...],
                preferred_element_type=jnp.float32)
            hs[0], cs[0] = lstm_cell(g0, cs[0])
            # Layers >= 1: fused [input, h] @ [W_ih; W_hh]  (K = 2H = 256).
            for l in range(1, num_layers):
                inp_h = jnp.concatenate([hs[l - 1], hs[l]], axis=-1).astype(jnp.bfloat16)
                g = jnp.dot(inp_h, fused_refs[2 * (l - 1)][...],
                            preferred_element_type=jnp.float32) + b_fused[l - 1]
                hs[l], cs[l] = lstm_cell(g, cs[l])

        # h_n.transpose(0, 1).flatten(1) == concat of per-layer final h (layer order).
        h_flat = jnp.concatenate(hs, axis=-1).astype(jnp.bfloat16)   # (B, L*H)
        logits = (jnp.dot(h_flat, wlin_ref[...], preferred_element_type=jnp.float32)
                  + blin_ref[...])                                   # (B, S_pad)

        # softmax over the last dim; padded lanes carry logits = -1e30 -> exp == 0.
        m = jnp.max(logits, axis=-1, keepdims=True)
        e = jnp.exp(logits - m)
        probs = e / jnp.sum(e, axis=-1, keepdims=True)

        # First iteration of `while output.sum() > 1: output = output / output.sum()`
        # fused into the kernel as a guarded divide (padded lanes are exact zeros, so
        # the whole-tensor sum matches the unpadded one).  The remainder of the while
        # loop runs in the wrapper to keep exact reference semantics.
        total = jnp.sum(probs)
        scale = jnp.where(total > 1.0, total, jnp.float32(1.0))
        out_ref[...] = probs / scale

    return kernel


def init_params(key, num_layers=NUM_LAYERS, hidden=HIDDEN):
    """Deterministic parameter init matching the PyTorch module's shapes (torch layouts)."""
    scale = 1.0 / jnp.sqrt(jnp.float32(hidden))
    params = {"lstm": [], "linear": {}}
    for l in range(num_layers):
        in_l = INPUT_SIZE if l == 0 else hidden
        key, k1, k2, k3, k4 = jax.random.split(key, 5)
        params["lstm"].append({
            "w_ih": jax.random.uniform(k1, (4 * hidden, in_l), jnp.float32, -scale, scale),
            "w_hh": jax.random.uniform(k2, (4 * hidden, hidden), jnp.float32, -scale, scale),
            "b_ih": jax.random.uniform(k3, (4 * hidden,), jnp.float32, -scale, scale),
            "b_hh": jax.random.uniform(k4, (4 * hidden,), jnp.float32, -scale, scale),
        })
    key, k1, k2 = jax.random.split(key, 3)
    lin_scale = 1.0 / jnp.sqrt(jnp.float32(num_layers * hidden))
    params["linear"]["w"] = jax.random.uniform(
        k1, (NUM_STOCKS, num_layers * hidden), jnp.float32, -lin_scale, lin_scale)
    params["linear"]["b"] = jax.random.uniform(
        k2, (NUM_STOCKS,), jnp.float32, -lin_scale, lin_scale)
    return params


def prepare_kernel_weights(params):
    """One-time (outside jit) conversion of torch-layout params to kernel layout:
    transposed, layer>=1 input/recurrent weights fused, biases combined, num_stocks and
    the layer-0 K dim padded to multiples of 128, everything matmul-facing cast to bf16."""
    lstm = params["lstm"]
    num_layers = len(lstm)
    H = lstm[0]["w_hh"].shape[1]
    in0 = lstm[0]["w_ih"].shape[1]
    in0_pad = _round_up(in0, 128)

    kw = []
    # Layer 0: transposed, zero-padded on the contraction dim.
    w_ih0 = jnp.zeros((in0_pad, 4 * H), jnp.float32).at[:in0, :].set(
        jnp.transpose(lstm[0]["w_ih"]))
    kw.append(w_ih0.astype(jnp.bfloat16))                                    # (F0_pad, 4H)
    kw.append(jnp.transpose(lstm[0]["w_hh"]).astype(jnp.bfloat16))           # (H, 4H)
    kw.append((lstm[0]["b_ih"] + lstm[0]["b_hh"])[None, :].astype(jnp.float32))

    # Layers >= 1: fused [W_ih; W_hh] so each step does one K=2H matmul.
    for l in range(1, num_layers):
        p = lstm[l]
        w_fused = jnp.concatenate(
            [jnp.transpose(p["w_ih"]), jnp.transpose(p["w_hh"])], axis=0)    # (2H, 4H)
        kw.append(w_fused.astype(jnp.bfloat16))
        kw.append((p["b_ih"] + p["b_hh"])[None, :].astype(jnp.float32))

    # Linear: transpose + pad num_stocks to a multiple of 128 (zero weight cols, -1e30 bias
    # so the padded lanes vanish under softmax).
    w_lin = jnp.transpose(params["linear"]["w"])                             # (L*H, S)
    S = w_lin.shape[1]
    S_pad = _round_up(S, 128)
    w_lin_p = jnp.zeros((w_lin.shape[0], S_pad), jnp.float32).at[:, :S].set(w_lin)
    b_lin_p = jnp.full((1, S_pad), -1e30, jnp.float32).at[0, :S].set(params["linear"]["b"])
    kw.append(w_lin_p.astype(jnp.bfloat16))
    kw.append(b_lin_p)
    return tuple(kw)


@jax.jit
def deep_portfolio_forward(x, kernel_weights):
    """x: (batch, seq, 2*num_stocks) f32; kernel_weights: prepare_kernel_weights(params).
    Returns (batch, num_stocks) portfolio weights."""
    B, T, F0 = x.shape
    num_layers = (len(kernel_weights) - 3) // 2
    H = kernel_weights[1].shape[0]
    F0_pad = kernel_weights[0].shape[0]
    S_pad = kernel_weights[-1].shape[1]

    # Time-major, flattened to (T*B, F0), bf16, zero-padded on the feature axis to match
    # the padded layer-0 weight (~64 KB of movement; no per-call weight transposes).
    x_kl = jnp.transpose(x, (1, 0, 2)).reshape(T * B, F0).astype(jnp.bfloat16)
    x_kl = jnp.pad(x_kl, ((0, 0), (0, F0_pad - F0)))

    kernel = _make_kernel(num_layers, H, T, B)
    vmem_spec = pl.BlockSpec(memory_space=pltpu.MemorySpace.VMEM)

    probs_pad = pl.pallas_call(
        kernel,
        out_shape=jax.ShapeDtypeStruct((B, S_pad), jnp.float32),
        in_specs=[vmem_spec] * (1 + len(kernel_weights)),
        out_specs=vmem_spec,
        scratch_shapes=[pltpu.VMEM((T * B, 4 * H), jnp.float32)],
    )(x_kl, *kernel_weights)

    probs = probs_pad[:, :NUM_STOCKS]

    # Residual of `while output.sum() > 1: output = output / output.sum()` — the first
    # guarded division already happened in the kernel; this loop almost never takes a
    # body iteration, it just re-checks the condition (exact reference semantics kept).
    probs = lax.while_loop(lambda o: jnp.sum(o) > 1.0,
                           lambda o: o / jnp.sum(o),
                           probs)
    # TODO(synk): inter-layer LSTM dropout (training-mode only, dropout=0 here) is not modeled.
    return probs


if __name__ == "__main__":
    key = jax.random.PRNGKey(0)
    pkey, xkey = jax.random.split(key)
    params = init_params(pkey)
    kernel_weights = prepare_kernel_weights(params)    # one-time, outside jit
    x = jax.random.normal(xkey, (BATCH, WINDOW, INPUT_SIZE), dtype=jnp.float32)

    out = deep_portfolio_forward(x, kernel_weights)
    out = jax.block_until_ready(out)

    assert out.shape == (BATCH, NUM_STOCKS), out.shape
    assert bool(jnp.all(jnp.isfinite(out)))
    assert float(jnp.sum(out)) <= 1.0 + 1e-6
    print("KERNEL_OK")
</pallas_src>

<mosaic_0001>
module attributes {stable_mosaic.version = 11 : i64} {
  func.func @kernel(%arg0: memref<16x1024xbf16, #tpu.memory_space<vmem>>, %arg1: memref<1024x512xbf16, #tpu.memory_space<vmem>>, %arg2: memref<128x512xbf16, #tpu.memory_space<vmem>>, %arg3: memref<1x512xf32, #tpu.memory_space<vmem>>, %arg4: memref<256x512xbf16, #tpu.memory_space<vmem>>, %arg5: memref<1x512xf32, #tpu.memory_space<vmem>>, %arg6: memref<256x512xbf16, #tpu.memory_space<vmem>>, %arg7: memref<1x512xf32, #tpu.memory_space<vmem>>, %arg8: memref<2x512xf32, #tpu.memory_space<vmem>>, %arg9: memref<16x512xf32, #tpu.memory_space<vmem>>) attributes {dimension_semantics = [], scalar_prefetch = 0 : i64, scratch_operands = 1 : i64, tpu.core_type = #tpu.core_type<tc>} {
    %c0 = arith.constant 0 : index
    %c0_0 = arith.constant 0 : index
    %0 = vector.load %arg0[%c0, %c0_0] : memref<16x1024xbf16, #tpu.memory_space<vmem>>, vector<16x1024xbf16>
    %c0_1 = arith.constant 0 : index
    %c0_2 = arith.constant 0 : index
    %1 = vector.load %arg1[%c0_1, %c0_2] : memref<1024x512xbf16, #tpu.memory_space<vmem>>, vector<1024x512xbf16>
    %cst = arith.constant dense<0.000000e+00> : vector<16x512xf32>
    %2 = tpu.matmul %0, %1, %cst {dimension_numbers = #tpu.dot_dimension_numbers<[1], [0], [0], [1], [0, 0, 1, 1], [], []>} : vector<16x1024xbf16>, vector<1024x512xbf16>, vector<16x512xf32> -> vector<16x512xf32>
    %c0_3 = arith.constant 0 : index
    %c0_4 = arith.constant 0 : index
    %3 = vector.load %arg3[%c0_3, %c0_4] : memref<1x512xf32, #tpu.memory_space<vmem>>, vector<1x512xf32>
    %4 = vector.broadcast %3 : vector<1x512xf32> to vector<16x512xf32>
    %5 = arith.addf %2, %4 : vector<16x512xf32>
    %c0_5 = arith.constant 0 : index
    %c0_6 = arith.constant 0 : index
    %6 = vector.load %arg9[%c0_5, %c0_6] : memref<16x512xf32, #tpu.memory_space<vmem>>, vector<16x512xf32>
    tpu.vector_store %arg9[%c0_5, %c0_6], %5 {strides = array<i32>} : memref<16x512xf32, #tpu.memory_space<vmem>>, vector<16x512xf32>,
    %c0_7 = arith.constant 0 : index
    %c0_8 = arith.constant 0 : index
    %7 = vector.load %arg5[%c0_7, %c0_8] : memref<1x512xf32, #tpu.memory_space<vmem>>, vector<1x512xf32>
    %8 = vector.shape_cast %7 : vector<1x512xf32> to vector<1x512xf32>
    %9 = vector.broadcast %8 : vector<1x512xf32> to vector<2x512xf32>
    %cst_9 = arith.constant 0.000000e+00 : f32
    %10 = vector.broadcast %cst_9 : f32 to vector<2x128xf32>
    %cst_10 = arith.constant 0.000000e+00 : f32
    %11 = vector.broadcast %cst_10 : f32 to vector<2x128xf32>
    %cst_11 = arith.constant 0.000000e+00 : f32
    %12 = vector.broadcast %cst_11 : f32 to vector<2x128xf32>
    %cst_12 = arith.constant 0.000000e+00 : f32
    %13 = vector.broadcast %cst_12 : f32 to vector<2x128xf32>
    %c0_13 = arith.constant 0 : index
    %c0_14 = arith.constant 0 : index
    %14 = vector.load %arg9[%c0_13, %c0_14] : memref<16x512xf32, #tpu.memory_space<vmem>>, vector<2x512xf32>
    %15 = arith.truncf %10 : vector<2x128xf32> to vector<2x128xbf16>
    %c0_15 = arith.constant 0 : index
    %c0_16 = arith.constant 0 : index
    %16 = vector.load %arg2[%c0_15, %c0_16] : memref<128x512xbf16, #tpu.memory_space<vmem>>, vector<128x512xbf16>
    %cst_17 = arith.constant dense<0.000000e+00> : vector<2x512xf32>
    %17 = tpu.matmul %15, %16, %cst_17 {dimension_numbers = #tpu.dot_dimension_numbers<[1], [0], [0], [1], [0, 0, 1, 1], [], []>} : vector<2x128xbf16>, vector<128x512xbf16>, vector<2x512xf32> -> vector<2x512xf32>
    %18 = arith.addf %14, %17 : vector<2x512xf32>
    %19 = vector.extract_strided_slice %18 {offsets = [0, 0], sizes = [2, 128], strides = [1, 1]} : vector<2x512xf32> to vector<2x128xf32>
    %20 = arith.negf %19 : vector<2x128xf32>
    %21 = math.exp %20 : vector<2x128xf32>
    %cst_18 = arith.constant 1.000000e+00 : f32
    %22 = vector.broadcast %cst_18 : f32 to vector<2x128xf32>
    %23 = arith.addf %22, %21 : vector<2x128xf32>
    %24 = arith.divf %22, %23 : vector<2x128xf32>
    %25 = vector.extract_strided_slice %18 {offsets = [0, 128], sizes = [2, 128], strides = [1, 1]} : vector<2x512xf32> to vector<2x128xf32>
    %26 = arith.negf %25 : vector<2x128xf32>
    %27 = math.exp %26 : vector<2x128xf32>
    %cst_19 = arith.constant 1.000000e+00 : f32
    %28 = vector.broadcast %cst_19 : f32 to vector<2x128xf32>
    %29 = arith.addf %28, %27 : vector<2x128xf32>
    %30 = arith.divf %28, %29 : vector<2x128xf32>
    %31 = vector.extract_strided_slice %18 {offsets = [0, 256], sizes = [2, 128], strides = [1, 1]} : vector<2x512xf32> to vector<2x128xf32>
    %32 = math.tanh %31 : vector<2x128xf32>
    %33 = vector.extract_strided_slice %18 {offsets = [0, 384], sizes = [2, 128], strides = [1, 1]} : vector<2x512xf32> to vector<2x128xf32>
    %34 = arith.negf %33 : vector<2x128xf32>
    %35 = math.exp %34 : vector<2x128xf32>
    %cst_20 = arith.constant 1.000000e+00 : f32
    %36 = vector.broadcast %cst_20 : f32 to vector<2x128xf32>
    %37 = arith.addf %36, %35 : vector<2x128xf32>
    %38 = arith.divf %36, %37 : vector<2x128xf32>
    %39 = arith.mulf %30, %12 : vector<2x128xf32>
    %40 = arith.mulf %24, %32 : vector<2x128xf32>
    %41 = arith.addf %39, %40 : vector<2x128xf32>
    %42 = math.tanh %41 : vector<2x128xf32>
    %43 = arith.mulf %38, %42 : vector<2x128xf32>
    %44 = tpu.concatenate %43, %11 in 1 : vector<2x128xf32>, vector<2x128xf32> -> vector<2x256xf32>
    %45 = arith.truncf %44 : vector<2x256xf32> to vector<2x256xbf16>
    %c0_21 = arith.constant 0 : index
    %c0_22 = arith.constant 0 : index
    %46 = vector.load %arg4[%c0_21, %c0_22] : memref<256x512xbf16, #tpu.memory_space<vmem>>, vector<256x512xbf16>
    %cst_23 = arith.constant dense<0.000000e+00> : vector<2x512xf32>
    %47 = tpu.matmul %45, %46, %cst_23 {dimension_numbers = #tpu.dot_dimension_numbers<[1], [0], [0], [1], [0, 0, 1, 1], [], []>} : vector<2x256xbf16>, vector<256x512xbf16>, vector<2x512xf32> -> vector<2x512xf32>
    %48 = arith.addf %47, %9 : vector<2x512xf32>
    %49 = vector.extract_strided_slice %48 {offsets = [0, 0], sizes = [2, 128], strides = [1, 1]} : vector<2x512xf32> to vector<2x128xf32>
    %50 = arith.negf %49 : vector<2x128xf32>
    %51 = math.exp %50 : vector<2x128xf32>
    %cst_24 = arith.constant 1.000000e+00 : f32
    %52 = vector.broadcast %cst_24 : f32 to vector<2x128xf32>
    %53 = arith.addf %52, %51 : vector<2x128xf32>
    %54 = arith.divf %52, %53 : vector<2x128xf32>
    %55 = vector.extract_strided_slice %48 {offsets = [0, 128], sizes = [2, 128], strides = [1, 1]} : vector<2x512xf32> to vector<2x128xf32>
    %56 = arith.negf %55 : vector<2x128xf32>
    %57 = math.exp %56 : vector<2x128xf32>
    %cst_25 = arith.constant 1.000000e+00 : f32
    %58 = vector.broadcast %cst_25 : f32 to vector<2x128xf32>
    %59 = arith.addf %58, %57 : vector<2x128xf32>
    %60 = arith.divf %58, %59 : vector<2x128xf32>
    %61 = vector.extract_strided_slice %48 {offsets = [0, 256], sizes = [2, 128], strides = [1, 1]} : vector<2x512xf32> to vector<2x128xf32>
    %62 = math.tanh %61 : vector<2x128xf32>
    %63 = vector.extract_strided_slice %48 {offsets = [0, 384], sizes = [2, 128], strides = [1, 1]} : vector<2x512xf32> to vector<2x128xf32>
    %64 = arith.negf %63 : vector<2x128xf32>
    %65 = math.exp %64 : vector<2x128xf32>
    %cst_26 = arith.constant 1.000000e+00 : f32
    %66 = vector.broadcast %cst_26 : f32 to vector<2x128xf32>
    %67 = arith.addf %66, %65 : vector<2x128xf32>
    %68 = arith.divf %66, %67 : vector<2x128xf32>
    %69 = arith.mulf %60, %13 : vector<2x128xf32>
    %70 = arith.mulf %54, %62 : vector<2x128xf32>
    %71 = arith.addf %69, %70 : vector<2x128xf32>
    %72 = math.tanh %71 : vector<2x128xf32>
    %73 = arith.mulf %68, %72 : vector<2x128xf32>
    %c2 = arith.constant 2 : index
    %c0_27 = arith.constant 0 : index
    %74 = vector.load %arg9[%c2, %c0_27] : memref<16x512xf32, #tpu.memory_space<vmem>>, vector<2x512xf32>
    %75 = arith.truncf %43 : vector<2x128xf32> to vector<2x128xbf16>
    %c0_28 = arith.constant 0 : index
    %c0_29 = arith.constant 0 : index
    %76 = vector.load %arg2[%c0_28, %c0_29] : memref<128x512xbf16, #tpu.memory_space<vmem>>, vector<128x512xbf16>
    %cst_30 = arith.constant dense<0.000000e+00> : vector<2x512xf32>
    %77 = tpu.matmul %75, %76, %cst_30 {dimension_numbers = #tpu.dot_dimension_numbers<[1], [0], [0], [1], [0, 0, 1, 1], [], []>} : vector<2x128xbf16>, vector<128x512xbf16>, vector<2x512xf32> -> vector<2x512xf32>
    %78 = arith.addf %74, %77 : vector<2x512xf32>
    %79 = vector.extract_strided_slice %78 {offsets = [0, 0], sizes = [2, 128], strides = [1, 1]} : vector<2x512xf32> to vector<2x128xf32>
    %80 = arith.negf %79 : vector<2x128xf32>
    %81 = math.exp %80 : vector<2x128xf32>
    %cst_31 = arith.constant 1.000000e+00 : f32
    %82 = vector.broadcast %cst_31 : f32 to vector<2x128xf32>
    %83 = arith.addf %82, %81 : vector<2x128xf32>
    %84 = arith.divf %82, %83 : vector<2x128xf32>
    %85 = vector.extract_strided_slice %78 {offsets = [0, 128], sizes = [2, 128], strides = [1, 1]} : vector<2x512xf32> to vector<2x128xf32>
    %86 = arith.negf %85 : vector<2x128xf32>
    %87 = math.exp %86 : vector<2x128xf32>
    %cst_32 = arith.constant 1.000000e+00 : f32
    %88 = vector.broadcast %cst_32 : f32 to vector<2x128xf32>
    %89 = arith.addf %88, %87 : vector<2x128xf32>
    %90 = arith.divf %88, %89 : vector<2x128xf32>
    %91 = vector.extract_strided_slice %78 {offsets = [0, 256], sizes = [2, 128], strides = [1, 1]} : vector<2x512xf32> to vector<2x128xf32>
    %92 = math.tanh %91 : vector<2x128xf32>
    %93 = vector.extract_strided_slice %78 {offsets = [0, 384], sizes = [2, 128], strides = [1, 1]} : vector<2x512xf32> to vector<2x128xf32>
    %94 = arith.negf %93 : vector<2x128xf32>
    %95 = math.exp %94 : vector<2x128xf32>
    %cst_33 = arith.constant 1.000000e+00 : f32
    %96 = vector.broadcast %cst_33 : f32 to vector<2x128xf32>
    %97 = arith.addf %96, %95 : vector<2x128xf32>
    %98 = arith.divf %96, %97 : vector<2x128xf32>
    %99 = arith.mulf %90, %41 : vector<2x128xf32>
    %100 = arith.mulf %84, %92 : vector<2x128xf32>
    %101 = arith.addf %99, %100 : vector<2x128xf32>
    %102 = math.tanh %101 : vector<2x128xf32>
    %103 = arith.mulf %98, %102 : vector<2x128xf32>
    %104 = tpu.concatenate %103, %73 in 1 : vector<2x128xf32>, vector<2x128xf32> -> vector<2x256xf32>
    %105 = arith.truncf %104 : vector<2x256xf32> to vector<2x256xbf16>
    %c0_34 = arith.constant 0 : index
    %c0_35 = arith.constant 0 : index
    %106 = vector.load %arg4[%c0_34, %c0_35] : memref<256x512xbf16, #tpu.memory_space<vmem>>, vector<256x512xbf16>
    %cst_36 = arith.constant dense<0.000000e+00> : vector<2x512xf32>
    %107 = tpu.matmul %105, %106, %cst_36 {dimension_numbers = #tpu.dot_dimension_numbers<[1], [0], [0], [1], [0, 0, 1, 1], [], []>} : vector<2x256xbf16>, vector<256x512xbf16>, vector<2x512xf32> -> vector<2x512xf32>
    %108 = arith.addf %107, %9 : vector<2x512xf32>
    %109 = vector.extract_strided_slice %108 {offsets = [0, 0], sizes = [2, 128], strides = [1, 1]} : vector<2x512xf32> to vector<2x128xf32>
    %110 = arith.negf %109 : vector<2x128xf32>
    %111 = math.exp %110 : vector<2x128xf32>
    %cst_37 = arith.constant 1.000000e+00 : f32
    %112 = vector.broadcast %cst_37 : f32 to vector<2x128xf32>
    %113 = arith.addf %112, %111 : vector<2x128xf32>
    %114 = arith.divf %112, %113 : vector<2x128xf32>
    %115 = vector.extract_strided_slice %108 {offsets = [0, 128], sizes = [2, 128], strides = [1, 1]} : vector<2x512xf32> to vector<2x128xf32>
    %116 = arith.negf %115 : vector<2x128xf32>
    %117 = math.exp %116 : vector<2x128xf32>
    %cst_38 = arith.constant 1.000000e+00 : f32
    %118 = vector.broadcast %cst_38 : f32 to vector<2x128xf32>
    %119 = arith.addf %118, %117 : vector<2x128xf32>
    %120 = arith.divf %118, %119 : vector<2x128xf32>
    %121 = vector.extract_strided_slice %108 {offsets = [0, 256], sizes = [2, 128], strides = [1, 1]} : vector<2x512xf32> to vector<2x128xf32>
    %122 = math.tanh %121 : vector<2x128xf32>
    %123 = vector.extract_strided_slice %108 {offsets = [0, 384], sizes = [2, 128], strides = [1, 1]} : vector<2x512xf32> to vector<2x128xf32>
    %124 = arith.negf %123 : vector<2x128xf32>
    %125 = math.exp %124 : vector<2x128xf32>
    %cst_39 = arith.constant 1.000000e+00 : f32
    %126 = vector.broadcast %cst_39 : f32 to vector<2x128xf32>
    %127 = arith.addf %126, %125 : vector<2x128xf32>
    %128 = arith.divf %126, %127 : vector<2x128xf32>
    %129 = arith.mulf %120, %71 : vector<2x128xf32>
    %130 = arith.mulf %114, %122 : vector<2x128xf32>
    %131 = arith.addf %129, %130 : vector<2x128xf32>
    %132 = math.tanh %131 : vector<2x128xf32>
    %133 = arith.mulf %128, %132 : vector<2x128xf32>
    %c4 = arith.constant 4 : index
    %c0_40 = arith.constant 0 : index
    %134 = vector.load %arg9[%c4, %c0_40] : memref<16x512xf32, #tpu.memory_space<vmem>>, vector<2x512xf32>
    %135 = arith.truncf %103 : vector<2x128xf32> to vector<2x128xbf16>
    %c0_41 = arith.constant 0 : index
    %c0_42 = arith.constant 0 : index
    %136 = vector.load %arg2[%c0_41, %c0_42] : memref<128x512xbf16, #tpu.memory_space<vmem>>, vector<128x512xbf16>
    %cst_43 = arith.constant dense<0.000000e+00> : vector<2x512xf32>
    %137 = tpu.matmul %135, %136, %cst_43 {dimension_numbers = #tpu.dot_dimension_numbers<[1], [0], [0], [1], [0, 0, 1, 1], [], []>} : vector<2x128xbf16>, vector<128x512xbf16>, vector<2x512xf32> -> vector<2x512xf32>
    %138 = arith.addf %134, %137 : vector<2x512xf32>
    %139 = vector.extract_strided_slice %138 {offsets = [0, 0], sizes = [2, 128], strides = [1, 1]} : vector<2x512xf32> to vector<2x128xf32>
    %140 = arith.negf %139 : vector<2x128xf32>
    %141 = math.exp %140 : vector<2x128xf32>
    %cst_44 = arith.constant 1.000000e+00 : f32
    %142 = vector.broadcast %cst_44 : f32 to vector<2x128xf32>
    %143 = arith.addf %142, %141 : vector<2x128xf32>
    %144 = arith.divf %142, %143 : vector<2x128xf32>
    %145 = vector.extract_strided_slice %138 {offsets = [0, 128], sizes = [2, 128], strides = [1, 1]} : vector<2x512xf32> to vector<2x128xf32>
    %146 = arith.negf %145 : vector<2x128xf32>
    %147 = math.exp %146 : vector<2x128xf32>
    %cst_45 = arith.constant 1.000000e+00 : f32
    %148 = vector.broadcast %cst_45 : f32 to vector<2x128xf32>
    %149 = arith.addf %148, %147 : vector<2x128xf32>
    %150 = arith.divf %148, %149 : vector<2x128xf32>
    %151 = vector.extract_strided_slice %138 {offsets = [0, 256], sizes = [2, 128], strides = [1, 1]} : vector<2x512xf32> to vector<2x128xf32>
    %152 = math.tanh %151 : vector<2x128xf32>
    %153 = vector.extract_strided_slice %138 {offsets = [0, 384], sizes = [2, 128], strides = [1, 1]} : vector<2x512xf32> to vector<2x128xf32>
    %154 = arith.negf %153 : vector<2x128xf32>
    %155 = math.exp %154 : vector<2x128xf32>
    %cst_46 = arith.constant 1.000000e+00 : f32
    %156 = vector.broadcast %cst_46 : f32 to vector<2x128xf32>
    %157 = arith.addf %156, %155 : vector<2x128xf32>
    %158 = arith.divf %156, %157 : vector<2x128xf32>
    %159 = arith.mulf %150, %101 : vector<2x128xf32>
    %160 = arith.mulf %144, %152 : vector<2x128xf32>
    %161 = arith.addf %159, %160 : vector<2x128xf32>
    %162 = math.tanh %161 : vector<2x128xf32>
    %163 = arith.mulf %158, %162 : vector<2x128xf32>
    %164 = tpu.concatenate %163, %133 in 1 : vector<2x128xf32>, vector<2x128xf32> -> vector<2x256xf32>
    %165 = arith.truncf %164 : vector<2x256xf32> to vector<2x256xbf16>
    %c0_47 = arith.constant 0 : index
    %c0_48 = arith.constant 0 : index
    %166 = vector.load %arg4[%c0_47, %c0_48] : memref<256x512xbf16, #tpu.memory_space<vmem>>, vector<256x512xbf16>
    %cst_49 = arith.constant dense<0.000000e+00> : vector<2x512xf32>
    %167 = tpu.matmul %165, %166, %cst_49 {dimension_numbers = #tpu.dot_dimension_numbers<[1], [0], [0], [1], [0, 0, 1, 1], [], []>} : vector<2x256xbf16>, vector<256x512xbf16>, vector<2x512xf32> -> vector<2x512xf32>
    %168 = arith.addf %167, %9 : vector<2x512xf32>
    %169 = vector.extract_strided_slice %168 {offsets = [0, 0], sizes = [2, 128], strides = [1, 1]} : vector<2x512xf32> to vector<2x128xf32>
    %170 = arith.negf %169 : vector<2x128xf32>
    %171 = math.exp %170 : vector<2x128xf32>
    %cst_50 = arith.constant 1.000000e+00 : f32
    %172 = vector.broadcast %cst_50 : f32 to vector<2x128xf32>
    %173 = arith.addf %172, %171 : vector<2x128xf32>
    %174 = arith.divf %172, %173 : vector<2x128xf32>
    %175 = vector.extract_strided_slice %168 {offsets = [0, 128], sizes = [2, 128], strides = [1, 1]} : vector<2x512xf32> to vector<2x128xf32>
    %176 = arith.negf %175 : vector<2x128xf32>
    %177 = math.exp %176 : vector<2x128xf32>
    %cst_51 = arith.constant 1.000000e+00 : f32
    %178 = vector.broadcast %cst_51 : f32 to vector<2x128xf32>
    %179 = arith.addf %178, %177 : vector<2x128xf32>
    %180 = arith.divf %178, %179 : vector<2x128xf32>
    %181 = vector.extract_strided_slice %168 {offsets = [0, 256], sizes = [2, 128], strides = [1, 1]} : vector<2x512xf32> to vector<2x128xf32>
    %182 = math.tanh %181 : vector<2x128xf32>
    %183 = vector.extract_strided_slice %168 {offsets = [0, 384], sizes = [2, 128], strides = [1, 1]} : vector<2x512xf32> to vector<2x128xf32>
    %184 = arith.negf %183 : vector<2x128xf32>
    %185 = math.exp %184 : vector<2x128xf32>
    %cst_52 = arith.constant 1.000000e+00 : f32
    %186 = vector.broadcast %cst_52 : f32 to vector<2x128xf32>
    %187 = arith.addf %186, %185 : vector<2x128xf32>
    %188 = arith.divf %186, %187 : vector<2x128xf32>
    %189 = arith.mulf %180, %131 : vector<2x128xf32>
    %190 = arith.mulf %174, %182 : vector<2x128xf32>
    %191 = arith.addf %189, %190 : vector<2x128xf32>
    %192 = math.tanh %191 : vector<2x128xf32>
    %193 = arith.mulf %188, %192 : vector<2x128xf32>
    %c6 = arith.constant 6 : index
    %c0_53 = arith.constant 0 : index
    %194 = vector.load %arg9[%c6, %c0_53] : memref<16x512xf32, #tpu.memory_space<vmem>>, vector<2x512xf32>
    %195 = arith.truncf %163 : vector<2x128xf32> to vector<2x128xbf16>
    %c0_54 = arith.constant 0 : index
    %c0_55 = arith.constant 0 : index
    %196 = vector.load %arg2[%c0_54, %c0_55] : memref<128x512xbf16, #tpu.memory_space<vmem>>, vector<128x512xbf16>
    %cst_56 = arith.constant dense<0.000000e+00> : vector<2x512xf32>
    %197 = tpu.matmul %195, %196, %cst_56 {dimension_numbers = #tpu.dot_dimension_numbers<[1], [0], [0], [1], [0, 0, 1, 1], [], []>} : vector<2x128xbf16>, vector<128x512xbf16>, vector<2x512xf32> -> vector<2x512xf32>
    %198 = arith.addf %194, %197 : vector<2x512xf32>
    %199 = vector.extract_strided_slice %198 {offsets = [0, 0], sizes = [2, 128], strides = [1, 1]} : vector<2x512xf32> to vector<2x128xf32>
    %200 = arith.negf %199 : vector<2x128xf32>
    %201 = math.exp %200 : vector<2x128xf32>
    %cst_57 = arith.constant 1.000000e+00 : f32
    %202 = vector.broadcast %cst_57 : f32 to vector<2x128xf32>
    %203 = arith.addf %202, %201 : vector<2x128xf32>
    %204 = arith.divf %202, %203 : vector<2x128xf32>
    %205 = vector.extract_strided_slice %198 {offsets = [0, 128], sizes = [2, 128], strides = [1, 1]} : vector<2x512xf32> to vector<2x128xf32>
    %206 = arith.negf %205 : vector<2x128xf32>
    %207 = math.exp %206 : vector<2x128xf32>
    %cst_58 = arith.constant 1.000000e+00 : f32
    %208 = vector.broadcast %cst_58 : f32 to vector<2x128xf32>
    %209 = arith.addf %208, %207 : vector<2x128xf32>
    %210 = arith.divf %208, %209 : vector<2x128xf32>
    %211 = vector.extract_strided_slice %198 {offsets = [0, 256], sizes = [2, 128], strides = [1, 1]} : vector<2x512xf32> to vector<2x128xf32>
    %212 = math.tanh %211 : vector<2x128xf32>
    %213 = vector.extract_strided_slice %198 {offsets = [0, 384], sizes = [2, 128], strides = [1, 1]} : vector<2x512xf32> to vector<2x128xf32>
    %214 = arith.negf %213 : vector<2x128xf32>
    %215 = math.exp %214 : vector<2x128xf32>
    %cst_59 = arith.constant 1.000000e+00 : f32
    %216 = vector.broadcast %cst_59 : f32 to vector<2x128xf32>
    %217 = arith.addf %216, %215 : vector<2x128xf32>
    %218 = arith.divf %216, %217 : vector<2x128xf32>
    %219 = arith.mulf %210, %161 : vector<2x128xf32>
    %220 = arith.mulf %204, %212 : vector<2x128xf32>
    %221 = arith.addf %219, %220 : vector<2x128xf32>
    %222 = math.tanh %221 : vector<2x128xf32>
    %223 = arith.mulf %218, %222 : vector<2x128xf32>
    %224 = tpu.concatenate %223, %193 in 1 : vector<2x128xf32>, vector<2x128xf32> -> vector<2x256xf32>
    %225 = arith.truncf %224 : vector<2x256xf32> to vector<2x256xbf16>
    %c0_60 = arith.constant 0 : index
    %c0_61 = arith.constant 0 : index
    %226 = vector.load %arg4[%c0_60, %c0_61] : memref<256x512xbf16, #tpu.memory_space<vmem>>, vector<256x512xbf16>
    %cst_62 = arith.constant dense<0.000000e+00> : vector<2x512xf32>
    %227 = tpu.matmul %225, %226, %cst_62 {dimension_numbers = #tpu.dot_dimension_numbers<[1], [0], [0], [1], [0, 0, 1, 1], [], []>} : vector<2x256xbf16>, vector<256x512xbf16>, vector<2x512xf32> -> vector<2x512xf32>
    %228 = arith.addf %227, %9 : vector<2x512xf32>
    %229 = vector.extract_strided_slice %228 {offsets = [0, 0], sizes = [2, 128], strides = [1, 1]} : vector<2x512xf32> to vector<2x128xf32>
    %230 = arith.negf %229 : vector<2x128xf32>
    %231 = math.exp %230 : vector<2x128xf32>
    %cst_63 = arith.constant 1.000000e+00 : f32
    %232 = vector.broadcast %cst_63 : f32 to vector<2x128xf32>
    %233 = arith.addf %232, %231 : vector<2x128xf32>
    %234 = arith.divf %232, %233 : vector<2x128xf32>
    %235 = vector.extract_strided_slice %228 {offsets = [0, 128], sizes = [2, 128], strides = [1, 1]} : vector<2x512xf32> to vector<2x128xf32>
    %236 = arith.negf %235 : vector<2x128xf32>
    %237 = math.exp %236 : vector<2x128xf32>
    %cst_64 = arith.constant 1.000000e+00 : f32
    %238 = vector.broadcast %cst_64 : f32 to vector<2x128xf32>
    %239 = arith.addf %238, %237 : vector<2x128xf32>
    %240 = arith.divf %238, %239 : vector<2x128xf32>
    %241 = vector.extract_strided_slice %228 {offsets = [0, 256], sizes = [2, 128], strides = [1, 1]} : vector<2x512xf32> to vector<2x128xf32>
    %242 = math.tanh %241 : vector<2x128xf32>
    %243 = vector.extract_strided_slice %228 {offsets = [0, 384], sizes = [2, 128], strides = [1, 1]} : vector<2x512xf32> to vector<2x128xf32>
    %244 = arith.negf %243 : vector<2x128xf32>
    %245 = math.exp %244 : vector<2x128xf32>
    %cst_65 = arith.constant 1.000000e+00 : f32
    %246 = vector.broadcast %cst_65 : f32 to vector<2x128xf32>
    %247 = arith.addf %246, %245 : vector<2x128xf32>
    %248 = arith.divf %246, %247 : vector<2x128xf32>
    %249 = arith.mulf %240, %191 : vector<2x128xf32>
    %250 = arith.mulf %234, %242 : vector<2x128xf32>
    %251 = arith.addf %249, %250 : vector<2x128xf32>
    %252 = math.tanh %251 : vector<2x128xf32>
    %253 = arith.mulf %248, %252 : vector<2x128xf32>
    %c8 = arith.constant 8 : index
    %c0_66 = arith.constant 0 : index
    %254 = vector.load %arg9[%c8, %c0_66] : memref<16x512xf32, #tpu.memory_space<vmem>>, vector<2x512xf32>
    %255 = arith.truncf %223 : vector<2x128xf32> to vector<2x128xbf16>
    %c0_67 = arith.constant 0 : index
    %c0_68 = arith.constant 0 : index
    %256 = vector.load %arg2[%c0_67, %c0_68] : memref<128x512xbf16, #tpu.memory_space<vmem>>, vector<128x512xbf16>
    %cst_69 = arith.constant dense<0.000000e+00> : vector<2x512xf32>
    %257 = tpu.matmul %255, %256, %cst_69 {dimension_numbers = #tpu.dot_dimension_numbers<[1], [0], [0], [1], [0, 0, 1, 1], [], []>} : vector<2x128xbf16>, vector<128x512xbf16>, vector<2x512xf32> -> vector<2x512xf32>
    %258 = arith.addf %254, %257 : vector<2x512xf32>
    %259 = vector.extract_strided_slice %258 {offsets = [0, 0], sizes = [2, 128], strides = [1, 1]} : vector<2x512xf32> to vector<2x128xf32>
    %260 = arith.negf %259 : vector<2x128xf32>
    %261 = math.exp %260 : vector<2x128xf32>
    %cst_70 = arith.constant 1.000000e+00 : f32
    %262 = vector.broadcast %cst_70 : f32 to vector<2x128xf32>
    %263 = arith.addf %262, %261 : vector<2x128xf32>
    %264 = arith.divf %262, %263 : vector<2x128xf32>
    %265 = vector.extract_strided_slice %258 {offsets = [0, 128], sizes = [2, 128], strides = [1, 1]} : vector<2x512xf32> to vector<2x128xf32>
    %266 = arith.negf %265 : vector<2x128xf32>
    %267 = math.exp %266 : vector<2x128xf32>
    %cst_71 = arith.constant 1.000000e+00 : f32
    %268 = vector.broadcast %cst_71 : f32 to vector<2x128xf32>
    %269 = arith.addf %268, %267 : vector<2x128xf32>
    %270 = arith.divf %268, %269 : vector<2x128xf32>
    %271 = vector.extract_strided_slice %258 {offsets = [0, 256], sizes = [2, 128], strides = [1, 1]} : vector<2x512xf32> to vector<2x128xf32>
    %272 = math.tanh %271 : vector<2x128xf32>
    %273 = vector.extract_strided_slice %258 {offsets = [0, 384], sizes = [2, 128], strides = [1, 1]} : vector<2x512xf32> to vector<2x128xf32>
    %274 = arith.negf %273 : vector<2x128xf32>
    %275 = math.exp %274 : vector<2x128xf32>
    %cst_72 = arith.constant 1.000000e+00 : f32
    %276 = vector.broadcast %cst_72 : f32 to vector<2x128xf32>
    %277 = arith.addf %276, %275 : vector<2x128xf32>
    %278 = arith.divf %276, %277 : vector<2x128xf32>
    %279 = arith.mulf %270, %221 : vector<2x128xf32>
    %280 = arith.mulf %264, %272 : vector<2x128xf32>
    %281 = arith.addf %279, %280 : vector<2x128xf32>
    %282 = math.tanh %281 : vector<2x128xf32>
    %283 = arith.mulf %278, %282 : vector<2x128xf32>
    %284 = tpu.concatenate %283, %253 in 1 : vector<2x128xf32>, vector<2x128xf32> -> vector<2x256xf32>
    %285 = arith.truncf %284 : vector<2x256xf32> to vector<2x256xbf16>
    %c0_73 = arith.constant 0 : index
    %c0_74 = arith.constant 0 : index
    %286 = vector.load %arg4[%c0_73, %c0_74] : memref<256x512xbf16, #tpu.memory_space<vmem>>, vector<256x512xbf16>
    %cst_75 = arith.constant dense<0.000000e+00> : vector<2x512xf32>
    %287 = tpu.matmul %285, %286, %cst_75 {dimension_numbers = #tpu.dot_dimension_numbers<[1], [0], [0], [1], [0, 0, 1, 1], [], []>} : vector<2x256xbf16>, vector<256x512xbf16>, vector<2x512xf32> -> vector<2x512xf32>
    %288 = arith.addf %287, %9 : vector<2x512xf32>
    %289 = vector.extract_strided_slice %288 {offsets = [0, 0], sizes = [2, 128], strides = [1, 1]} : vector<2x512xf32> to vector<2x128xf32>
    %290 = arith.negf %289 : vector<2x128xf32>
    %291 = math.exp %290 : vector<2x128xf32>
    %cst_76 = arith.constant 1.000000e+00 : f32
    %292 = vector.broadcast %cst_76 : f32 to vector<2x128xf32>
    %293 = arith.addf %292, %291 : vector<2x128xf32>
    %294 = arith.divf %292, %293 : vector<2x128xf32>
    %295 = vector.extract_strided_slice %288 {offsets = [0, 128], sizes = [2, 128], strides = [1, 1]} : vector<2x512xf32> to vector<2x128xf32>
    %296 = arith.negf %295 : vector<2x128xf32>
    %297 = math.exp %296 : vector<2x128xf32>
    %cst_77 = arith.constant 1.000000e+00 : f32
    %298 = vector.broadcast %cst_77 : f32 to vector<2x128xf32>
    %299 = arith.addf %298, %297 : vector<2x128xf32>
    %300 = arith.divf %298, %299 : vector<2x128xf32>
    %301 = vector.extract_strided_slice %288 {offsets = [0, 256], sizes = [2, 128], strides = [1, 1]} : vector<2x512xf32> to vector<2x128xf32>
    %302 = math.tanh %301 : vector<2x128xf32>
    %303 = vector.extract_strided_slice %288 {offsets = [0, 384], sizes = [2, 128], strides = [1, 1]} : vector<2x512xf32> to vector<2x128xf32>
    %304 = arith.negf %303 : vector<2x128xf32>
    %305 = math.exp %304 : vector<2x128xf32>
    %cst_78 = arith.constant 1.000000e+00 : f32
    %306 = vector.broadcast %cst_78 : f32 to vector<2x128xf32>
    %307 = arith.addf %306, %305 : vector<2x128xf32>
    %308 = arith.divf %306, %307 : vector<2x128xf32>
    %309 = arith.mulf %300, %251 : vector<2x128xf32>
    %310 = arith.mulf %294, %302 : vector<2x128xf32>
    %311 = arith.addf %309, %310 : vector<2x128xf32>
    %312 = math.tanh %311 : vector<2x128xf32>
    %313 = arith.mulf %308, %312 : vector<2x128xf32>
    %c10 = arith.constant 10 : index
    %c0_79 = arith.constant 0 : index
    %314 = vector.load %arg9[%c10, %c0_79] : memref<16x512xf32, #tpu.memory_space<vmem>>, vector<2x512xf32>
    %315 = arith.truncf %283 : vector<2x128xf32> to vector<2x128xbf16>
    %c0_80 = arith.constant 0 : index
    %c0_81 = arith.constant 0 : index
    %316 = vector.load %arg2[%c0_80, %c0_81] : memref<128x512xbf16, #tpu.memory_space<vmem>>, vector<128x512xbf16>
    %cst_82 = arith.constant dense<0.000000e+00> : vector<2x512xf32>
    %317 = tpu.matmul %315, %316, %cst_82 {dimension_numbers = #tpu.dot_dimension_numbers<[1], [0], [0], [1], [0, 0, 1, 1], [], []>} : vector<2x128xbf16>, vector<128x512xbf16>, vector<2x512xf32> -> vector<2x512xf32>
    %318 = arith.addf %314, %317 : vector<2x512xf32>
    %319 = vector.extract_strided_slice %318 {offsets = [0, 0], sizes = [2, 128], strides = [1, 1]} : vector<2x512xf32> to vector<2x128xf32>
    %320 = arith.negf %319 : vector<2x128xf32>
    %321 = math.exp %320 : vector<2x128xf32>
    %cst_83 = arith.constant 1.000000e+00 : f32
    %322 = vector.broadcast %cst_83 : f32 to vector<2x128xf32>
    %323 = arith.addf %322, %321 : vector<2x128xf32>
    %324 = arith.divf %322, %323 : vector<2x128xf32>
    %325 = vector.extract_strided_slice %318 {offsets = [0, 128], sizes = [2, 128], strides = [1, 1]} : vector<2x512xf32> to vector<2x128xf32>
    %326 = arith.negf %325 : vector<2x128xf32>
    %327 = math.exp %326 : vector<2x128xf32>
    %cst_84 = arith.constant 1.000000e+00 : f32
    %328 = vector.broadcast %cst_84 : f32 to vector<2x128xf32>
    %329 = arith.addf %328, %327 : vector<2x128xf32>
    %330 = arith.divf %328, %329 : vector<2x128xf32>
    %331 = vector.extract_strided_slice %318 {offsets = [0, 256], sizes = [2, 128], strides = [1, 1]} : vector<2x512xf32> to vector<2x128xf32>
    %332 = math.tanh %331 : vector<2x128xf32>
    %333 = vector.extract_strided_slice %318 {offsets = [0, 384], sizes = [2, 128], strides = [1, 1]} : vector<2x512xf32> to vector<2x128xf32>
    %334 = arith.negf %333 : vector<2x128xf32>
    %335 = math.exp %334 : vector<2x128xf32>
    %cst_85 = arith.constant 1.000000e+00 : f32
    %336 = vector.broadcast %cst_85 : f32 to vector<2x128xf32>
    %337 = arith.addf %336, %335 : vector<2x128xf32>
    %338 = arith.divf %336, %337 : vector<2x128xf32>
    %339 = arith.mulf %330, %281 : vector<2x128xf32>
    %340 = arith.mulf %324, %332 : vector<2x128xf32>
    %341 = arith.addf %339, %340 : vector<2x128xf32>
    %342 = math.tanh %341 : vector<2x128xf32>
    %343 = arith.mulf %338, %342 : vector<2x128xf32>
    %344 = tpu.concatenate %343, %313 in 1 : vector<2x128xf32>, vector<2x128xf32> -> vector<2x256xf32>
    %345 = arith.truncf %344 : vector<2x256xf32> to vector<2x256xbf16>
    %c0_86 = arith.constant 0 : index
    %c0_87 = arith.constant 0 : index
    %346 = vector.load %arg4[%c0_86, %c0_87] : memref<256x512xbf16, #tpu.memory_space<vmem>>, vector<256x512xbf16>
    %cst_88 = arith.constant dense<0.000000e+00> : vector<2x512xf32>
    %347 = tpu.matmul %345, %346, %cst_88 {dimension_numbers = #tpu.dot_dimension_numbers<[1], [0], [0], [1], [0, 0, 1, 1], [], []>} : vector<2x256xbf16>, vector<256x512xbf16>, vector<2x512xf32> -> vector<2x512xf32>
    %348 = arith.addf %347, %9 : vector<2x512xf32>
    %349 = vector.extract_strided_slice %348 {offsets = [0, 0], sizes = [2, 128], strides = [1, 1]} : vector<2x512xf32> to vector<2x128xf32>
    %350 = arith.negf %349 : vector<2x128xf32>
    %351 = math.exp %350 : vector<2x128xf32>
    %cst_89 = arith.constant 1.000000e+00 : f32
    %352 = vector.broadcast %cst_89 : f32 to vector<2x128xf32>
    %353 = arith.addf %352, %351 : vector<2x128xf32>
    %354 = arith.divf %352, %353 : vector<2x128xf32>
    %355 = vector.extract_strided_slice %348 {offsets = [0, 128], sizes = [2, 128], strides = [1, 1]} : vector<2x512xf32> to vector<2x128xf32>
    %356 = arith.negf %355 : vector<2x128xf32>
    %357 = math.exp %356 : vector<2x128xf32>
    %cst_90 = arith.constant 1.000000e+00 : f32
    %358 = vector.broadcast %cst_90 : f32 to vector<2x128xf32>
    %359 = arith.addf %358, %357 : vector<2x128xf32>
    %360 = arith.divf %358, %359 : vector<2x128xf32>
    %361 = vector.extract_strided_slice %348 {offsets = [0, 256], sizes = [2, 128], strides = [1, 1]} : vector<2x512xf32> to vector<2x128xf32>
    %362 = math.tanh %361 : vector<2x128xf32>
    %363 = vector.extract_strided_slice %348 {offsets = [0, 384], sizes = [2, 128], strides = [1, 1]} : vector<2x512xf32> to vector<2x128xf32>
    %364 = arith.negf %363 : vector<2x128xf32>
    %365 = math.exp %364 : vector<2x128xf32>
    %cst_91 = arith.constant 1.000000e+00 : f32
    %366 = vector.broadcast %cst_91 : f32 to vector<2x128xf32>
    %367 = arith.addf %366, %365 : vector<2x128xf32>
    %368 = arith.divf %366, %367 : vector<2x128xf32>
    %369 = arith.mulf %360, %311 : vector<2x128xf32>
    %370 = arith.mulf %354, %362 : vector<2x128xf32>
    %371 = arith.addf %369, %370 : vector<2x128xf32>
    %372 = math.tanh %371 : vector<2x128xf32>
    %373 = arith.mulf %368, %372 : vector<2x128xf32>
    %c12 = arith.constant 12 : index
    %c0_92 = arith.constant 0 : index
    %374 = vector.load %arg9[%c12, %c0_92] : memref<16x512xf32, #tpu.memory_space<vmem>>, vector<2x512xf32>
    %375 = arith.truncf %343 : vector<2x128xf32> to vector<2x128xbf16>
    %c0_93 = arith.constant 0 : index
    %c0_94 = arith.constant 0 : index
    %376 = vector.load %arg2[%c0_93, %c0_94] : memref<128x512xbf16, #tpu.memory_space<vmem>>, vector<128x512xbf16>
    %cst_95 = arith.constant dense<0.000000e+00> : vector<2x512xf32>
    %377 = tpu.matmul %375, %376, %cst_95 {dimension_numbers = #tpu.dot_dimension_numbers<[1], [0], [0], [1], [0, 0, 1, 1], [], []>} : vector<2x128xbf16>, vector<128x512xbf16>, vector<2x512xf32> -> vector<2x512xf32>
    %378 = arith.addf %374, %377 : vector<2x512xf32>
    %379 = vector.extract_strided_slice %378 {offsets = [0, 0], sizes = [2, 128], strides = [1, 1]} : vector<2x512xf32> to vector<2x128xf32>
    %380 = arith.negf %379 : vector<2x128xf32>
    %381 = math.exp %380 : vector<2x128xf32>
    %cst_96 = arith.constant 1.000000e+00 : f32
    %382 = vector.broadcast %cst_96 : f32 to vector<2x128xf32>
    %383 = arith.addf %382, %381 : vector<2x128xf32>
    %384 = arith.divf %382, %383 : vector<2x128xf32>
    %385 = vector.extract_strided_slice %378 {offsets = [0, 128], sizes = [2, 128], strides = [1, 1]} : vector<2x512xf32> to vector<2x128xf32>
    %386 = arith.negf %385 : vector<2x128xf32>
    %387 = math.exp %386 : vector<2x128xf32>
    %cst_97 = arith.constant 1.000000e+00 : f32
    %388 = vector.broadcast %cst_97 : f32 to vector<2x128xf32>
    %389 = arith.addf %388, %387 : vector<2x128xf32>
    %390 = arith.divf %388, %389 : vector<2x128xf32>
    %391 = vector.extract_strided_slice %378 {offsets = [0, 256], sizes = [2, 128], strides = [1, 1]} : vector<2x512xf32> to vector<2x128xf32>
    %392 = math.tanh %391 : vector<2x128xf32>
    %393 = vector.extract_strided_slice %378 {offsets = [0, 384], sizes = [2, 128], strides = [1, 1]} : vector<2x512xf32> to vector<2x128xf32>
    %394 = arith.negf %393 : vector<2x128xf32>
    %395 = math.exp %394 : vector<2x128xf32>
    %cst_98 = arith.constant 1.000000e+00 : f32
    %396 = vector.broadcast %cst_98 : f32 to vector<2x128xf32>
    %397 = arith.addf %396, %395 : vector<2x128xf32>
    %398 = arith.divf %396, %397 : vector<2x128xf32>
    %399 = arith.mulf %390, %341 : vector<2x128xf32>
    %400 = arith.mulf %384, %392 : vector<2x128xf32>
    %401 = arith.addf %399, %400 : vector<2x128xf32>
    %402 = math.tanh %401 : vector<2x128xf32>
    %403 = arith.mulf %398, %402 : vector<2x128xf32>
    %404 = tpu.concatenate %403, %373 in 1 : vector<2x128xf32>, vector<2x128xf32> -> vector<2x256xf32>
    %405 = arith.truncf %404 : vector<2x256xf32> to vector<2x256xbf16>
    %c0_99 = arith.constant 0 : index
    %c0_100 = arith.constant 0 : index
    %406 = vector.load %arg4[%c0_99, %c0_100] : memref<256x512xbf16, #tpu.memory_space<vmem>>, vector<256x512xbf16>
    %cst_101 = arith.constant dense<0.000000e+00> : vector<2x512xf32>
    %407 = tpu.matmul %405, %406, %cst_101 {dimension_numbers = #tpu.dot_dimension_numbers<[1], [0], [0], [1], [0, 0, 1, 1], [], []>} : vector<2x256xbf16>, vector<256x512xbf16>, vector<2x512xf32> -> vector<2x512xf32>
    %408 = arith.addf %407, %9 : vector<2x512xf32>
    %409 = vector.extract_strided_slice %408 {offsets = [0, 0], sizes = [2, 128], strides = [1, 1]} : vector<2x512xf32> to vector<2x128xf32>
    %410 = arith.negf %409 : vector<2x128xf32>
    %411 = math.exp %410 : vector<2x128xf32>
    %cst_102 = arith.constant 1.000000e+00 : f32
    %412 = vector.broadcast %cst_102 : f32 to vector<2x128xf32>
    %413 = arith.addf %412, %411 : vector<2x128xf32>
    %414 = arith.divf %412, %413 : vector<2x128xf32>
    %415 = vector.extract_strided_slice %408 {offsets = [0, 128], sizes = [2, 128], strides = [1, 1]} : vector<2x512xf32> to vector<2x128xf32>
    %416 = arith.negf %415 : vector<2x128xf32>
    %417 = math.exp %416 : vector<2x128xf32>
    %cst_103 = arith.constant 1.000000e+00 : f32
    %418 = vector.broadcast %cst_103 : f32 to vector<2x128xf32>
    %419 = arith.addf %418, %417 : vector<2x128xf32>
    %420 = arith.divf %418, %419 : vector<2x128xf32>
    %421 = vector.extract_strided_slice %408 {offsets = [0, 256], sizes = [2, 128], strides = [1, 1]} : vector<2x512xf32> to vector<2x128xf32>
    %422 = math.tanh %421 : vector<2x128xf32>
    %423 = vector.extract_strided_slice %408 {offsets = [0, 384], sizes = [2, 128], strides = [1, 1]} : vector<2x512xf32> to vector<2x128xf32>
    %424 = arith.negf %423 : vector<2x128xf32>
    %425 = math.exp %424 : vector<2x128xf32>
    %cst_104 = arith.constant 1.000000e+00 : f32
    %426 = vector.broadcast %cst_104 : f32 to vector<2x128xf32>
    %427 = arith.addf %426, %425 : vector<2x128xf32>
    %428 = arith.divf %426, %427 : vector<2x128xf32>
    %429 = arith.mulf %420, %371 : vector<2x128xf32>
    %430 = arith.mulf %414, %422 : vector<2x128xf32>
    %431 = arith.addf %429, %430 : vector<2x128xf32>
    %432 = math.tanh %431 : vector<2x128xf32>
    %433 = arith.mulf %428, %432 : vector<2x128xf32>
    %c14 = arith.constant 14 : index
    %c0_105 = arith.constant 0 : index
    %434 = vector.load %arg9[%c14, %c0_105] : memref<16x512xf32, #tpu.memory_space<vmem>>, vector<2x512xf32>
    %435 = arith.truncf %403 : vector<2x128xf32> to vector<2x128xbf16>
    %c0_106 = arith.constant 0 : index
    %c0_107 = arith.constant 0 : index
    %436 = vector.load %arg2[%c0_106, %c0_107] : memref<128x512xbf16, #tpu.memory_space<vmem>>, vector<128x512xbf16>
    %cst_108 = arith.constant dense<0.000000e+00> : vector<2x512xf32>
    %437 = tpu.matmul %435, %436, %cst_108 {dimension_numbers = #tpu.dot_dimension_numbers<[1], [0], [0], [1], [0, 0, 1, 1], [], []>} : vector<2x128xbf16>, vector<128x512xbf16>, vector<2x512xf32> -> vector<2x512xf32>
    %438 = arith.addf %434, %437 : vector<2x512xf32>
    %439 = vector.extract_strided_slice %438 {offsets = [0, 0], sizes = [2, 128], strides = [1, 1]} : vector<2x512xf32> to vector<2x128xf32>
    %440 = arith.negf %439 : vector<2x128xf32>
    %441 = math.exp %440 : vector<2x128xf32>
    %cst_109 = arith.constant 1.000000e+00 : f32
    %442 = vector.broadcast %cst_109 : f32 to vector<2x128xf32>
    %443 = arith.addf %442, %441 : vector<2x128xf32>
    %444 = arith.divf %442, %443 : vector<2x128xf32>
    %445 = vector.extract_strided_slice %438 {offsets = [0, 128], sizes = [2, 128], strides = [1, 1]} : vector<2x512xf32> to vector<2x128xf32>
    %446 = arith.negf %445 : vector<2x128xf32>
    %447 = math.exp %446 : vector<2x128xf32>
    %cst_110 = arith.constant 1.000000e+00 : f32
    %448 = vector.broadcast %cst_110 : f32 to vector<2x128xf32>
    %449 = arith.addf %448, %447 : vector<2x128xf32>
    %450 = arith.divf %448, %449 : vector<2x128xf32>
    %451 = vector.extract_strided_slice %438 {offsets = [0, 256], sizes = [2, 128], strides = [1, 1]} : vector<2x512xf32> to vector<2x128xf32>
    %452 = math.tanh %451 : vector<2x128xf32>
    %453 = vector.extract_strided_slice %438 {offsets = [0, 384], sizes = [2, 128], strides = [1, 1]} : vector<2x512xf32> to vector<2x128xf32>
    %454 = arith.negf %453 : vector<2x128xf32>
    %455 = math.exp %454 : vector<2x128xf32>
    %cst_111 = arith.constant 1.000000e+00 : f32
    %456 = vector.broadcast %cst_111 : f32 to vector<2x128xf32>
    %457 = arith.addf %456, %455 : vector<2x128xf32>
    %458 = arith.divf %456, %457 : vector<2x128xf32>
    %459 = arith.mulf %450, %401 : vector<2x128xf32>
    %460 = arith.mulf %444, %452 : vector<2x128xf32>
    %461 = arith.addf %459, %460 : vector<2x128xf32>
    %462 = math.tanh %461 : vector<2x128xf32>
    %463 = arith.mulf %458, %462 : vector<2x128xf32>
    %464 = tpu.concatenate %463, %433 in 1 : vector<2x128xf32>, vector<2x128xf32> -> vector<2x256xf32>
    %465 = arith.truncf %464 : vector<2x256xf32> to vector<2x256xbf16>
    %c0_112 = arith.constant 0 : index
    %c0_113 = arith.constant 0 : index
    %466 = vector.load %arg4[%c0_112, %c0_113] : memref<256x512xbf16, #tpu.memory_space<vmem>>, vector<256x512xbf16>
    %cst_114 = arith.constant dense<0.000000e+00> : vector<2x512xf32>
    %467 = tpu.matmul %465, %466, %cst_114 {dimension_numbers = #tpu.dot_dimension_numbers<[1], [0], [0], [1], [0, 0, 1, 1], [], []>} : vector<2x256xbf16>, vector<256x512xbf16>, vector<2x512xf32> -> vector<2x512xf32>
    %468 = arith.addf %467, %9 : vector<2x512xf32>
    %469 = vector.extract_strided_slice %468 {offsets = [0, 0], sizes = [2, 128], strides = [1, 1]} : vector<2x512xf32> to vector<2x128xf32>
    %470 = arith.negf %469 : vector<2x128xf32>
    %471 = math.exp %470 : vector<2x128xf32>
    %cst_115 = arith.constant 1.000000e+00 : f32
    %472 = vector.broadcast %cst_115 : f32 to vector<2x128xf32>
    %473 = arith.addf %472, %471 : vector<2x128xf32>
    %474 = arith.divf %472, %473 : vector<2x128xf32>
    %475 = vector.extract_strided_slice %468 {offsets = [0, 128], sizes = [2, 128], strides = [1, 1]} : vector<2x512xf32> to vector<2x128xf32>
    %476 = arith.negf %475 : vector<2x128xf32>
    %477 = math.exp %476 : vector<2x128xf32>
    %cst_116 = arith.constant 1.000000e+00 : f32
    %478 = vector.broadcast %cst_116 : f32 to vector<2x128xf32>
    %479 = arith.addf %478, %477 : vector<2x128xf32>
    %480 = arith.divf %478, %479 : vector<2x128xf32>
    %481 = vector.extract_strided_slice %468 {offsets = [0, 256], sizes = [2, 128], strides = [1, 1]} : vector<2x512xf32> to vector<2x128xf32>
    %482 = math.tanh %481 : vector<2x128xf32>
    %483 = vector.extract_strided_slice %468 {offsets = [0, 384], sizes = [2, 128], strides = [1, 1]} : vector<2x512xf32> to vector<2x128xf32>
    %484 = arith.negf %483 : vector<2x128xf32>
    %485 = math.exp %484 : vector<2x128xf32>
    %cst_117 = arith.constant 1.000000e+00 : f32
    %486 = vector.broadcast %cst_117 : f32 to vector<2x128xf32>
    %487 = arith.addf %486, %485 : vector<2x128xf32>
    %488 = arith.divf %486, %487 : vector<2x128xf32>
    %489 = arith.mulf %480, %431 : vector<2x128xf32>
    %490 = arith.mulf %474, %482 : vector<2x128xf32>
    %491 = arith.addf %489, %490 : vector<2x128xf32>
    %492 = math.tanh %491 : vector<2x128xf32>
    %493 = arith.mulf %488, %492 : vector<2x128xf32>
    %494 = tpu.concatenate %463, %493 in 1 : vector<2x128xf32>, vector<2x128xf32> -> vector<2x256xf32>
    %495 = arith.truncf %494 : vector<2x256xf32> to vector<2x256xbf16>
    %c0_118 = arith.constant 0 : index
    %c0_119 = arith.constant 0 : index
    %496 = vector.load %arg6[%c0_118, %c0_119] : memref<256x512xbf16, #tpu.memory_space<vmem>>, vector<256x512xbf16>
    %cst_120 = arith.constant dense<0.000000e+00> : vector<2x512xf32>
    %497 = tpu.matmul %495, %496, %cst_120 {dimension_numbers = #tpu.dot_dimension_numbers<[1], [0], [0], [1], [0, 0, 1, 1], [], []>} : vector<2x256xbf16>, vector<256x512xbf16>, vector<2x512xf32> -> vector<2x512xf32>
    %c0_121 = arith.constant 0 : index
    %c0_122 = arith.constant 0 : index
    %498 = vector.load %arg7[%c0_121, %c0_122] : memref<1x512xf32, #tpu.memory_space<vmem>>, vector<1x512xf32>
    %499 = vector.broadcast %498 : vector<1x512xf32> to vector<2x512xf32>
    %500 = arith.addf %497, %499 : vector<2x512xf32>
    %cst_123 = arith.constant dense<0xFF800000> : vector<2xf32>
    %501 = vector.multi_reduction <maximumf>, %500, %cst_123 [1] : vector<2x512xf32> to vector<2xf32>
    %502 = vector.shape_cast %501 : vector<2xf32> to vector<2x1xf32>
    %503 = vector.broadcast %502 : vector<2x1xf32> to vector<2x512xf32>
    %504 = arith.subf %500, %503 : vector<2x512xf32>
    %505 = math.exp %504 : vector<2x512xf32>
    %cst_124 = arith.constant dense<0.000000e+00> : vector<2xf32>
    %506 = vector.multi_reduction <add>, %505, %cst_124 [1] : vector<2x512xf32> to vector<2xf32>
    %507 = vector.shape_cast %506 : vector<2xf32> to vector<2x1xf32>
    %508 = vector.broadcast %507 : vector<2x1xf32> to vector<2x512xf32>
    %509 = arith.divf %505, %508 : vector<2x512xf32>
    %510 = vector.shape_cast %509 : vector<2x512xf32> to vector<1x2x512xf32>
    %cst_125 = arith.constant dense<0.000000e+00> : vector<1xf32>
    %511 = vector.multi_reduction <add>, %510, %cst_125 [1, 2] : vector<1x2x512xf32> to vector<1xf32>
    %512 = vector.shape_cast %511 : vector<1xf32> to vector<1x1x1xf32>
    %513 = vector.extract %512[0, 0, 0] : f32 from vector<1x1x1xf32>
    %cst_126 = arith.constant 1.000000e+00 : f32
    %514 = arith.cmpf ogt, %513, %cst_126 : f32
    %cst_127 = arith.constant 1.000000e+00 : f32
    %515 = arith.select %514, %513, %cst_127 : f32
    %516 = vector.broadcast %515 : f32 to vector<2x512xf32>
    %517 = arith.divf %509, %516 : vector<2x512xf32>
    %c0_128 = arith.constant 0 : index
    %c0_129 = arith.constant 0 : index
    %518 = vector.load %arg8[%c0_128, %c0_129] : memref<2x512xf32, #tpu.memory_space<vmem>>, vector<2x512xf32>
    tpu.vector_store %arg8[%c0_128, %c0_129], %517 {strides = array<i32>} : memref<2x512xf32, #tpu.memory_space<vmem>>, vector<2x512xf32>,
    return
  }
}

</mosaic_0001>

<llo_original>
// kernel: deep_portfolio_forward.1
$region0: #{deep_portfolio_forward.1}
  #allocation0 [shape = 'u32[]', space=smem, size = 0x4, offset = 0x4, fixed_abs, tag = 'smem constant byte address 0x4 - core index']
  #allocation1 [shape = 'u32[144,128]{1,0:T(1,128)}', space=vmem, size = 0x12000, scoped, tag = 'internal scratch']
  #allocation2 [shape = 'f32[16,512]{1,0:T(8,128)}', space=vmem, size = 0x8000, scoped, tag = 'scratch operand']
  %s0 = inlined_call_operand.vmem [shape: bf16[16,1024], index: 0, kind: input, shape index: {}]
  %s1 = inlined_call_operand.hbm [shape: bf16[1024,512], index: 1, kind: input, shape index: {}]
  %s2 = inlined_call_operand.hbm [shape: bf16[128,512], index: 2, kind: input, shape index: {}]
  %s3 = inlined_call_operand.vmem [shape: f32[1,512], index: 3, kind: input, shape index: {}]
  %s4 = inlined_call_operand.vmem [shape: bf16[256,512], index: 4, kind: input, shape index: {}]
  %s5 = inlined_call_operand.vmem [shape: f32[1,512], index: 5, kind: input, shape index: {}]
  %s6 = inlined_call_operand.hbm [shape: bf16[256,512], index: 6, kind: input, shape index: {}]
  %s7 = inlined_call_operand.vmem [shape: f32[1,512], index: 7, kind: input, shape index: {}]
  %s8 = inlined_call_operand.hbm [shape: f32[2,512], index: 8, kind: output, shape index: {}]
  %s9 = sld [smem:[#allocation0]]
  $region54: #{deep_portfolio_forward.1} parent=0
    _
  %s11 = ssub.s32 1, %s9
  %s12 = scalar_select 0, %s11, %s9
  $region1: #{deep_portfolio_forward.1} parent=0
    #allocation3 [shape = 'u8[1048576]{0}', space=vmem, size = 0x100000, scoped, tag = 'input window, operand 1, single buffered']
    #allocation4 [shape = 's32[1]{0}', space=sflag, size = 0x4, scoped, tag = 'scoped memory for deep_portfolio_forward.1']
    #allocation5 [shape = 's32[1]{0}', space=sflag, size = 0x4, scoped, tag = 'scoped memory for deep_portfolio_forward.1']
    #allocation6 [shape = 'u8[131072]{0}', space=vmem, size = 0x20000, scoped, tag = 'input window, operand 2, single buffered']
    #allocation7 [shape = 's32[1]{0}', space=sflag, size = 0x4, scoped, tag = 'scoped memory for deep_portfolio_forward.1']
    #allocation8 [shape = 'u8[262144]{0}', space=vmem, size = 0x40000, scoped, tag = 'input window, operand 6, single buffered']
    #allocation9 [shape = 'u8[4096]{0}', space=vmem, size = 0x1000, scoped, tag = 'output window, operand 0, single buffered']
    %13 = vsyncpa [#allocation4], 0
    %14 = vsyncpa [#allocation7], 0
    %15 = vsyncpa [#allocation5], 0
    // Predicated region
    $region2: #{deep_portfolio_forward.1} parent=1 // pred_check
      _
    $region3: #{deep_portfolio_forward.1} parent=1 // pred_check_branch
      %17 = sbr.rel (0) target = $region5
    $region4: #{deep_portfolio_forward.1} parent=1 // pred_region
      _
    $region5: #{deep_portfolio_forward.1} parent=1 // pred_fallthru
      _
    // Predicated region
    $region6: #{deep_portfolio_forward.1} parent=1 // pred_check
      _
    $region7: #{deep_portfolio_forward.1} parent=1 // pred_check_branch
      %19 = sbr.rel (0) target = $region9
    $region8: #{deep_portfolio_forward.1} parent=1 // pred_region
      %s21 = ssub.s32 32768, 32768
      %22 = vsyncadd [#allocation4], %s21
      %s23 = sshll.u32 [#allocation3], 4
      %s24 = int_to_ptr.vmem [resolvable:$true] %s23
      %29 = dma.hbm_to_vmem [thread:$0]  %s1, 32768, %s24, [#allocation4], 256, 256, 16
    $region9: #{deep_portfolio_forward.1} parent=1 // pred_fallthru
      _
    // Predicated region
    $region10: #{deep_portfolio_forward.1} parent=1 // pred_check
      _
    $region11: #{deep_portfolio_forward.1} parent=1 // pred_check_branch
      %31 = sbr.rel (0) target = $region13
    $region12: #{deep_portfolio_forward.1} parent=1 // pred_region
      %s33 = ssub.s32 4096, 4096
      %34 = vsyncadd [#allocation7], %s33
      %s35 = sshll.u32 [#allocation6], 4
      %s36 = int_to_ptr.vmem [resolvable:$true] %s35
      %41 = dma.hbm_to_vmem [thread:$0]  %s2, 4096, %s36, [#allocation7], 256, 256, 16
    $region13: #{deep_portfolio_forward.1} parent=1 // pred_fallthru
      _
    // Predicated region
    $region14: #{deep_portfolio_forward.1} parent=1 // pred_check
      _
    $region15: #{deep_portfolio_forward.1} parent=1 // pred_check_branch
      %43 = sbr.rel (0) target = $region17
    $region16: #{deep_portfolio_forward.1} parent=1 // pred_region
      _
    $region17: #{deep_portfolio_forward.1} parent=1 // pred_fallthru
      _
    // Predicated region
    $region18: #{deep_portfolio_forward.1} parent=1 // pred_check
      _
    $region19: #{deep_portfolio_forward.1} parent=1 // pred_check_branch
      %45 = sbr.rel (0) target = $region21
    $region20: #{deep_portfolio_forward.1} parent=1 // pred_region
      _
    $region21: #{deep_portfolio_forward.1} parent=1 // pred_fallthru
      _
    // Predicated region
    $region22: #{deep_portfolio_forward.1} parent=1 // pred_check
      _
    $region23: #{deep_portfolio_forward.1} parent=1 // pred_check_branch
      %47 = sbr.rel (0) target = $region25
    $region24: #{deep_portfolio_forward.1} parent=1 // pred_region
      _
    $region25: #{deep_portfolio_forward.1} parent=1 // pred_fallthru
      _
    // Predicated region
    $region26: #{deep_portfolio_forward.1} parent=1 // pred_check
      _
    $region27: #{deep_portfolio_forward.1} parent=1 // pred_check_branch
      %49 = sbr.rel (0) target = $region29
    $region28: #{deep_portfolio_forward.1} parent=1 // pred_region
      %s51 = ssub.s32 8192, 8192
      %52 = vsyncadd [#allocation7], %s51
      %s53 = sshll.u32 [#allocation8], 4
      %s54 = int_to_ptr.vmem [resolvable:$true] %s53
      %59 = dma.hbm_to_vmem [thread:$0]  %s6, 8192, %s54, [#allocation7], 256, 256, 16
    $region29: #{deep_portfolio_forward.1} parent=1 // pred_fallthru
      _
    // Predicated region
    $region30: #{deep_portfolio_forward.1} parent=1 // pred_check
      _
    $region31: #{deep_portfolio_forward.1} parent=1 // pred_check_branch
      %61 = sbr.rel (0) target = $region33
    $region32: #{deep_portfolio_forward.1} parent=1 // pred_region
      _
    $region33: #{deep_portfolio_forward.1} parent=1 // pred_fallthru
      _
    // Predicated region
    $region34: #{deep_portfolio_forward.1} parent=1 // pred_check
      _
    $region35: #{deep_portfolio_forward.1} parent=1 // pred_check_branch
      %63 = sbr.rel (0) target = $region37
    $region36: #{deep_portfolio_forward.1} parent=1 // pred_region
      %64 = dma.done [#allocation4], 32768
    $region37: #{deep_portfolio_forward.1} parent=1 // pred_fallthru
      _
    // Predicated region
    $region38: #{deep_portfolio_forward.1} parent=1 // pred_check
      _
    $region39: #{deep_portfolio_forward.1} parent=1 // pred_check_branch
      %66 = sbr.rel (0) target = $region41
    $region40: #{deep_portfolio_forward.1} parent=1 // pred_region
      %67 = dma.done [#allocation7], 4096
    $region41: #{deep_portfolio_forward.1} parent=1 // pred_fallthru
      _
    // Predicated region
    $region42: #{deep_portfolio_forward.1} parent=1 // pred_check
      _
    $region43: #{deep_portfolio_forward.1} parent=1 // pred_check_branch
      %69 = sbr.rel (0) target = $region45
    $region44: #{deep_portfolio_forward.1} parent=1 // pred_region
      %70 = dma.done [#allocation7], 8192
    $region45: #{deep_portfolio_forward.1} parent=1 // pred_fallthru
      _
    %v72 = vld [vmem:[%s0] sm:$0xff]
    %v73 = vld [vmem:[%s0 + $0x8] sm:$0xff]
    %v74 = vld [vmem:[%s0 + $0x10] sm:$0xff]
    %v75 = vld [vmem:[%s0 + $0x18] sm:$0xff]
    %v76 = vld [vmem:[%s0 + $0x20] sm:$0xff]
    %v77 = vld [vmem:[%s0 + $0x28] sm:$0xff]
    %v78 = vld [vmem:[%s0 + $0x30] sm:$0xff]
    %v79 = vld [vmem:[%s0 + $0x38] sm:$0xff]
    %v80 = vld [vmem:[#allocation3] sm:$0xff]
    %v81 = vld [vmem:[#allocation3 + $0x8] sm:$0xff]
    %v82 = vld [vmem:[#allocation3 + $0x10] sm:$0xff]
    %v83 = vld [vmem:[#allocation3 + $0x18] sm:$0xff]
    %v84 = vld [vmem:[#allocation3 + $0x20] sm:$0xff]
    %v85 = vld [vmem:[#allocation3 + $0x28] sm:$0xff]
    %v86 = vld [vmem:[#allocation3 + $0x30] sm:$0xff]
    %v87 = vld [vmem:[#allocation3 + $0x38] sm:$0xff]
    %v88 = vld [vmem:[#allocation3 + $0x40] sm:$0xff]
    %v89 = vld [vmem:[#allocation3 + $0x48] sm:$0xff]
    %v90 = vld [vmem:[#allocation3 + $0x50] sm:$0xff]
    %v91 = vld [vmem:[#allocation3 + $0x58] sm:$0xff]
    %v92 = vld [vmem:[#allocation3 + $0x60] sm:$0xff]
    %v93 = vld [vmem:[#allocation3 + $0x68] sm:$0xff]
    %v94 = vld [vmem:[#allocation3 + $0x70] sm:$0xff]
    %v95 = vld [vmem:[#allocation3 + $0x78] sm:$0xff]
    %v96 = vld [vmem:[#allocation3 + $0x80] sm:$0xff]
    %v97 = vld [vmem:[#allocation3 + $0x88] sm:$0xff]
    %v98 = vld [vmem:[#allocation3 + $0x90] sm:$0xff]
    %v99 = vld [vmem:[#allocation3 + $0x98] sm:$0xff]
    %v100 = vld [vmem:[#allocation3 + $0xa0] sm:$0xff]
    %v101 = vld [vmem:[#allocation3 + $0xa8] sm:$0xff]
    %v102 = vld [vmem:[#allocation3 + $0xb0] sm:$0xff]
    %v103 = vld [vmem:[#allocation3 + $0xb8] sm:$0xff]
    %v104 = vld [vmem:[#allocation3 + $0xc0] sm:$0xff]
    %v105 = vld [vmem:[#allocation3 + $0xc8] sm:$0xff]
    %v106 = vld [vmem:[#allocation3 + $0xd0] sm:$0xff]
    %v107 = vld [vmem:[#allocation3 + $0xd8] sm:$0xff]
    %v108 = vld [vmem:[#allocation3 + $0xe0] sm:$0xff]
    %v109 = vld [vmem:[#allocation3 + $0xe8] sm:$0xff]
    %v110 = vld [vmem:[#allocation3 + $0xf0] sm:$0xff]
    %v111 = vld [vmem:[#allocation3 + $0xf8] sm:$0xff]
    %v112 = vld [vmem:[#allocation3 + $0x100] sm:$0xff]
    %v113 = vld [vmem:[#allocation3 + $0x108] sm:$0xff]
    %v114 = vld [vmem:[#allocation3 + $0x110] sm:$0xff]
    %v115 = vld [vmem:[#allocation3 + $0x118] sm:$0xff]
    %v116 = vld [vmem:[#allocation3 + $0x120] sm:$0xff]
    %v117 = vld [vmem:[#allocation3 + $0x128] sm:$0xff]
    %v118 = vld [vmem:[#allocation3 + $0x130] sm:$0xff]
    %v119 = vld [vmem:[#allocation3 + $0x138] sm:$0xff]
    %v120 = vld [vmem:[#allocation3 + $0x140] sm:$0xff]
    %v121 = vld [vmem:[#allocation3 + $0x148] sm:$0xff]
    %v122 = vld [vmem:[#allocation3 + $0x150] sm:$0xff]
    %v123 = vld [vmem:[#allocation3 + $0x158] sm:$0xff]
    %v124 = vld [vmem:[#allocation3 + $0x160] sm:$0xff]
    %v125 = vld [vmem:[#allocation3 + $0x168] sm:$0xff]
    %v126 = vld [vmem:[#allocation3 + $0x170] sm:$0xff]
    %v127 = vld [vmem:[#allocation3 + $0x178] sm:$0xff]
    %v128 = vld [vmem:[#allocation3 + $0x180] sm:$0xff]
    %v129 = vld [vmem:[#allocation3 + $0x188] sm:$0xff]
    %v130 = vld [vmem:[#allocation3 + $0x190] sm:$0xff]
    %v131 = vld [vmem:[#allocation3 + $0x198] sm:$0xff]
    %v132 = vld [vmem:[#allocation3 + $0x1a0] sm:$0xff]
    %v133 = vld [vmem:[#allocation3 + $0x1a8] sm:$0xff]
    %v134 = vld [vmem:[#allocation3 + $0x1b0] sm:$0xff]
    %v135 = vld [vmem:[#allocation3 + $0x1b8] sm:$0xff]
    %v136 = vld [vmem:[#allocation3 + $0x1c0] sm:$0xff]
    %v137 = vld [vmem:[#allocation3 + $0x1c8] sm:$0xff]
    %v138 = vld [vmem:[#allocation3 + $0x1d0] sm:$0xff]
    %v139 = vld [vmem:[#allocation3 + $0x1d8] sm:$0xff]
    %v140 = vld [vmem:[#allocation3 + $0x1e0] sm:$0xff]
    %v141 = vld [vmem:[#allocation3 + $0x1e8] sm:$0xff]
    %v142 = vld [vmem:[#allocation3 + $0x1f0] sm:$0xff]
    %v143 = vld [vmem:[#allocation3 + $0x1f8] sm:$0xff]
    %v144 = vld [vmem:[#allocation3 + $0x200] sm:$0xff]
    %v145 = vld [vmem:[#allocation3 + $0x208] sm:$0xff]
    %v146 = vld [vmem:[#allocation3 + $0x210] sm:$0xff]
    %v147 = vld [vmem:[#allocation3 + $0x218] sm:$0xff]
    %v148 = vld [vmem:[#allocation3 + $0x220] sm:$0xff]
    %v149 = vld [vmem:[#allocation3 + $0x228] sm:$0xff]
    %v150 = vld [vmem:[#allocation3 + $0x230] sm:$0xff]
    %v151 = vld [vmem:[#allocation3 + $0x238] sm:$0xff]
    %v152 = vld [vmem:[#allocation3 + $0x240] sm:$0xff]
    %v153 = vld [vmem:[#allocation3 + $0x248] sm:$0xff]
    %v154 = vld [vmem:[#allocation3 + $0x250] sm:$0xff]
    %v155 = vld [vmem:[#allocation3 + $0x258] sm:$0xff]
    %v156 = vld [vmem:[#allocation3 + $0x260] sm:$0xff]
    %v157 = vld [vmem:[#allocation3 + $0x268] sm:$0xff]
    %v158 = vld [vmem:[#allocation3 + $0x270] sm:$0xff]
    %v159 = vld [vmem:[#allocation3 + $0x278] sm:$0xff]
    %v160 = vld [vmem:[#allocation3 + $0x280] sm:$0xff]
    %v161 = vld [vmem:[#allocation3 + $0x288] sm:$0xff]
    %v162 = vld [vmem:[#allocation3 + $0x290] sm:$0xff]
    %v163 = vld [vmem:[#allocation3 + $0x298] sm:$0xff]
    %v164 = vld [vmem:[#allocation3 + $0x2a0] sm:$0xff]
    %v165 = vld [vmem:[#allocation3 + $0x2a8] sm:$0xff]
    %v166 = vld [vmem:[#allocation3 + $0x2b0] sm:$0xff]
    %v167 = vld [vmem:[#allocation3 + $0x2b8] sm:$0xff]
    %v168 = vld [vmem:[#allocation3 + $0x2c0] sm:$0xff]
    %v169 = vld [vmem:[#allocation3 + $0x2c8] sm:$0xff]
    %v170 = vld [vmem:[#allocation3 + $0x2d0] sm:$0xff]
    %v171 = vld [vmem:[#allocation3 + $0x2d8] sm:$0xff]
    %v172 = vld [vmem:[#allocation3 + $0x2e0] sm:$0xff]
    %v173 = vld [vmem:[#allocation3 + $0x2e8] sm:$0xff]
    %v174 = vld [vmem:[#allocation3 + $0x2f0] sm:$0xff]
    %v175 = vld [vmem:[#allocation3 + $0x2f8] sm:$0xff]
    %v176 = vld [vmem:[#allocation3 + $0x300] sm:$0xff]
    %v177 = vld [vmem:[#allocation3 + $0x308] sm:$0xff]
    %v178 = vld [vmem:[#allocation3 + $0x310] sm:$0xff]
    %v179 = vld [vmem:[#allocation3 + $0x318] sm:$0xff]
    %v180 = vld [vmem:[#allocation3 + $0x320] sm:$0xff]
    %v181 = vld [vmem:[#allocation3 + $0x328] sm:$0xff]
    %v182 = vld [vmem:[#allocation3 + $0x330] sm:$0xff]
    %v183 = vld [vmem:[#allocation3 + $0x338] sm:$0xff]
    %v184 = vld [vmem:[#allocation3 + $0x340] sm:$0xff]
    %v185 = vld [vmem:[#allocation3 + $0x348] sm:$0xff]
    %v186 = vld [vmem:[#allocation3 + $0x350] sm:$0xff]
    %v187 = vld [vmem:[#allocation3 + $0x358] sm:$0xff]
    %v188 = vld [vmem:[#allocation3 + $0x360] sm:$0xff]
    %v189 = vld [vmem:[#allocation3 + $0x368] sm:$0xff]
    %v190 = vld [vmem:[#allocation3 + $0x370] sm:$0xff]
    %v191 = vld [vmem:[#allocation3 + $0x378] sm:$0xff]
    %v192 = vld [vmem:[#allocation3 + $0x380] sm:$0xff]
    %v193 = vld [vmem:[#allocation3 + $0x388] sm:$0xff]
    %v194 = vld [vmem:[#allocation3 + $0x390] sm:$0xff]
    %v195 = vld [vmem:[#allocation3 + $0x398] sm:$0xff]
    %v196 = vld [vmem:[#allocation3 + $0x3a0] sm:$0xff]
    %v197 = vld [vmem:[#allocation3 + $0x3a8] sm:$0xff]
    %v198 = vld [vmem:[#allocation3 + $0x3b0] sm:$0xff]
    %v199 = vld [vmem:[#allocation3 + $0x3b8] sm:$0xff]
    %v200 = vld [vmem:[#allocation3 + $0x3c0] sm:$0xff]
    %v201 = vld [vmem:[#allocation3 + $0x3c8] sm:$0xff]
    %v202 = vld [vmem:[#allocation3 + $0x3d0] sm:$0xff]
    %v203 = vld [vmem:[#allocation3 + $0x3d8] sm:$0xff]
    %v204 = vld [vmem:[#allocation3 + $0x3e0] sm:$0xff]
    %v205 = vld [vmem:[#allocation3 + $0x3e8] sm:$0xff]
    %v206 = vld [vmem:[#allocation3 + $0x3f0] sm:$0xff]
    %v207 = vld [vmem:[#allocation3 + $0x3f8] sm:$0xff]
    %v208 = vld [vmem:[#allocation3 + $0x400] sm:$0xff]
    %v209 = vld [vmem:[#allocation3 + $0x408] sm:$0xff]
    %v210 = vld [vmem:[#allocation3 + $0x410] sm:$0xff]
    %v211 = vld [vmem:[#allocation3 + $0x418] sm:$0xff]
    %v212 = vld [vmem:[#allocation3 + $0x420] sm:$0xff]
    %v213 = vld [vmem:[#allocation3 + $0x428] sm:$0xff]
    %v214 = vld [vmem:[#allocation3 + $0x430] sm:$0xff]
    %v215 = vld [vmem:[#allocation3 + $0x438] sm:$0xff]
    %v216 = vld [vmem:[#allocation3 + $0x440] sm:$0xff]
    %v217 = vld [vmem:[#allocation3 + $0x448] sm:$0xff]
    %v218 = vld [vmem:[#allocation3 + $0x450] sm:$0xff]
    %v219 = vld [vmem:[#allocation3 + $0x458] sm:$0xff]
    %v220 = vld [vmem:[#allocation3 + $0x460] sm:$0xff]
    %v221 = vld [vmem:[#allocation3 + $0x468] sm:$0xff]
    %v222 = vld [vmem:[#allocation3 + $0x470] sm:$0xff]
    %v223 = vld [vmem:[#allocation3 + $0x478] sm:$0xff]
    %v224 = vld [vmem:[#allocation3 + $0x480] sm:$0xff]
    %v225 = vld [vmem:[#allocation3 + $0x488] sm:$0xff]
    %v226 = vld [vmem:[#allocation3 + $0x490] sm:$0xff]
    %v227 = vld [vmem:[#allocation3 + $0x498] sm:$0xff]
    %v228 = vld [vmem:[#allocation3 + $0x4a0] sm:$0xff]
    %v229 = vld [vmem:[#allocation3 + $0x4a8] sm:$0xff]
    %v230 = vld [vmem:[#allocation3 + $0x4b0] sm:$0xff]
    %v231 = vld [vmem:[#allocation3 + $0x4b8] sm:$0xff]
    %v232 = vld [vmem:[#allocation3 + $0x4c0] sm:$0xff]
    %v233 = vld [vmem:[#allocation3 + $0x4c8] sm:$0xff]
    %v234 = vld [vmem:[#allocation3 + $0x4d0] sm:$0xff]
    %v235 = vld [vmem:[#allocation3 + $0x4d8] sm:$0xff]
    %v236 = vld [vmem:[#allocation3 + $0x4e0] sm:$0xff]
    %v237 = vld [vmem:[#allocation3 + $0x4e8] sm:$0xff]
    %v238 = vld [vmem:[#allocation3 + $0x4f0] sm:$0xff]
    %v239 = vld [vmem:[#allocation3 + $0x4f8] sm:$0xff]
    %v240 = vld [vmem:[#allocation3 + $0x500] sm:$0xff]
    %v241 = vld [vmem:[#allocation3 + $0x508] sm:$0xff]
    %v242 = vld [vmem:[#allocation3 + $0x510] sm:$0xff]
    %v243 = vld [vmem:[#allocation3 + $0x518] sm:$0xff]
    %v244 = vld [vmem:[#allocation3 + $0x520] sm:$0xff]
    %v245 = vld [vmem:[#allocation3 + $0x528] sm:$0xff]
    %v246 = vld [vmem:[#allocation3 + $0x530] sm:$0xff]
    %v247 = vld [vmem:[#allocation3 + $0x538] sm:$0xff]
    %v248 = vld [vmem:[#allocation3 + $0x540] sm:$0xff]
    %v249 = vld [vmem:[#allocation3 + $0x548] sm:$0xff]
    %v250 = vld [vmem:[#allocation3 + $0x550] sm:$0xff]
    %v251 = vld [vmem:[#allocation3 + $0x558] sm:$0xff]
    %v252 = vld [vmem:[#allocation3 + $0x560] sm:$0xff]
    %v253 = vld [vmem:[#allocation3 + $0x568] sm:$0xff]
    %v254 = vld [vmem:[#allocation3 + $0x570] sm:$0xff]
    %v255 = vld [vmem:[#allocation3 + $0x578] sm:$0xff]
    %v256 = vld [vmem:[#allocation3 + $0x580] sm:$0xff]
    %v257 = vld [vmem:[#allocation3 + $0x588] sm:$0xff]
    %v258 = vld [vmem:[#allocation3 + $0x590] sm:$0xff]
    %v259 = vld [vmem:[#allocation3 + $0x598] sm:$0xff]
    %v260 = vld [vmem:[#allocation3 + $0x5a0] sm:$0xff]
    %v261 = vld [vmem:[#allocation3 + $0x5a8] sm:$0xff]
    %v262 = vld [vmem:[#allocation3 + $0x5b0] sm:$0xff]
    %v263 = vld [vmem:[#allocation3 + $0x5b8] sm:$0xff]
    %v264 = vld [vmem:[#allocation3 + $0x5c0] sm:$0xff]
    %v265 = vld [vmem:[#allocation3 + $0x5c8] sm:$0xff]
    %v266 = vld [vmem:[#allocation3 + $0x5d0] sm:$0xff]
    %v267 = vld [vmem:[#allocation3 + $0x5d8] sm:$0xff]
    %v268 = vld [vmem:[#allocation3 + $0x5e0] sm:$0xff]
    %v269 = vld [vmem:[#allocation3 + $0x5e8] sm:$0xff]
    %v270 = vld [vmem:[#allocation3 + $0x5f0] sm:$0xff]
    %v271 = vld [vmem:[#allocation3 + $0x5f8] sm:$0xff]
    %v272 = vld [vmem:[#allocation3 + $0x600] sm:$0xff]
    %v273 = vld [vmem:[#allocation3 + $0x608] sm:$0xff]
    %v274 = vld [vmem:[#allocation3 + $0x610] sm:$0xff]
    %v275 = vld [vmem:[#allocation3 + $0x618] sm:$0xff]
    %v276 = vld [vmem:[#allocation3 + $0x620] sm:$0xff]
    %v277 = vld [vmem:[#allocation3 + $0x628] sm:$0xff]
    %v278 = vld [vmem:[#allocation3 + $0x630] sm:$0xff]
    %v279 = vld [vmem:[#allocation3 + $0x638] sm:$0xff]
    %v280 = vld [vmem:[#allocation3 + $0x640] sm:$0xff]
    %v281 = vld [vmem:[#allocation3 + $0x648] sm:$0xff]
    %v282 = vld [vmem:[#allocation3 + $0x650] sm:$0xff]
    %v283 = vld [vmem:[#allocation3 + $0x658] sm:$0xff]
    %v284 = vld [vmem:[#allocation3 + $0x660] sm:$0xff]
    %v285 = vld [vmem:[#allocation3 + $0x668] sm:$0xff]
    %v286 = vld [vmem:[#allocation3 + $0x670] sm:$0xff]
    %v287 = vld [vmem:[#allocation3 + $0x678] sm:$0xff]
    %v288 = vld [vmem:[#allocation3 + $0x680] sm:$0xff]
    %v289 = vld [vmem:[#allocation3 + $0x688] sm:$0xff]
    %v290 = vld [vmem:[#allocation3 + $0x690] sm:$0xff]
    %v291 = vld [vmem:[#allocation3 + $0x698] sm:$0xff]
    %v292 = vld [vmem:[#allocation3 + $0x6a0] sm:$0xff]
    %v293 = vld [vmem:[#allocation3 + $0x6a8] sm:$0xff]
    %v294 = vld [vmem:[#allocation3 + $0x6b0] sm:$0xff]
    %v295 = vld [vmem:[#allocation3 + $0x6b8] sm:$0xff]
    %v296 = vld [vmem:[#allocation3 + $0x6c0] sm:$0xff]
    %v297 = vld [vmem:[#allocation3 + $0x6c8] sm:$0xff]
    %v298 = vld [vmem:[#allocation3 + $0x6d0] sm:$0xff]
    %v299 = vld [vmem:[#allocation3 + $0x6d8] sm:$0xff]
    %v300 = vld [vmem:[#allocation3 + $0x6e0] sm:$0xff]
    %v301 = vld [vmem:[#allocation3 + $0x6e8] sm:$0xff]
    %v302 = vld [vmem:[#allocation3 + $0x6f0] sm:$0xff]
    %v303 = vld [vmem:[#allocation3 + $0x6f8] sm:$0xff]
    %v304 = vld [vmem:[#allocation3 + $0x700] sm:$0xff]
    %v305 = vld [vmem:[#allocation3 + $0x708] sm:$0xff]
    %v306 = vld [vmem:[#allocation3 + $0x710] sm:$0xff]
    %v307 = vld [vmem:[#allocation3 + $0x718] sm:$0xff]
    %v308 = vld [vmem:[#allocation3 + $0x720] sm:$0xff]
    %v309 = vld [vmem:[#allocation3 + $0x728] sm:$0xff]
    %v310 = vld [vmem:[#allocation3 + $0x730] sm:$0xff]
    %v311 = vld [vmem:[#allocation3 + $0x738] sm:$0xff]
    %v312 = vld [vmem:[#allocation3 + $0x740] sm:$0xff]
    %v313 = vld [vmem:[#allocation3 + $0x748] sm:$0xff]
    %v314 = vld [vmem:[#allocation3 + $0x750] sm:$0xff]
    %v315 = vld [vmem:[#allocation3 + $0x758] sm:$0xff]
    %v316 = vld [vmem:[#allocation3 + $0x760] sm:$0xff]
    %v317 = vld [vmem:[#allocation3 + $0x768] sm:$0xff]
    %v318 = vld [vmem:[#allocation3 + $0x770] sm:$0xff]
    %v319 = vld [vmem:[#allocation3 + $0x778] sm:$0xff]
    %v320 = vld [vmem:[#allocation3 + $0x780] sm:$0xff]
    %v321 = vld [vmem:[#allocation3 + $0x788] sm:$0xff]
    %v322 = vld [vmem:[#allocation3 + $0x790] sm:$0xff]
    %v323 = vld [vmem:[#allocation3 + $0x798] sm:$0xff]
    %v324 = vld [vmem:[#allocation3 + $0x7a0] sm:$0xff]
    %v325 = vld [vmem:[#allocation3 + $0x7a8] sm:$0xff]
    %v326 = vld [vmem:[#allocation3 + $0x7b0] sm:$0xff]
    %v327 = vld [vmem:[#allocation3 + $0x7b8] sm:$0xff]
    %v328 = vld [vmem:[#allocation3 + $0x7c0] sm:$0xff]
    %v329 = vld [vmem:[#allocation3 + $0x7c8] sm:$0xff]
    %v330 = vld [vmem:[#allocation3 + $0x7d0] sm:$0xff]
    %v331 = vld [vmem:[#allocation3 + $0x7d8] sm:$0xff]
    %v332 = vld [vmem:[#allocation3 + $0x7e0] sm:$0xff]
    %v333 = vld [vmem:[#allocation3 + $0x7e8] sm:$0xff]
    %v334 = vld [vmem:[#allocation3 + $0x7f0] sm:$0xff]
    %v335 = vld [vmem:[#allocation3 + $0x7f8] sm:$0xff]
    %v336 = vld [vmem:[%s3] sm:$0xf]
    %v338 = vlaneseq
    %v339 = vshrl.u32 %v338, 7
    %v340 = vsub.s32 0, %v339
    %v341 = vrot.slane %v336, %v340
    %v342 = vlaneseq
    %v343 = vshrl.u32 %v342, 7
    %v344 = vsub.s32 1, %v343
    %v345 = vrot.slane %v336, %v344
    %v346 = vlaneseq
    %v347 = vshrl.u32 %v346, 7
    %v348 = vsub.s32 2, %v347
    %v349 = vrot.slane %v336, %v348
    %v350 = vlaneseq
    %v351 = vshrl.u32 %v350, 7
    %v352 = vsub.s32 3, %v351
    %v353 = vrot.slane %v336, %v352
    %v366 = vunpack.c.l.b16 %v72
    %v367 = vunpack.c.h.b16 %v72
    %v368 = vunpack.c.l.b16 %v73
    %v369 = vunpack.c.h.b16 %v73
    %v370 = vunpack.c.l.b16 %v74
    %v371 = vunpack.c.h.b16 %v74
    %v372 = vunpack.c.l.b16 %v75
    %v373 = vunpack.c.h.b16 %v75
    %v374 = vunpack.c.l.b16 %v76
    %v375 = vunpack.c.h.b16 %v76
    %v376 = vunpack.c.l.b16 %v77
    %v377 = vunpack.c.h.b16 %v77
    %v378 = vunpack.c.l.b16 %v78
    %v379 = vunpack.c.h.b16 %v78
    %v380 = vunpack.c.l.b16 %v79
    %v381 = vunpack.c.h.b16 %v79
    %v382 = vpack.c.b16 %v374, %v366
    %v383 = vpack.c.b16 %v375, %v367
    %v384 = vpack.c.b16 %v376, %v368
    %v385 = vpack.c.b16 %v377, %v369
    %v386 = vpack.c.b16 %v378, %v370
    %v387 = vpack.c.b16 %v379, %v371
    %v388 = vpack.c.b16 %v380, %v372
    %v389 = vpack.c.b16 %v381, %v373
    %v654 = vunpack.c.l.b16 %v80
    %v655 = vunpack.c.h.b16 %v80
    %v656 = vunpack.c.l.b16 %v81
    %v657 = vunpack.c.h.b16 %v81
    %v658 = vunpack.c.l.b16 %v82
    %v659 = vunpack.c.h.b16 %v82
    %v660 = vunpack.c.l.b16 %v83
    %v661 = vunpack.c.h.b16 %v83
    %v662 = vunpack.c.l.b16 %v84
    %v663 = vunpack.c.h.b16 %v84
    %v664 = vunpack.c.l.b16 %v85
    %v665 = vunpack.c.h.b16 %v85
    %v666 = vunpack.c.l.b16 %v86
    %v667 = vunpack.c.h.b16 %v86
    %v668 = vunpack.c.l.b16 %v87
    %v669 = vunpack.c.h.b16 %v87
    %v670 = vunpack.c.l.b16 %v88
    %v671 = vunpack.c.h.b16 %v88
    %v672 = vunpack.c.l.b16 %v89
    %v673 = vunpack.c.h.b16 %v89
    %v674 = vunpack.c.l.b16 %v90
    %v675 = vunpack.c.h.b16 %v90
    %v676 = vunpack.c.l.b16 %v91
    %v677 = vunpack.c.h.b16 %v91
    %v678 = vunpack.c.l.b16 %v92
    %v679 = vunpack.c.h.b16 %v92
    %v680 = vunpack.c.l.b16 %v93
    %v681 = vunpack.c.h.b16 %v93
    %v682 = vunpack.c.l.b16 %v94
    %v683 = vunpack.c.h.b16 %v94
    %v684 = vunpack.c.l.b16 %v95
    %v685 = vunpack.c.h.b16 %v95
    %v686 = vunpack.c.l.b16 %v96
    %v687 = vunpack.c.h.b16 %v96
    %v688 = vunpack.c.l.b16 %v97
    %v689 = vunpack.c.h.b16 %v97
    %v690 = vunpack.c.l.b16 %v98
    %v691 = vunpack.c.h.b16 %v98
    %v692 = vunpack.c.l.b16 %v99
    %v693 = vunpack.c.h.b16 %v99
    %v694 = vunpack.c.l.b16 %v100
    %v695 = vunpack.c.h.b16 %v100
    %v696 = vunpack.c.l.b16 %v101
    %v697 = vunpack.c.h.b16 %v101
    %v698 = vunpack.c.l.b16 %v102
    %v699 = vunpack.c.h.b16 %v102
    %v700 = vunpack.c.l.b16 %v103
    %v701 = vunpack.c.h.b16 %v103
    %v702 = vunpack.c.l.b16 %v104
    %v703 = vunpack.c.h.b16 %v104
    %v704 = vunpack.c.l.b16 %v105
    %v705 = vunpack.c.h.b16 %v105
    %v706 = vunpack.c.l.b16 %v106
    %v707 = vunpack.c.h.b16 %v106
    %v708 = vunpack.c.l.b16 %v107
    %v709 = vunpack.c.h.b16 %v107
    %v710 = vunpack.c.l.b16 %v108
    %v711 = vunpack.c.h.b16 %v108
    %v712 = vunpack.c.l.b16 %v109
    %v713 = vunpack.c.h.b16 %v109
    %v714 = vunpack.c.l.b16 %v110
    %v715 = vunpack.c.h.b16 %v110
    %v716 = vunpack.c.l.b16 %v111
    %v717 = vunpack.c.h.b16 %v111
    %v718 = vunpack.c.l.b16 %v112
    %v719 = vunpack.c.h.b16 %v112
    %v720 = vunpack.c.l.b16 %v113
    %v721 = vunpack.c.h.b16 %v113
    %v722 = vunpack.c.l.b16 %v114
    %v723 = vunpack.c.h.b16 %v114
    %v724 = vunpack.c.l.b16 %v115
    %v725 = vunpack.c.h.b16 %v115
    %v726 = vunpack.c.l.b16 %v116
    %v727 = vunpack.c.h.b16 %v116
    %v728 = vunpack.c.l.b16 %v117
    %v729 = vunpack.c.h.b16 %v117
    %v730 = vunpack.c.l.b16 %v118
    %v731 = vunpack.c.h.b16 %v118
    %v732 = vunpack.c.l.b16 %v119
    %v733 = vunpack.c.h.b16 %v119
    %v734 = vunpack.c.l.b16 %v120
    %v735 = vunpack.c.h.b16 %v120
    %v736 = vunpack.c.l.b16 %v121
    %v737 = vunpack.c.h.b16 %v121
    %v738 = vunpack.c.l.b16 %v122
    %v739 = vunpack.c.h.b16 %v122
    %v740 = vunpack.c.l.b16 %v123
    %v741 = vunpack.c.h.b16 %v123
    %v742 = vunpack.c.l.b16 %v124
    %v743 = vunpack.c.h.b16 %v124
    %v744 = vunpack.c.l.b16 %v125
    %v745 = vunpack.c.h.b16 %v125
    %v746 = vunpack.c.l.b16 %v126
    %v747 = vunpack.c.h.b16 %v126
    %v748 = vunpack.c.l.b16 %v127
    %v749 = vunpack.c.h.b16 %v127
    %v750 = vunpack.c.l.b16 %v128
    %v751 = vunpack.c.h.b16 %v128
    %v752 = vunpack.c.l.b16 %v129
    %v753 = vunpack.c.h.b16 %v129
    %v754 = vunpack.c.l.b16 %v130
    %v755 = vunpack.c.h.b16 %v130
    %v756 = vunpack.c.l.b16 %v131
    %v757 = vunpack.c.h.b16 %v131
    %v758 = vunpack.c.l.b16 %v132
    %v759 = vunpack.c.h.b16 %v132
    %v760 = vunpack.c.l.b16 %v133
    %v761 = vunpack.c.h.b16 %v133
    %v762 = vunpack.c.l.b16 %v134
    %v763 = vunpack.c.h.b16 %v134
    %v764 = vunpack.c.l.b16 %v135
    %v765 = vunpack.c.h.b16 %v135
    %v766 = vunpack.c.l.b16 %v136
    %v767 = vunpack.c.h.b16 %v136
    %v768 = vunpack.c.l.b16 %v137
    %v769 = vunpack.c.h.b16 %v137
    %v770 = vunpack.c.l.b16 %v138
    %v771 = vunpack.c.h.b16 %v138
    %v772 = vunpack.c.l.b16 %v139
    %v773 = vunpack.c.h.b16 %v139
    %v774 = vunpack.c.l.b16 %v140
    %v775 = vunpack.c.h.b16 %v140
    %v776 = vunpack.c.l.b16 %v141
    %v777 = vunpack.c.h.b16 %v141
    %v778 = vunpack.c.l.b16 %v142
    %v779 = vunpack.c.h.b16 %v142
    %v780 = vunpack.c.l.b16 %v143
    %v781 = vunpack.c.h.b16 %v143
    %v782 = vunpack.c.l.b16 %v144
    %v783 = vunpack.c.h.b16 %v144
    %v784 = vunpack.c.l.b16 %v145
    %v785 = vunpack.c.h.b16 %v145
    %v786 = vunpack.c.l.b16 %v146
    %v787 = vunpack.c.h.b16 %v146
    %v788 = vunpack.c.l.b16 %v147
    %v789 = vunpack.c.h.b16 %v147
    %v790 = vunpack.c.l.b16 %v148
    %v791 = vunpack.c.h.b16 %v148
    %v792 = vunpack.c.l.b16 %v149
    %v793 = vunpack.c.h.b16 %v149
    %v794 = vunpack.c.l.b16 %v150
    %v795 = vunpack.c.h.b16 %v150
    %v796 = vunpack.c.l.b16 %v151
    %v797 = vunpack.c.h.b16 %v151
    %v798 = vunpack.c.l.b16 %v152
    %v799 = vunpack.c.h.b16 %v152
    %v800 = vunpack.c.l.b16 %v153
    %v801 = vunpack.c.h.b16 %v153
    %v802 = vunpack.c.l.b16 %v154
    %v803 = vunpack.c.h.b16 %v154
    %v804 = vunpack.c.l.b16 %v155
    %v805 = vunpack.c.h.b16 %v155
    %v806 = vunpack.c.l.b16 %v156
    %v807 = vunpack.c.h.b16 %v156
    %v808 = vunpack.c.l.b16 %v157
    %v809 = vunpack.c.h.b16 %v157
    %v810 = vunpack.c.l.b16 %v158
    %v811 = vunpack.c.h.b16 %v158
    %v812 = vunpack.c.l.b16 %v159
    %v813 = vunpack.c.h.b16 %v159
    %v814 = vunpack.c.l.b16 %v160
    %v815 = vunpack.c.h.b16 %v160
    %v816 = vunpack.c.l.b16 %v161
    %v817 = vunpack.c.h.b16 %v161
    %v818 = vunpack.c.l.b16 %v162
    %v819 = vunpack.c.h.b16 %v162
    %v820 = vunpack.c.l.b16 %v163
    %v821 = vunpack.c.h.b16 %v163
    %v822 = vunpack.c.l.b16 %v164
    %v823 = vunpack.c.h.b16 %v164
    %v824 = vunpack.c.l.b16 %v165
    %v825 = vunpack.c.h.b16 %v165
    %v826 = vunpack.c.l.b16 %v166
    %v827 = vunpack.c.h.b16 %v166
    %v828 = vunpack.c.l.b16 %v167
    %v829 = vunpack.c.h.b16 %v167
    %v830 = vunpack.c.l.b16 %v168
    %v831 = vunpack.c.h.b16 %v168
    %v832 = vunpack.c.l.b16 %v169
    %v833 = vunpack.c.h.b16 %v169
    %v834 = vunpack.c.l.b16 %v170
    %v835 = vunpack.c.h.b16 %v170
    %v836 = vunpack.c.l.b16 %v171
    %v837 = vunpack.c.h.b16 %v171
    %v838 = vunpack.c.l.b16 %v172
    %v839 = vunpack.c.h.b16 %v172
    %v840 = vunpack.c.l.b16 %v173
    %v841 = vunpack.c.h.b16 %v173
    %v842 = vunpack.c.l.b16 %v174
    %v843 = vunpack.c.h.b16 %v174
    %v844 = vunpack.c.l.b16 %v175
    %v845 = vunpack.c.h.b16 %v175
    %v846 = vunpack.c.l.b16 %v176
    %v847 = vunpack.c.h.b16 %v176
    %v848 = vunpack.c.l.b16 %v177
    %v849 = vunpack.c.h.b16 %v177
    %v850 = vunpack.c.l.b16 %v178
    %v851 = vunpack.c.h.b16 %v178
    %v852 = vunpack.c.l.b16 %v179
    %v853 = vunpack.c.h.b16 %v179
    %v854 = vunpack.c.l.b16 %v180
    %v855 = vunpack.c.h.b16 %v180
    %v856 = vunpack.c.l.b16 %v181
    %v857 = vunpack.c.h.b16 %v181
    %v858 = vunpack.c.l.b16 %v182
    %v859 = vunpack.c.h.b16 %v182
    %v860 = vunpack.c.l.b16 %v183
    %v861 = vunpack.c.h.b16 %v183
    %v862 = vunpack.c.l.b16 %v184
    %v863 = vunpack.c.h.b16 %v184
    %v864 = vunpack.c.l.b16 %v185
    %v865 = vunpack.c.h.b16 %v185
    %v866 = vunpack.c.l.b16 %v186
    %v867 = vunpack.c.h.b16 %v186
    %v868 = vunpack.c.l.b16 %v187
    %v869 = vunpack.c.h.b16 %v187
    %v870 = vunpack.c.l.b16 %v188
    %v871 = vunpack.c.h.b16 %v188
    %v872 = vunpack.c.l.b16 %v189
    %v873 = vunpack.c.h.b16 %v189
    %v874 = vunpack.c.l.b16 %v190
    %v875 = vunpack.c.h.b16 %v190
    %v876 = vunpack.c.l.b16 %v191
    %v877 = vunpack.c.h.b16 %v191
    %v878 = vunpack.c.l.b16 %v192
    %v879 = vunpack.c.h.b16 %v192
    %v880 = vunpack.c.l.b16 %v193
    %v881 = vunpack.c.h.b16 %v193
    %v882 = vunpack.c.l.b16 %v194
    %v883 = vunpack.c.h.b16 %v194
    %v884 = vunpack.c.l.b16 %v195
    %v885 = vunpack.c.h.b16 %v195
    %v886 = vunpack.c.l.b16 %v196
    %v887 = vunpack.c.h.b16 %v196
    %v888 = vunpack.c.l.b16 %v197
    %v889 = vunpack.c.h.b16 %v197
    %v890 = vunpack.c.l.b16 %v198
    %v891 = vunpack.c.h.b16 %v198
    %v892 = vunpack.c.l.b16 %v199
    %v893 = vunpack.c.h.b16 %v199
    %v894 = vunpack.c.l.b16 %v200
    %v895 = vunpack.c.h.b16 %v200
    %v896 = vunpack.c.l.b16 %v201
    %v897 = vunpack.c.h.b16 %v201
    %v898 = vunpack.c.l.b16 %v202
    %v899 = vunpack.c.h.b16 %v202
    %v900 = vunpack.c.l.b16 %v203
    %v901 = vunpack.c.h.b16 %v203
    %v902 = vunpack.c.l.b16 %v204
    %v903 = vunpack.c.h.b16 %v204
    %v904 = vunpack.c.l.b16 %v205
    %v905 = vunpack.c.h.b16 %v205
    %v906 = vunpack.c.l.b16 %v206
    %v907 = vunpack.c.h.b16 %v206
    %v908 = vunpack.c.l.b16 %v207
    %v909 = vunpack.c.h.b16 %v207
    %v910 = vunpack.c.l.b16 %v208
    %v911 = vunpack.c.h.b16 %v208
    %v912 = vunpack.c.l.b16 %v209
    %v913 = vunpack.c.h.b16 %v209
    %v914 = vunpack.c.l.b16 %v210
    %v915 = vunpack.c.h.b16 %v210
    %v916 = vunpack.c.l.b16 %v211
    %v917 = vunpack.c.h.b16 %v211
    %v918 = vunpack.c.l.b16 %v212
    %v919 = vunpack.c.h.b16 %v212
    %v920 = vunpack.c.l.b16 %v213
    %v921 = vunpack.c.h.b16 %v213
    %v922 = vunpack.c.l.b16 %v214
    %v923 = vunpack.c.h.b16 %v214
    %v924 = vunpack.c.l.b16 %v215
    %v925 = vunpack.c.h.b16 %v215
    %v926 = vunpack.c.l.b16 %v216
    %v927 = vunpack.c.h.b16 %v216
    %v928 = vunpack.c.l.b16 %v217
    %v929 = vunpack.c.h.b16 %v217
    %v930 = vunpack.c.l.b16 %v218
    %v931 = vunpack.c.h.b16 %v218
    %v932 = vunpack.c.l.b16 %v219
    %v933 = vunpack.c.h.b16 %v219
    %v934 = vunpack.c.l.b16 %v220
    %v935 = vunpack.c.h.b16 %v220
    %v936 = vunpack.c.l.b16 %v221
    %v937 = vunpack.c.h.b16 %v221
    %v938 = vunpack.c.l.b16 %v222
    %v939 = vunpack.c.h.b16 %v222
    %v940 = vunpack.c.l.b16 %v223
    %v941 = vunpack.c.h.b16 %v223
    %v942 = vunpack.c.l.b16 %v224
    %v943 = vunpack.c.h.b16 %v224
    %v944 = vunpack.c.l.b16 %v225
    %v945 = vunpack.c.h.b16 %v225
    %v946 = vunpack.c.l.b16 %v226
    %v947 = vunpack.c.h.b16 %v226
    %v948 = vunpack.c.l.b16 %v227
    %v949 = vunpack.c.h.b16 %v227
    %v950 = vunpack.c.l.b16 %v228
    %v951 = vunpack.c.h.b16 %v228
    %v952 = vunpack.c.l.b16 %v229
    %v953 = vunpack.c.h.b16 %v229
    %v954 = vunpack.c.l.b16 %v230
    %v955 = vunpack.c.h.b16 %v230
    %v956 = vunpack.c.l.b16 %v231
    %v957 = vunpack.c.h.b16 %v231
    %v958 = vunpack.c.l.b16 %v232
    %v959 = vunpack.c.h.b16 %v232
    %v960 = vunpack.c.l.b16 %v233
    %v961 = vunpack.c.h.b16 %v233
    %v962 = vunpack.c.l.b16 %v234
    %v963 = vunpack.c.h.b16 %v234
    %v964 = vunpack.c.l.b16 %v235
    %v965 = vunpack.c.h.b16 %v235
    %v966 = vunpack.c.l.b16 %v236
    %v967 = vunpack.c.h.b16 %v236
    %v968 = vunpack.c.l.b16 %v237
    %v969 = vunpack.c.h.b16 %v237
    %v970 = vunpack.c.l.b16 %v238
    %v971 = vunpack.c.h.b16 %v238
    %v972 = vunpack.c.l.b16 %v239
    %v973 = vunpack.c.h.b16 %v239
    %v974 = vunpack.c.l.b16 %v240
    %v975 = vunpack.c.h.b16 %v240
    %v976 = vunpack.c.l.b16 %v241
    %v977 = vunpack.c.h.b16 %v241
    %v978 = vunpack.c.l.b16 %v242
    %v979 = vunpack.c.h.b16 %v242
    %v980 = vunpack.c.l.b16 %v243
    %v981 = vunpack.c.h.b16 %v243
    %v982 = vunpack.c.l.b16 %v244
    %v983 = vunpack.c.h.b16 %v244
    %v984 = vunpack.c.l.b16 %v245
    %v985 = vunpack.c.h.b16 %v245
    %v986 = vunpack.c.l.b16 %v246
    %v987 = vunpack.c.h.b16 %v246
    %v988 = vunpack.c.l.b16 %v247
    %v989 = vunpack.c.h.b16 %v247
    %v990 = vunpack.c.l.b16 %v248
    %v991 = vunpack.c.h.b16 %v248
    %v992 = vunpack.c.l.b16 %v249
    %v993 = vunpack.c.h.b16 %v249
    %v994 = vunpack.c.l.b16 %v250
    %v995 = vunpack.c.h.b16 %v250
    %v996 = vunpack.c.l.b16 %v251
    %v997 = vunpack.c.h.b16 %v251
    %v998 = vunpack.c.l.b16 %v252
    %v999 = vunpack.c.h.b16 %v252
    %v1000 = vunpack.c.l.b16 %v253
    %v1001 = vunpack.c.h.b16 %v253
    %v1002 = vunpack.c.l.b16 %v254
    %v1003 = vunpack.c.h.b16 %v254
    %v1004 = vunpack.c.l.b16 %v255
    %v1005 = vunpack.c.h.b16 %v255
    %v1006 = vunpack.c.l.b16 %v256
    %v1007 = vunpack.c.h.b16 %v256
    %v1008 = vunpack.c.l.b16 %v257
    %v1009 = vunpack.c.h.b16 %v257
    %v1010 = vunpack.c.l.b16 %v258
    %v1011 = vunpack.c.h.b16 %v258
    %v1012 = vunpack.c.l.b16 %v259
    %v1013 = vunpack.c.h.b16 %v259
    %v1014 = vunpack.c.l.b16 %v260
    %v1015 = vunpack.c.h.b16 %v260
    %v1016 = vunpack.c.l.b16 %v261
    %v1017 = vunpack.c.h.b16 %v261
    %v1018 = vunpack.c.l.b16 %v262
    %v1019 = vunpack.c.h.b16 %v262
    %v1020 = vunpack.c.l.b16 %v263
    %v1021 = vunpack.c.h.b16 %v263
    %v1022 = vunpack.c.l.b16 %v264
    %v1023 = vunpack.c.h.b16 %v264
    %v1024 = vunpack.c.l.b16 %v265
    %v1025 = vunpack.c.h.b16 %v265
    %v1026 = vunpack.c.l.b16 %v266
    %v1027 = vunpack.c.h.b16 %v266
    %v1028 = vunpack.c.l.b16 %v267
    %v1029 = vunpack.c.h.b16 %v267
    %v1030 = vunpack.c.l.b16 %v268
    %v1031 = vunpack.c.h.b16 %v268
    %v1032 = vunpack.c.l.b16 %v269
    %v1033 = vunpack.c.h.b16 %v269
    %v1034 = vunpack.c.l.b16 %v270
    %v1035 = vunpack.c.h.b16 %v270
    %v1036 = vunpack.c.l.b16 %v271
    %v1037 = vunpack.c.h.b16 %v271
    %v1038 = vunpack.c.l.b16 %v272
    %v1039 = vunpack.c.h.b16 %v272
    %v1040 = vunpack.c.l.b16 %v273
    %v1041 = vunpack.c.h.b16 %v273
    %v1042 = vunpack.c.l.b16 %v274
    %v1043 = vunpack.c.h.b16 %v274
    %v1044 = vunpack.c.l.b16 %v275
    %v1045 = vunpack.c.h.b16 %v275
    %v1046 = vunpack.c.l.b16 %v276
    %v1047 = vunpack.c.h.b16 %v276
    %v1048 = vunpack.c.l.b16 %v277
    %v1049 = vunpack.c.h.b16 %v277
    %v1050 = vunpack.c.l.b16 %v278
    %v1051 = vunpack.c.h.b16 %v278
    %v1052 = vunpack.c.l.b16 %v279
    %v1053 = vunpack.c.h.b16 %v279
    %v1054 = vunpack.c.l.b16 %v280
    %v1055 = vunpack.c.h.b16 %v280
    %v1056 = vunpack.c.l.b16 %v281
    %v1057 = vunpack.c.h.b16 %v281
    %v1058 = vunpack.c.l.b16 %v282
    %v1059 = vunpack.c.h.b16 %v282
    %v1060 = vunpack.c.l.b16 %v283
    %v1061 = vunpack.c.h.b16 %v283
    %v1062 = vunpack.c.l.b16 %v284
    %v1063 = vunpack.c.h.b16 %v284
    %v1064 = vunpack.c.l.b16 %v285
    %v1065 = vunpack.c.h.b16 %v285
    %v1066 = vunpack.c.l.b16 %v286
    %v1067 = vunpack.c.h.b16 %v286
    %v1068 = vunpack.c.l.b16 %v287
    %v1069 = vunpack.c.h.b16 %v287
    %v1070 = vunpack.c.l.b16 %v288
    %v1071 = vunpack.c.h.b16 %v288
    %v1072 = vunpack.c.l.b16 %v289
    %v1073 = vunpack.c.h.b16 %v289
    %v1074 = vunpack.c.l.b16 %v290
    %v1075 = vunpack.c.h.b16 %v290
    %v1076 = vunpack.c.l.b16 %v291
    %v1077 = vunpack.c.h.b16 %v291
    %v1078 = vunpack.c.l.b16 %v292
    %v1079 = vunpack.c.h.b16 %v292
    %v1080 = vunpack.c.l.b16 %v293
    %v1081 = vunpack.c.h.b16 %v293
    %v1082 = vunpack.c.l.b16 %v294
    %v1083 = vunpack.c.h.b16 %v294
    %v1084 = vunpack.c.l.b16 %v295
    %v1085 = vunpack.c.h.b16 %v295
    %v1086 = vunpack.c.l.b16 %v296
    %v1087 = vunpack.c.h.b16 %v296
    %v1088 = vunpack.c.l.b16 %v297
    %v1089 = vunpack.c.h.b16 %v297
    %v1090 = vunpack.c.l.b16 %v298
    %v1091 = vunpack.c.h.b16 %v298
    %v1092 = vunpack.c.l.b16 %v299
    %v1093 = vunpack.c.h.b16 %v299
    %v1094 = vunpack.c.l.b16 %v300
    %v1095 = vunpack.c.h.b16 %v300
    %v1096 = vunpack.c.l.b16 %v301
    %v1097 = vunpack.c.h.b16 %v301
    %v1098 = vunpack.c.l.b16 %v302
    %v1099 = vunpack.c.h.b16 %v302
    %v1100 = vunpack.c.l.b16 %v303
    %v1101 = vunpack.c.h.b16 %v303
    %v1102 = vunpack.c.l.b16 %v304
    %v1103 = vunpack.c.h.b16 %v304
    %v1104 = vunpack.c.l.b16 %v305
    %v1105 = vunpack.c.h.b16 %v305
    %v1106 = vunpack.c.l.b16 %v306
    %v1107 = vunpack.c.h.b16 %v306
    %v1108 = vunpack.c.l.b16 %v307
    %v1109 = vunpack.c.h.b16 %v307
    %v1110 = vunpack.c.l.b16 %v308
    %v1111 = vunpack.c.h.b16 %v308
    %v1112 = vunpack.c.l.b16 %v309
    %v1113 = vunpack.c.h.b16 %v309
    %v1114 = vunpack.c.l.b16 %v310
    %v1115 = vunpack.c.h.b16 %v310
    %v1116 = vunpack.c.l.b16 %v311
    %v1117 = vunpack.c.h.b16 %v311
    %v1118 = vunpack.c.l.b16 %v312
    %v1119 = vunpack.c.h.b16 %v312
    %v1120 = vunpack.c.l.b16 %v313
    %v1121 = vunpack.c.h.b16 %v313
    %v1122 = vunpack.c.l.b16 %v314
    %v1123 = vunpack.c.h.b16 %v314
    %v1124 = vunpack.c.l.b16 %v315
    %v1125 = vunpack.c.h.b16 %v315
    %v1126 = vunpack.c.l.b16 %v316
    %v1127 = vunpack.c.h.b16 %v316
    %v1128 = vunpack.c.l.b16 %v317
    %v1129 = vunpack.c.h.b16 %v317
    %v1130 = vunpack.c.l.b16 %v318
    %v1131 = vunpack.c.h.b16 %v318
    %v1132 = vunpack.c.l.b16 %v319
    %v1133 = vunpack.c.h.b16 %v319
    %v1134 = vunpack.c.l.b16 %v320
    %v1135 = vunpack.c.h.b16 %v320
    %v1136 = vunpack.c.l.b16 %v321
    %v1137 = vunpack.c.h.b16 %v321
    %v1138 = vunpack.c.l.b16 %v322
    %v1139 = vunpack.c.h.b16 %v322
    %v1140 = vunpack.c.l.b16 %v323
    %v1141 = vunpack.c.h.b16 %v323
    %v1142 = vunpack.c.l.b16 %v324
    %v1143 = vunpack.c.h.b16 %v324
    %v1144 = vunpack.c.l.b16 %v325
    %v1145 = vunpack.c.h.b16 %v325
    %v1146 = vunpack.c.l.b16 %v326
    %v1147 = vunpack.c.h.b16 %v326
    %v1148 = vunpack.c.l.b16 %v327
    %v1149 = vunpack.c.h.b16 %v327
    %v1150 = vunpack.c.l.b16 %v328
    %v1151 = vunpack.c.h.b16 %v328
    %v1152 = vunpack.c.l.b16 %v329
    %v1153 = vunpack.c.h.b16 %v329
    %v1154 = vunpack.c.l.b16 %v330
    %v1155 = vunpack.c.h.b16 %v330
    %v1156 = vunpack.c.l.b16 %v331
    %v1157 = vunpack.c.h.b16 %v331
    %v1158 = vunpack.c.l.b16 %v332
    %v1159 = vunpack.c.h.b16 %v332
    %v1160 = vunpack.c.l.b16 %v333
    %v1161 = vunpack.c.h.b16 %v333
    %v1162 = vunpack.c.l.b16 %v334
    %v1163 = vunpack.c.h.b16 %v334
    %v1164 = vunpack.c.l.b16 %v335
    %v1165 = vunpack.c.h.b16 %v335
    %v1166 = vpack.c.b16 %v658, %v654
    %v1167 = vpack.c.b16 %v659, %v655
    %v1168 = vpack.c.b16 %v660, %v656
    %v1169 = vpack.c.b16 %v661, %v657
    %v1170 = vpack.c.b16 %v666, %v662
    %v1171 = vpack.c.b16 %v667, %v663
    %v1172 = vpack.c.b16 %v668, %v664
    %v1173 = vpack.c.b16 %v669, %v665
    %v1174 = vpack.c.b16 %v674, %v670
    %v1175 = vpack.c.b16 %v675, %v671
    %v1176 = vpack.c.b16 %v676, %v672
    %v1177 = vpack.c.b16 %v677, %v673
    %v1178 = vpack.c.b16 %v682, %v678
    %v1179 = vpack.c.b16 %v683, %v679
    %v1180 = vpack.c.b16 %v684, %v680
    %v1181 = vpack.c.b16 %v685, %v681
    %v1182 = vpack.c.b16 %v690, %v686
    %v1183 = vpack.c.b16 %v691, %v687
    %v1184 = vpack.c.b16 %v692, %v688
    %v1185 = vpack.c.b16 %v693, %v689
    %v1186 = vpack.c.b16 %v698, %v694
    %v1187 = vpack.c.b16 %v699, %v695
    %v1188 = vpack.c.b16 %v700, %v696
    %v1189 = vpack.c.b16 %v701, %v697
    %v1190 = vpack.c.b16 %v706, %v702
    %v1191 = vpack.c.b16 %v707, %v703
    %v1192 = vpack.c.b16 %v708, %v704
    %v1193 = vpack.c.b16 %v709, %v705
    %v1194 = vpack.c.b16 %v714, %v710
    %v1195 = vpack.c.b16 %v715, %v711
    %v1196 = vpack.c.b16 %v716, %v712
    %v1197 = vpack.c.b16 %v717, %v713
    %v1198 = vpack.c.b16 %v722, %v718
    %v1199 = vpack.c.b16 %v723, %v719
    %v1200 = vpack.c.b16 %v724, %v720
    %v1201 = vpack.c.b16 %v725, %v721
    %v1202 = vpack.c.b16 %v730, %v726
    %v1203 = vpack.c.b16 %v731, %v727
    %v1204 = vpack.c.b16 %v732, %v728
    %v1205 = vpack.c.b16 %v733, %v729
    %v1206 = vpack.c.b16 %v738, %v734
    %v1207 = vpack.c.b16 %v739, %v735
    %v1208 = vpack.c.b16 %v740, %v736
    %v1209 = vpack.c.b16 %v741, %v737
    %v1210 = vpack.c.b16 %v746, %v742
    %v1211 = vpack.c.b16 %v747, %v743
    %v1212 = vpack.c.b16 %v748, %v744
    %v1213 = vpack.c.b16 %v749, %v745
    %v1214 = vpack.c.b16 %v754, %v750
    %v1215 = vpack.c.b16 %v755, %v751
    %v1216 = vpack.c.b16 %v756, %v752
    %v1217 = vpack.c.b16 %v757, %v753
    %v1218 = vpack.c.b16 %v762, %v758
    %v1219 = vpack.c.b16 %v763, %v759
    %v1220 = vpack.c.b16 %v764, %v760
    %v1221 = vpack.c.b16 %v765, %v761
    %v1222 = vpack.c.b16 %v770, %v766
    %v1223 = vpack.c.b16 %v771, %v767
    %v1224 = vpack.c.b16 %v772, %v768
    %v1225 = vpack.c.b16 %v773, %v769
    %v1226 = vpack.c.b16 %v778, %v774
    %v1227 = vpack.c.b16 %v779, %v775
    %v1228 = vpack.c.b16 %v780, %v776
    %v1229 = vpack.c.b16 %v781, %v777
    %v1230 = vpack.c.b16 %v786, %v782
    %v1231 = vpack.c.b16 %v787, %v783
    %v1232 = vpack.c.b16 %v788, %v784
    %v1233 = vpack.c.b16 %v789, %v785
    %v1234 = vpack.c.b16 %v794, %v790
    %v1235 = vpack.c.b16 %v795, %v791
    %v1236 = vpack.c.b16 %v796, %v792
    %v1237 = vpack.c.b16 %v797, %v793
    %v1238 = vpack.c.b16 %v802, %v798
    %v1239 = vpack.c.b16 %v803, %v799
    %v1240 = vpack.c.b16 %v804, %v800
    %v1241 = vpack.c.b16 %v805, %v801
    %v1242 = vpack.c.b16 %v810, %v806
    %v1243 = vpack.c.b16 %v811, %v807
    %v1244 = vpack.c.b16 %v812, %v808
    %v1245 = vpack.c.b16 %v813, %v809
    %v1246 = vpack.c.b16 %v818, %v814
    %v1247 = vpack.c.b16 %v819, %v815
    %v1248 = vpack.c.b16 %v820, %v816
    %v1249 = vpack.c.b16 %v821, %v817
    %v1250 = vpack.c.b16 %v826, %v822
    %v1251 = vpack.c.b16 %v827, %v823
    %v1252 = vpack.c.b16 %v828, %v824
    %v1253 = vpack.c.b16 %v829, %v825
    %v1254 = vpack.c.b16 %v834, %v830
    %v1255 = vpack.c.b16 %v835, %v831
    %v1256 = vpack.c.b16 %v836, %v832
    %v1257 = vpack.c.b16 %v837, %v833
    %v1258 = vpack.c.b16 %v842, %v838
    %v1259 = vpack.c.b16 %v843, %v839
    %v1260 = vpack.c.b16 %v844, %v840
    %v1261 = vpack.c.b16 %v845, %v841
    %v1262 = vpack.c.b16 %v850, %v846
    %v1263 = vpack.c.b16 %v851, %v847
    %v1264 = vpack.c.b16 %v852, %v848
    %v1265 = vpack.c.b16 %v853, %v849
    %v1266 = vpack.c.b16 %v858, %v854
    %v1267 = vpack.c.b16 %v859, %v855
    %v1268 = vpack.c.b16 %v860, %v856
    %v1269 = vpack.c.b16 %v861, %v857
    %v1270 = vpack.c.b16 %v866, %v862
    %v1271 = vpack.c.b16 %v867, %v863
    %v1272 = vpack.c.b16 %v868, %v864
    %v1273 = vpack.c.b16 %v869, %v865
    %v1274 = vpack.c.b16 %v874, %v870
    %v1275 = vpack.c.b16 %v875, %v871
    %v1276 = vpack.c.b16 %v876, %v872
    %v1277 = vpack.c.b16 %v877, %v873
    %v1278 = vpack.c.b16 %v882, %v878
    %v1279 = vpack.c.b16 %v883, %v879
    %v1280 = vpack.c.b16 %v884, %v880
    %v1281 = vpack.c.b16 %v885, %v881
    %v1282 = vpack.c.b16 %v890, %v886
    %v1283 = vpack.c.b16 %v891, %v887
    %v1284 = vpack.c.b16 %v892, %v888
    %v1285 = vpack.c.b16 %v893, %v889
    %v1286 = vpack.c.b16 %v898, %v894
    %v1287 = vpack.c.b16 %v899, %v895
    %v1288 = vpack.c.b16 %v900, %v896
    %v1289 = vpack.c.b16 %v901, %v897
    %v1290 = vpack.c.b16 %v906, %v902
    %v1291 = vpack.c.b16 %v907, %v903
    %v1292 = vpack.c.b16 %v908, %v904
    %v1293 = vpack.c.b16 %v909, %v905
    %v1294 = vpack.c.b16 %v914, %v910
    %v1295 = vpack.c.b16 %v915, %v911
    %v1296 = vpack.c.b16 %v916, %v912
    %v1297 = vpack.c.b16 %v917, %v913
    %v1298 = vpack.c.b16 %v922, %v918
    %v1299 = vpack.c.b16 %v923, %v919
    %v1300 = vpack.c.b16 %v924, %v920
    %v1301 = vpack.c.b16 %v925, %v921
    %v1302 = vpack.c.b16 %v930, %v926
    %v1303 = vpack.c.b16 %v931, %v927
    %v1304 = vpack.c.b16 %v932, %v928
    %v1305 = vpack.c.b16 %v933, %v929
    %v1306 = vpack.c.b16 %v938, %v934
    %v1307 = vpack.c.b16 %v939, %v935
    %v1308 = vpack.c.b16 %v940, %v936
    %v1309 = vpack.c.b16 %v941, %v937
    %v1310 = vpack.c.b16 %v946, %v942
    %v1311 = vpack.c.b16 %v947, %v943
    %v1312 = vpack.c.b16 %v948, %v944
    %v1313 = vpack.c.b16 %v949, %v945
    %v1314 = vpack.c.b16 %v954, %v950
    %v1315 = vpack.c.b16 %v955, %v951
    %v1316 = vpack.c.b16 %v956, %v952
    %v1317 = vpack.c.b16 %v957, %v953
    %v1318 = vpack.c.b16 %v962, %v958
    %v1319 = vpack.c.b16 %v963, %v959
    %v1320 = vpack.c.b16 %v964, %v960
    %v1321 = vpack.c.b16 %v965, %v961
    %v1322 = vpack.c.b16 %v970, %v966
    %v1323 = vpack.c.b16 %v971, %v967
    %v1324 = vpack.c.b16 %v972, %v968
    %v1325 = vpack.c.b16 %v973, %v969
    %v1326 = vpack.c.b16 %v978, %v974
    %v1327 = vpack.c.b16 %v979, %v975
    %v1328 = vpack.c.b16 %v980, %v976
    %v1329 = vpack.c.b16 %v981, %v977
    %v1330 = vpack.c.b16 %v986, %v982
    %v1331 = vpack.c.b16 %v987, %v983
    %v1332 = vpack.c.b16 %v988, %v984
    %v1333 = vpack.c.b16 %v989, %v985
    %v1334 = vpack.c.b16 %v994, %v990
    %v1335 = vpack.c.b16 %v995, %v991
    %v1336 = vpack.c.b16 %v996, %v992
    %v1337 = vpack.c.b16 %v997, %v993
    %v1338 = vpack.c.b16 %v1002, %v998
    %v1339 = vpack.c.b16 %v1003, %v999
    %v1340 = vpack.c.b16 %v1004, %v1000
    %v1341 = vpack.c.b16 %v1005, %v1001
    %v1342 = vpack.c.b16 %v1010, %v1006
    %v1343 = vpack.c.b16 %v1011, %v1007
    %v1344 = vpack.c.b16 %v1012, %v1008
    %v1345 = vpack.c.b16 %v1013, %v1009
    %v1346 = vpack.c.b16 %v1018, %v1014
    %v1347 = vpack.c.b16 %v1019, %v1015
    %v1348 = vpack.c.b16 %v1020, %v1016
    %v1349 = vpack.c.b16 %v1021, %v1017
    %v1350 = vpack.c.b16 %v1026, %v1022
    %v1351 = vpack.c.b16 %v1027, %v1023
    %v1352 = vpack.c.b16 %v1028, %v1024
    %v1353 = vpack.c.b16 %v1029, %v1025
    %v1354 = vpack.c.b16 %v1034, %v1030
    %v1355 = vpack.c.b16 %v1035, %v1031
    %v1356 = vpack.c.b16 %v1036, %v1032
    %v1357 = vpack.c.b16 %v1037, %v1033
    %v1358 = vpack.c.b16 %v1042, %v1038
    %v1359 = vpack.c.b16 %v1043, %v1039
    %v1360 = vpack.c.b16 %v1044, %v1040
    %v1361 = vpack.c.b16 %v1045, %v1041
    %v1362 = vpack.c.b16 %v1050, %v1046
    %v1363 = vpack.c.b16 %v1051, %v1047
    %v1364 = vpack.c.b16 %v1052, %v1048
    %v1365 = vpack.c.b16 %v1053, %v1049
    %v1366 = vpack.c.b16 %v1058, %v1054
    %v1367 = vpack.c.b16 %v1059, %v1055
    %v1368 = vpack.c.b16 %v1060, %v1056
    %v1369 = vpack.c.b16 %v1061, %v1057
    %v1370 = vpack.c.b16 %v1066, %v1062
    %v1371 = vpack.c.b16 %v1067, %v1063
    %v1372 = vpack.c.b16 %v1068, %v1064
    %v1373 = vpack.c.b16 %v1069, %v1065
    %v1374 = vpack.c.b16 %v1074, %v1070
    %v1375 = vpack.c.b16 %v1075, %v1071
    %v1376 = vpack.c.b16 %v1076, %v1072
    %v1377 = vpack.c.b16 %v1077, %v1073
    %v1378 = vpack.c.b16 %v1082, %v1078
    %v1379 = vpack.c.b16 %v1083, %v1079
    %v1380 = vpack.c.b16 %v1084, %v1080
    %v1381 = vpack.c.b16 %v1085, %v1081
    %v1382 = vpack.c.b16 %v1090, %v1086
    %v1383 = vpack.c.b16 %v1091, %v1087
    %v1384 = vpack.c.b16 %v1092, %v1088
    %v1385 = vpack.c.b16 %v1093, %v1089
    %v1386 = vpack.c.b16 %v1098, %v1094
    %v1387 = vpack.c.b16 %v1099, %v1095
    %v1388 = vpack.c.b16 %v1100, %v1096
    %v1389 = vpack.c.b16 %v1101, %v1097
    %v1390 = vpack.c.b16 %v1106, %v1102
    %v1391 = vpack.c.b16 %v1107, %v1103
    %v1392 = vpack.c.b16 %v1108, %v1104
    %v1393 = vpack.c.b16 %v1109, %v1105
    %v1394 = vpack.c.b16 %v1114, %v1110
    %v1395 = vpack.c.b16 %v1115, %v1111
    %v1396 = vpack.c.b16 %v1116, %v1112
    %v1397 = vpack.c.b16 %v1117, %v1113
    %v1398 = vpack.c.b16 %v1122, %v1118
    %v1399 = vpack.c.b16 %v1123, %v1119
    %v1400 = vpack.c.b16 %v1124, %v1120
    %v1401 = vpack.c.b16 %v1125, %v1121
    %v1402 = vpack.c.b16 %v1130, %v1126
    %v1403 = vpack.c.b16 %v1131, %v1127
    %v1404 = vpack.c.b16 %v1132, %v1128
    %v1405 = vpack.c.b16 %v1133, %v1129
    %v1406 = vpack.c.b16 %v1138, %v1134
    %v1407 = vpack.c.b16 %v1139, %v1135
    %v1408 = vpack.c.b16 %v1140, %v1136
    %v1409 = vpack.c.b16 %v1141, %v1137
    %v1410 = vpack.c.b16 %v1146, %v1142
    %v1411 = vpack.c.b16 %v1147, %v1143
    %v1412 = vpack.c.b16 %v1148, %v1144
    %v1413 = vpack.c.b16 %v1149, %v1145
    %v1414 = vpack.c.b16 %v1154, %v1150
    %v1415 = vpack.c.b16 %v1155, %v1151
    %v1416 = vpack.c.b16 %v1156, %v1152
    %v1417 = vpack.c.b16 %v1157, %v1153
    %v1418 = vpack.c.b16 %v1162, %v1158
    %v1419 = vpack.c.b16 %v1163, %v1159
    %v1420 = vpack.c.b16 %v1164, %v1160
    %v1421 = vpack.c.b16 %v1165, %v1161
    %1678 = vmatprep.subr.bf16.mxu0 %v1195
    %1679 = vmatpush1.bf16.msra.mxu0 %v1194
    %1680 = vmatprep.subr.bf16.mxu0 %v1191
    %1681 = vmatpush1.bf16.msra.mxu0 %v1190
    %1682 = vmatprep.subr.bf16.mxu0 %v1187
    %1683 = vmatpush1.bf16.msra.mxu0 %v1186
    %1684 = vmatprep.subr.bf16.mxu0 %v1183
    %1685 = vmatpush1.bf16.msra.mxu0 %v1182
    %1686 = vmatprep.subr.bf16.mxu0 %v1179
    %1687 = vmatpush1.bf16.msra.mxu0 %v1178
    %1688 = vmatprep.subr.bf16.mxu0 %v1175
    %1689 = vmatpush1.bf16.msra.mxu0 %v1174
    %1690 = vmatprep.subr.bf16.mxu0 %v1171
    %1691 = vmatpush1.bf16.msra.mxu0 %v1170
    %1692 = vmatprep.subr.bf16.mxu0 %v1167
    %1693 = vmatpush1.bf16.msra.mxu0 %v1166
    %1694 = vmatprep.subr.bf16.mxu0 %v1227
    %1695 = vmatpush2.bf16.msra.mxu0 %v1226
    %1696 = vmatprep.subr.bf16.mxu0 %v1223
    %1697 = vmatpush2.bf16.msra.mxu0 %v1222
    %1698 = vmatprep.subr.bf16.mxu0 %v1219
    %1699 = vmatpush2.bf16.msra.mxu0 %v1218
    %1700 = vmatprep.subr.bf16.mxu0 %v1215
    %1701 = vmatpush2.bf16.msra.mxu0 %v1214
    %1702 = vmatprep.subr.bf16.mxu0 %v1211
    %1703 = vmatpush2.bf16.msra.mxu0 %v1210
    %1704 = vmatprep.subr.bf16.mxu0 %v1207
    %1705 = vmatpush2.bf16.msra.mxu0 %v1206
    %1706 = vmatprep.subr.bf16.mxu0 %v1203
    %1707 = vmatpush2.bf16.msra.mxu0 %v1202
    %1708 = vmatprep.subr.bf16.mxu0 %v1199
    %1709 = vmatpush2.bf16.msra.mxu0 %v1198
    %1710 = vmatprep.mubr.bf16.mxu0 %v383
    %1711 = vmatmul.mubr.bf16.gmra.mxu0 %v382
    %v1712 = vpop.f32.mrf.mxu0
    %v1713 = vadd.f32 %v341, %v1712
    %v1714 = vpop.f32.mrf.mxu0
    %v1715 = vadd.f32 %v345, %v1714
    %v1716 = vpop.f32.mrf.mxu0
    %v1717 = vadd.f32 %v341, %v1716
    %v1718 = vpop.f32.mrf.mxu0
    %v1719 = vadd.f32 %v345, %v1718
    %1720 = vdwg.mxu0
    %1721 = vmatprep.subr.bf16.mxu0 %v1259
    %1722 = vmatpush1.bf16.msra.mxu0 %v1258
    %1723 = vmatprep.subr.bf16.mxu0 %v1255
    %1724 = vmatpush1.bf16.msra.mxu0 %v1254
    %1725 = vmatprep.subr.bf16.mxu0 %v1251
    %1726 = vmatpush1.bf16.msra.mxu0 %v1250
    %1727 = vmatprep.subr.bf16.mxu0 %v1247
    %1728 = vmatpush1.bf16.msra.mxu0 %v1246
    %1729 = vmatprep.subr.bf16.mxu0 %v1243
    %1730 = vmatpush1.bf16.msra.mxu0 %v1242
    %1731 = vmatprep.subr.bf16.mxu0 %v1239
    %1732 = vmatpush1.bf16.msra.mxu0 %v1238
    %1733 = vmatprep.subr.bf16.mxu0 %v1235
    %1734 = vmatpush1.bf16.msra.mxu0 %v1234
    %1735 = vmatprep.subr.bf16.mxu0 %v1231
    %1736 = vmatpush1.bf16.msra.mxu0 %v1230
    %1737 = vmatprep.subr.bf16.mxu0 %v1291
    %1738 = vmatpush2.bf16.msra.mxu0 %v1290
    %1739 = vmatprep.subr.bf16.mxu0 %v1287
    %1740 = vmatpush2.bf16.msra.mxu0 %v1286
    %1741 = vmatprep.subr.bf16.mxu0 %v1283
    %1742 = vmatpush2.bf16.msra.mxu0 %v1282
    %1743 = vmatprep.subr.bf16.mxu0 %v1279
    %1744 = vmatpush2.bf16.msra.mxu0 %v1278
    %1745 = vmatprep.subr.bf16.mxu0 %v1275
    %1746 = vmatpush2.bf16.msra.mxu0 %v1274
    %1747 = vmatprep.subr.bf16.mxu0 %v1271
    %1748 = vmatpush2.bf16.msra.mxu0 %v1270
    %1749 = vmatprep.subr.bf16.mxu0 %v1267
    %1750 = vmatpush2.bf16.msra.mxu0 %v1266
    %1751 = vmatprep.subr.bf16.mxu0 %v1263
    %1752 = vmatpush2.bf16.msra.mxu0 %v1262
    %1753 = vmatprep.mubr.bf16.mxu0 %v385
    %1754 = vmatmul.mubr.bf16.gmra.mxu0 %v384
    %v1755 = vpop.f32.mrf.mxu0
    %v1756 = vadd.f32 %v1713, %v1755
    %v1757 = vpop.f32.mrf.mxu0
    %v1758 = vadd.f32 %v1715, %v1757
    %v1759 = vpop.f32.mrf.mxu0
    %v1760 = vadd.f32 %v1717, %v1759
    %v1761 = vpop.f32.mrf.mxu0
    %v1762 = vadd.f32 %v1719, %v1761
    %1763 = vdwg.mxu0
    %1764 = vmatprep.subr.bf16.mxu0 %v1323
    %1765 = vmatpush1.bf16.msra.mxu0 %v1322
    %1766 = vmatprep.subr.bf16.mxu0 %v1319
    %1767 = vmatpush1.bf16.msra.mxu0 %v1318
    %1768 = vmatprep.subr.bf16.mxu0 %v1315
    %1769 = vmatpush1.bf16.msra.mxu0 %v1314
    %1770 = vmatprep.subr.bf16.mxu0 %v1311
    %1771 = vmatpush1.bf16.msra.mxu0 %v1310
    %1772 = vmatprep.subr.bf16.mxu0 %v1307
    %1773 = vmatpush1.bf16.msra.mxu0 %v1306
    %1774 = vmatprep.subr.bf16.mxu0 %v1303
    %1775 = vmatpush1.bf16.msra.mxu0 %v1302
    %1776 = vmatprep.subr.bf16.mxu0 %v1299
    %1777 = vmatpush1.bf16.msra.mxu0 %v1298
    %1778 = vmatprep.subr.bf16.mxu0 %v1295
    %1779 = vmatpush1.bf16.msra.mxu0 %v1294
    %1780 = vmatprep.subr.bf16.mxu0 %v1355
    %1781 = vmatpush2.bf16.msra.mxu0 %v1354
    %1782 = vmatprep.subr.bf16.mxu0 %v1351
    %1783 = vmatpush2.bf16.msra.mxu0 %v1350
    %1784 = vmatprep.subr.bf16.mxu0 %v1347
    %1785 = vmatpush2.bf16.msra.mxu0 %v1346
    %1786 = vmatprep.subr.bf16.mxu0 %v1343
    %1787 = vmatpush2.bf16.msra.mxu0 %v1342
    %1788 = vmatprep.subr.bf16.mxu0 %v1339
    %1789 = vmatpush2.bf16.msra.mxu0 %v1338
    %1790 = vmatprep.subr.bf16.mxu0 %v1335
    %1791 = vmatpush2.bf16.msra.mxu0 %v1334
    %1792 = vmatprep.subr.bf16.mxu0 %v1331
    %1793 = vmatpush2.bf16.msra.mxu0 %v1330
    %1794 = vmatprep.subr.bf16.mxu0 %v1327
    %1795 = vmatpush2.bf16.msra.mxu0 %v1326
    %1796 = vmatprep.mubr.bf16.mxu0 %v387
    %1797 = vmatmul.mubr.bf16.gmra.mxu0 %v386
    %v1798 = vpop.f32.mrf.mxu0
    %v1799 = vadd.f32 %v1756, %v1798
    %v1800 = vpop.f32.mrf.mxu0
    %v1801 = vadd.f32 %v1758, %v1800
    %v1802 = vpop.f32.mrf.mxu0
    %v1803 = vadd.f32 %v1760, %v1802
    %v1804 = vpop.f32.mrf.mxu0
    %v1805 = vadd.f32 %v1762, %v1804
    %1806 = vdwg.mxu0
    %1807 = vmatprep.subr.bf16.mxu0 %v1387
    %1808 = vmatpush1.bf16.msra.mxu0 %v1386
    %1809 = vmatprep.subr.bf16.mxu0 %v1383
    %1810 = vmatpush1.bf16.msra.mxu0 %v1382
    %1811 = vmatprep.subr.bf16.mxu0 %v1379
    %1812 = vmatpush1.bf16.msra.mxu0 %v1378
    %1813 = vmatprep.subr.bf16.mxu0 %v1375
    %1814 = vmatpush1.bf16.msra.mxu0 %v1374
    %1815 = vmatprep.subr.bf16.mxu0 %v1371
    %1816 = vmatpush1.bf16.msra.mxu0 %v1370
    %1817 = vmatprep.subr.bf16.mxu0 %v1367
    %1818 = vmatpush1.bf16.msra.mxu0 %v1366
    %1819 = vmatprep.subr.bf16.mxu0 %v1363
    %1820 = vmatpush1.bf16.msra.mxu0 %v1362
    %1821 = vmatprep.subr.bf16.mxu0 %v1359
    %1822 = vmatpush1.bf16.msra.mxu0 %v1358
    %1823 = vmatprep.subr.bf16.mxu0 %v1419
    %1824 = vmatpush2.bf16.msra.mxu0 %v1418
    %1825 = vmatprep.subr.bf16.mxu0 %v1415
    %1826 = vmatpush2.bf16.msra.mxu0 %v1414
    %1827 = vmatprep.subr.bf16.mxu0 %v1411
    %1828 = vmatpush2.bf16.msra.mxu0 %v1410
    %1829 = vmatprep.subr.bf16.mxu0 %v1407
    %1830 = vmatpush2.bf16.msra.mxu0 %v1406
    %1831 = vmatprep.subr.bf16.mxu0 %v1403
    %1832 = vmatpush2.bf16.msra.mxu0 %v1402
    %1833 = vmatprep.subr.bf16.mxu0 %v1399
    %1834 = vmatpush2.bf16.msra.mxu0 %v1398
    %1835 = vmatprep.subr.bf16.mxu0 %v1395
    %1836 = vmatpush2.bf16.msra.mxu0 %v1394
    %1837 = vmatprep.subr.bf16.mxu0 %v1391
    %1838 = vmatpush2.bf16.msra.mxu0 %v1390
    %1839 = vmatprep.mubr.bf16.mxu0 %v389
    %1840 = vmatmul.mubr.bf16.gmra.mxu0 %v388
    %v1841 = vpop.f32.mrf.mxu0
    %v1842 = vadd.f32 %v1799, %v1841
    %v1843 = vpop.f32.mrf.mxu0
    %v1844 = vadd.f32 %v1801, %v1843
    %v1845 = vpop.f32.mrf.mxu0
    %v1846 = vadd.f32 %v1803, %v1845
    %v1847 = vpop.f32.mrf.mxu0
    %v1848 = vadd.f32 %v1805, %v1847
    %1849 = vdwg.mxu0
    %1850 = vmatprep.subr.bf16.mxu0 %v1197
    %1851 = vmatpush1.bf16.msra.mxu0 %v1196
    %1852 = vmatprep.subr.bf16.mxu0 %v1193
    %1853 = vmatpush1.bf16.msra.mxu0 %v1192
    %1854 = vmatprep.subr.bf16.mxu0 %v1189
    %1855 = vmatpush1.bf16.msra.mxu0 %v1188
    %1856 = vmatprep.subr.bf16.mxu0 %v1185
    %1857 = vmatpush1.bf16.msra.mxu0 %v1184
    %1858 = vmatprep.subr.bf16.mxu0 %v1181
    %1859 = vmatpush1.bf16.msra.mxu0 %v1180
    %1860 = vmatprep.subr.bf16.mxu0 %v1177
    %1861 = vmatpush1.bf16.msra.mxu0 %v1176
    %1862 = vmatprep.subr.bf16.mxu0 %v1173
    %1863 = vmatpush1.bf16.msra.mxu0 %v1172
    %1864 = vmatprep.subr.bf16.mxu0 %v1169
    %1865 = vmatpush1.bf16.msra.mxu0 %v1168
    %1866 = vmatprep.subr.bf16.mxu0 %v1229
    %1867 = vmatpush2.bf16.msra.mxu0 %v1228
    %1868 = vmatprep.subr.bf16.mxu0 %v1225
    %1869 = vmatpush2.bf16.msra.mxu0 %v1224
    %1870 = vmatprep.subr.bf16.mxu0 %v1221
    %1871 = vmatpush2.bf16.msra.mxu0 %v1220
    %1872 = vmatprep.subr.bf16.mxu0 %v1217
    %1873 = vmatpush2.bf16.msra.mxu0 %v1216
    %1874 = vmatprep.subr.bf16.mxu0 %v1213
    %1875 = vmatpush2.bf16.msra.mxu0 %v1212
    %1876 = vmatprep.subr.bf16.mxu0 %v1209
    %1877 = vmatpush2.bf16.msra.mxu0 %v1208
    %1878 = vmatprep.subr.bf16.mxu0 %v1205
    %1879 = vmatpush2.bf16.msra.mxu0 %v1204
    %1880 = vmatprep.subr.bf16.mxu0 %v1201
    %1881 = vmatpush2.bf16.msra.mxu0 %v1200
    %1882 = vmatprep.mubr.bf16.mxu0 %v383
    %1883 = vmatmul.mubr.bf16.gmra.mxu0 %v382
    %v1884 = vpop.f32.mrf.mxu0
    %v1885 = vadd.f32 %v349, %v1884
    %v1886 = vpop.f32.mrf.mxu0
    %v1887 = vadd.f32 %v353, %v1886
    %v1888 = vpop.f32.mrf.mxu0
    %v1889 = vadd.f32 %v349, %v1888
    %v1890 = vpop.f32.mrf.mxu0
    %v1891 = vadd.f32 %v353, %v1890
    %1892 = vdwg.mxu0
    %1893 = vmatprep.subr.bf16.mxu0 %v1261
    %1894 = vmatpush1.bf16.msra.mxu0 %v1260
    %1895 = vmatprep.subr.bf16.mxu0 %v1257
    %1896 = vmatpush1.bf16.msra.mxu0 %v1256
    %1897 = vmatprep.subr.bf16.mxu0 %v1253
    %1898 = vmatpush1.bf16.msra.mxu0 %v1252
    %1899 = vmatprep.subr.bf16.mxu0 %v1249
    %1900 = vmatpush1.bf16.msra.mxu0 %v1248
    %1901 = vmatprep.subr.bf16.mxu0 %v1245
    %1902 = vmatpush1.bf16.msra.mxu0 %v1244
    %1903 = vmatprep.subr.bf16.mxu0 %v1241
    %1904 = vmatpush1.bf16.msra.mxu0 %v1240
    %1905 = vmatprep.subr.bf16.mxu0 %v1237
    %1906 = vmatpush1.bf16.msra.mxu0 %v1236
    %1907 = vmatprep.subr.bf16.mxu0 %v1233
    %1908 = vmatpush1.bf16.msra.mxu0 %v1232
    %1909 = vmatprep.subr.bf16.mxu0 %v1293
    %1910 = vmatpush2.bf16.msra.mxu0 %v1292
    %1911 = vmatprep.subr.bf16.mxu0 %v1289
    %1912 = vmatpush2.bf16.msra.mxu0 %v1288
    %1913 = vmatprep.subr.bf16.mxu0 %v1285
    %1914 = vmatpush2.bf16.msra.mxu0 %v1284
    %1915 = vmatprep.subr.bf16.mxu0 %v1281
    %1916 = vmatpush2.bf16.msra.mxu0 %v1280
    %1917 = vmatprep.subr.bf16.mxu0 %v1277
    %1918 = vmatpush2.bf16.msra.mxu0 %v1276
    %1919 = vmatprep.subr.bf16.mxu0 %v1273
    %1920 = vmatpush2.bf16.msra.mxu0 %v1272
    %1921 = vmatprep.subr.bf16.mxu0 %v1269
    %1922 = vmatpush2.bf16.msra.mxu0 %v1268
    %1923 = vmatprep.subr.bf16.mxu0 %v1265
    %1924 = vmatpush2.bf16.msra.mxu0 %v1264
    %1925 = vmatprep.mubr.bf16.mxu0 %v385
    %1926 = vmatmul.mubr.bf16.gmra.mxu0 %v384
    %v1927 = vpop.f32.mrf.mxu0
    %v1928 = vadd.f32 %v1885, %v1927
    %v1929 = vpop.f32.mrf.mxu0
    %v1930 = vadd.f32 %v1887, %v1929
    %v1931 = vpop.f32.mrf.mxu0
    %v1932 = vadd.f32 %v1889, %v1931
    %v1933 = vpop.f32.mrf.mxu0
    %v1934 = vadd.f32 %v1891, %v1933
    %1935 = vdwg.mxu0
    %1936 = vmatprep.subr.bf16.mxu0 %v1325
    %1937 = vmatpush1.bf16.msra.mxu0 %v1324
    %1938 = vmatprep.subr.bf16.mxu0 %v1321
    %1939 = vmatpush1.bf16.msra.mxu0 %v1320
    %1940 = vmatprep.subr.bf16.mxu0 %v1317
    %1941 = vmatpush1.bf16.msra.mxu0 %v1316
    %1942 = vmatprep.subr.bf16.mxu0 %v1313
    %1943 = vmatpush1.bf16.msra.mxu0 %v1312
    %1944 = vmatprep.subr.bf16.mxu0 %v1309
    %1945 = vmatpush1.bf16.msra.mxu0 %v1308
    %1946 = vmatprep.subr.bf16.mxu0 %v1305
    %1947 = vmatpush1.bf16.msra.mxu0 %v1304
    %1948 = vmatprep.subr.bf16.mxu0 %v1301
    %1949 = vmatpush1.bf16.msra.mxu0 %v1300
    %1950 = vmatprep.subr.bf16.mxu0 %v1297
    %1951 = vmatpush1.bf16.msra.mxu0 %v1296
    %1952 = vmatprep.subr.bf16.mxu0 %v1357
    %1953 = vmatpush2.bf16.msra.mxu0 %v1356
    %1954 = vmatprep.subr.bf16.mxu0 %v1353
    %1955 = vmatpush2.bf16.msra.mxu0 %v1352
    %1956 = vmatprep.subr.bf16.mxu0 %v1349
    %1957 = vmatpush2.bf16.msra.mxu0 %v1348
    %1958 = vmatprep.subr.bf16.mxu0 %v1345
    %1959 = vmatpush2.bf16.msra.mxu0 %v1344
    %1960 = vmatprep.subr.bf16.mxu0 %v1341
    %1961 = vmatpush2.bf16.msra.mxu0 %v1340
    %1962 = vmatprep.subr.bf16.mxu0 %v1337
    %1963 = vmatpush2.bf16.msra.mxu0 %v1336
    %1964 = vmatprep.subr.bf16.mxu0 %v1333
    %1965 = vmatpush2.bf16.msra.mxu0 %v1332
    %1966 = vmatprep.subr.bf16.mxu0 %v1329
    %1967 = vmatpush2.bf16.msra.mxu0 %v1328
    %1968 = vmatprep.mubr.bf16.mxu0 %v387
    %1969 = vmatmul.mubr.bf16.gmra.mxu0 %v386
    %v1970 = vpop.f32.mrf.mxu0
    %v1971 = vadd.f32 %v1928, %v1970
    %v1972 = vpop.f32.mrf.mxu0
    %v1973 = vadd.f32 %v1930, %v1972
    %v1974 = vpop.f32.mrf.mxu0
    %v1975 = vadd.f32 %v1932, %v1974
    %v1976 = vpop.f32.mrf.mxu0
    %v1977 = vadd.f32 %v1934, %v1976
    %1978 = vdwg.mxu0
    %1979 = vmatprep.subr.bf16.mxu0 %v1389
    %1980 = vmatpush1.bf16.msra.mxu0 %v1388
    %1981 = vmatprep.subr.bf16.mxu0 %v1385
    %1982 = vmatpush1.bf16.msra.mxu0 %v1384
    %1983 = vmatprep.subr.bf16.mxu0 %v1381
    %1984 = vmatpush1.bf16.msra.mxu0 %v1380
    %1985 = vmatprep.subr.bf16.mxu0 %v1377
    %1986 = vmatpush1.bf16.msra.mxu0 %v1376
    %1987 = vmatprep.subr.bf16.mxu0 %v1373
    %1988 = vmatpush1.bf16.msra.mxu0 %v1372
    %1989 = vmatprep.subr.bf16.mxu0 %v1369
    %1990 = vmatpush1.bf16.msra.mxu0 %v1368
    %1991 = vmatprep.subr.bf16.mxu0 %v1365
    %1992 = vmatpush1.bf16.msra.mxu0 %v1364
    %1993 = vmatprep.subr.bf16.mxu0 %v1361
    %1994 = vmatpush1.bf16.msra.mxu0 %v1360
    %1995 = vmatprep.subr.bf16.mxu0 %v1421
    %1996 = vmatpush2.bf16.msra.mxu0 %v1420
    %1997 = vmatprep.subr.bf16.mxu0 %v1417
    %1998 = vmatpush2.bf16.msra.mxu0 %v1416
    %1999 = vmatprep.subr.bf16.mxu0 %v1413
    %2000 = vmatpush2.bf16.msra.mxu0 %v1412
    %2001 = vmatprep.subr.bf16.mxu0 %v1409
    %2002 = vmatpush2.bf16.msra.mxu0 %v1408
    %2003 = vmatprep.subr.bf16.mxu0 %v1405
    %2004 = vmatpush2.bf16.msra.mxu0 %v1404
    %2005 = vmatprep.subr.bf16.mxu0 %v1401
    %2006 = vmatpush2.bf16.msra.mxu0 %v1400
    %2007 = vmatprep.subr.bf16.mxu0 %v1397
    %2008 = vmatpush2.bf16.msra.mxu0 %v1396
    %2009 = vmatprep.subr.bf16.mxu0 %v1393
    %2010 = vmatpush2.bf16.msra.mxu0 %v1392
    %2011 = vmatprep.mubr.bf16.mxu0 %v389
    %2012 = vmatmul.mubr.bf16.gmra.mxu0 %v388
    %v2013 = vpop.f32.mrf.mxu0
    %v2014 = vadd.f32 %v1971, %v2013
    %v2015 = vpop.f32.mrf.mxu0
    %v2016 = vadd.f32 %v1973, %v2015
    %v2017 = vpop.f32.mrf.mxu0
    %v2018 = vadd.f32 %v1975, %v2017
    %v2019 = vpop.f32.mrf.mxu0
    %v2020 = vadd.f32 %v1977, %v2019
    %2021 = vdwg.mxu0
    %2022 = vst [vmem:[#allocation2] sm:$0xff] %v1842
    %2023 = vst [vmem:[#allocation2 + $0x8] sm:$0xff] %v1844
    %2024 = vst [vmem:[#allocation2 + $0x10] sm:$0xff] %v2014
    %2025 = vst [vmem:[#allocation2 + $0x18] sm:$0xff] %v2016
    %2026 = vst [vmem:[#allocation2 + $0x20] sm:$0xff] %v1846
    %2027 = vst [vmem:[#allocation2 + $0x28] sm:$0xff] %v1848
    %2028 = vst [vmem:[#allocation2 + $0x30] sm:$0xff] %v2018
    %2029 = vst [vmem:[#allocation2 + $0x38] sm:$0xff] %v2020
    %v2030 = vld [vmem:[%s5] sm:$0xf]
    %v2032 = vlaneseq
    %v2033 = vshrl.u32 %v2032, 7
    %v2034 = vsub.s32 0, %v2033
    %v2035 = vrot.slane %v2030, %v2034
    %v2036 = vlaneseq
    %v2037 = vshrl.u32 %v2036, 7
    %v2038 = vsub.s32 1, %v2037
    %v2039 = vrot.slane %v2030, %v2038
    %v2040 = vlaneseq
    %v2041 = vshrl.u32 %v2040, 7
    %v2042 = vsub.s32 2, %v2041
    %v2043 = vrot.slane %v2030, %v2042
    %v2044 = vlaneseq
    %v2045 = vshrl.u32 %v2044, 7
    %v2046 = vsub.s32 3, %v2045
    %v2047 = vrot.slane %v2030, %v2046
    %v2052 = vld [vmem:[#allocation2] sm:$0x3]
    %v2053 = vld [vmem:[#allocation2 + $0x8] sm:$0x3]
    %v2054 = vld [vmem:[#allocation2 + $0x10] sm:$0x3]
    %v2055 = vld [vmem:[#allocation2 + $0x18] sm:$0x3]
    %v2056 = vld [vmem:[#allocation6] sm:$0xff]
    %v2057 = vld [vmem:[#allocation6 + $0x8] sm:$0xff]
    %v2058 = vld [vmem:[#allocation6 + $0x10] sm:$0xff]
    %v2059 = vld [vmem:[#allocation6 + $0x18] sm:$0xff]
    %v2060 = vld [vmem:[#allocation6 + $0x20] sm:$0xff]
    %v2061 = vld [vmem:[#allocation6 + $0x28] sm:$0xff]
    %v2062 = vld [vmem:[#allocation6 + $0x30] sm:$0xff]
    %v2063 = vld [vmem:[#allocation6 + $0x38] sm:$0xff]
    %v2064 = vld [vmem:[#allocation6 + $0x40] sm:$0xff]
    %v2065 = vld [vmem:[#allocation6 + $0x48] sm:$0xff]
    %v2066 = vld [vmem:[#allocation6 + $0x50] sm:$0xff]
    %v2067 = vld [vmem:[#allocation6 + $0x58] sm:$0xff]
    %v2068 = vld [vmem:[#allocation6 + $0x60] sm:$0xff]
    %v2069 = vld [vmem:[#allocation6 + $0x68] sm:$0xff]
    %v2070 = vld [vmem:[#allocation6 + $0x70] sm:$0xff]
    %v2071 = vld [vmem:[#allocation6 + $0x78] sm:$0xff]
    %v2072 = vld [vmem:[#allocation6 + $0x80] sm:$0xff]
    %v2073 = vld [vmem:[#allocation6 + $0x88] sm:$0xff]
    %v2074 = vld [vmem:[#allocation6 + $0x90] sm:$0xff]
    %v2075 = vld [vmem:[#allocation6 + $0x98] sm:$0xff]
    %v2076 = vld [vmem:[#allocation6 + $0xa0] sm:$0xff]
    %v2077 = vld [vmem:[#allocation6 + $0xa8] sm:$0xff]
    %v2078 = vld [vmem:[#allocation6 + $0xb0] sm:$0xff]
    %v2079 = vld [vmem:[#allocation6 + $0xb8] sm:$0xff]
    %v2080 = vld [vmem:[#allocation6 + $0xc0] sm:$0xff]
    %v2081 = vld [vmem:[#allocation6 + $0xc8] sm:$0xff]
    %v2082 = vld [vmem:[#allocation6 + $0xd0] sm:$0xff]
    %v2083 = vld [vmem:[#allocation6 + $0xd8] sm:$0xff]
    %v2084 = vld [vmem:[#allocation6 + $0xe0] sm:$0xff]
    %v2085 = vld [vmem:[#allocation6 + $0xe8] sm:$0xff]
    %v2086 = vld [vmem:[#allocation6 + $0xf0] sm:$0xff]
    %v2087 = vld [vmem:[#allocation6 + $0xf8] sm:$0xff]
    %v2120 = vunpack.c.l.b16 %v2056
    %v2121 = vunpack.c.h.b16 %v2056
    %v2122 = vunpack.c.l.b16 %v2057
    %v2123 = vunpack.c.h.b16 %v2057
    %v2124 = vunpack.c.l.b16 %v2058
    %v2125 = vunpack.c.h.b16 %v2058
    %v2126 = vunpack.c.l.b16 %v2059
    %v2127 = vunpack.c.h.b16 %v2059
    %v2128 = vunpack.c.l.b16 %v2060
    %v2129 = vunpack.c.h.b16 %v2060
    %v2130 = vunpack.c.l.b16 %v2061
    %v2131 = vunpack.c.h.b16 %v2061
    %v2132 = vunpack.c.l.b16 %v2062
    %v2133 = vunpack.c.h.b16 %v2062
    %v2134 = vunpack.c.l.b16 %v2063
    %v2135 = vunpack.c.h.b16 %v2063
    %v2136 = vunpack.c.l.b16 %v2064
    %v2137 = vunpack.c.h.b16 %v2064
    %v2138 = vunpack.c.l.b16 %v2065
    %v2139 = vunpack.c.h.b16 %v2065
    %v2140 = vunpack.c.l.b16 %v2066
    %v2141 = vunpack.c.h.b16 %v2066
    %v2142 = vunpack.c.l.b16 %v2067
    %v2143 = vunpack.c.h.b16 %v2067
    %v2144 = vunpack.c.l.b16 %v2068
    %v2145 = vunpack.c.h.b16 %v2068
    %v2146 = vunpack.c.l.b16 %v2069
    %v2147 = vunpack.c.h.b16 %v2069
    %v2148 = vunpack.c.l.b16 %v2070
    %v2149 = vunpack.c.h.b16 %v2070
    %v2150 = vunpack.c.l.b16 %v2071
    %v2151 = vunpack.c.h.b16 %v2071
    %v2152 = vunpack.c.l.b16 %v2072
    %v2153 = vunpack.c.h.b16 %v2072
    %v2154 = vunpack.c.l.b16 %v2073
    %v2155 = vunpack.c.h.b16 %v2073
    %v2156 = vunpack.c.l.b16 %v2074
    %v2157 = vunpack.c.h.b16 %v2074
    %v2158 = vunpack.c.l.b16 %v2075
    %v2159 = vunpack.c.h.b16 %v2075
    %v2160 = vunpack.c.l.b16 %v2076
    %v2161 = vunpack.c.h.b16 %v2076
    %v2162 = vunpack.c.l.b16 %v2077
    %v2163 = vunpack.c.h.b16 %v2077
    %v2164 = vunpack.c.l.b16 %v2078
    %v2165 = vunpack.c.h.b16 %v2078
    %v2166 = vunpack.c.l.b16 %v2079
    %v2167 = vunpack.c.h.b16 %v2079
    %v2168 = vunpack.c.l.b16 %v2080
    %v2169 = vunpack.c.h.b16 %v2080
    %v2170 = vunpack.c.l.b16 %v2081
    %v2171 = vunpack.c.h.b16 %v2081
    %v2172 = vunpack.c.l.b16 %v2082
    %v2173 = vunpack.c.h.b16 %v2082
    %v2174 = vunpack.c.l.b16 %v2083
    %v2175 = vunpack.c.h.b16 %v2083
    %v2176 = vunpack.c.l.b16 %v2084
    %v2177 = vunpack.c.h.b16 %v2084
    %v2178 = vunpack.c.l.b16 %v2085
    %v2179 = vunpack.c.h.b16 %v2085
    %v2180 = vunpack.c.l.b16 %v2086
    %v2181 = vunpack.c.h.b16 %v2086
    %v2182 = vunpack.c.l.b16 %v2087
    %v2183 = vunpack.c.h.b16 %v2087
    %v2184 = vpack.c.b16 %v2124, %v2120
    %v2185 = vpack.c.b16 %v2125, %v2121
    %v2186 = vpack.c.b16 %v2126, %v2122
    %v2187 = vpack.c.b16 %v2127, %v2123
    %v2188 = vpack.c.b16 %v2132, %v2128
    %v2189 = vpack.c.b16 %v2133, %v2129
    %v2190 = vpack.c.b16 %v2134, %v2130
    %v2191 = vpack.c.b16 %v2135, %v2131
    %v2192 = vpack.c.b16 %v2140, %v2136
    %v2193 = vpack.c.b16 %v2141, %v2137
    %v2194 = vpack.c.b16 %v2142, %v2138
    %v2195 = vpack.c.b16 %v2143, %v2139
    %v2196 = vpack.c.b16 %v2148, %v2144
    %v2197 = vpack.c.b16 %v2149, %v2145
    %v2198 = vpack.c.b16 %v2150, %v2146
    %v2199 = vpack.c.b16 %v2151, %v2147
    %v2200 = vpack.c.b16 %v2156, %v2152
    %v2201 = vpack.c.b16 %v2157, %v2153
    %v2202 = vpack.c.b16 %v2158, %v2154
    %v2203 = vpack.c.b16 %v2159, %v2155
    %v2204 = vpack.c.b16 %v2164, %v2160
    %v2205 = vpack.c.b16 %v2165, %v2161
    %v2206 = vpack.c.b16 %v2166, %v2162
    %v2207 = vpack.c.b16 %v2167, %v2163
    %v2208 = vpack.c.b16 %v2172, %v2168
    %v2209 = vpack.c.b16 %v2173, %v2169
    %v2210 = vpack.c.b16 %v2174, %v2170
    %v2211 = vpack.c.b16 %v2175, %v2171
    %v2212 = vpack.c.b16 %v2180, %v2176
    %v2213 = vpack.c.b16 %v2181, %v2177
    %v2214 = vpack.c.b16 %v2182, %v2178
    %v2215 = vpack.c.b16 %v2183, %v2179
    %2248 = vmatprep.subr.bf16.mxu0 %v2213
    %2249 = vmatpush1.bf16.msra.mxu0 %v2212
    %2250 = vmatprep.subr.bf16.mxu0 %v2209
    %2251 = vmatpush1.bf16.msra.mxu0 %v2208
    %2252 = vmatprep.subr.bf16.mxu0 %v2205
    %2253 = vmatpush1.bf16.msra.mxu0 %v2204
    %2254 = vmatprep.subr.bf16.mxu0 %v2201
    %2255 = vmatpush1.bf16.msra.mxu0 %v2200
    %2256 = vmatprep.subr.bf16.mxu0 %v2197
    %2257 = vmatpush1.bf16.msra.mxu0 %v2196
    %2258 = vmatprep.subr.bf16.mxu0 %v2193
    %2259 = vmatpush1.bf16.msra.mxu0 %v2192
    %2260 = vmatprep.subr.bf16.mxu0 %v2189
    %2261 = vmatpush1.bf16.msra.mxu0 %v2188
    %2262 = vmatprep.subr.bf16.mxu0 %v2185
    %2263 = vmatpush1.bf16.msra.mxu0 %v2184
    %2264 = vmatprep.subr.bf16.mxu0 0
    %2265 = vmatpush2.bf16.msra.mxu0 0
    %2266 = vmatprep.subr.bf16.mxu0 0
    %2267 = vmatpush2.bf16.msra.mxu0 0
    %2268 = vmatprep.subr.bf16.mxu0 0
    %2269 = vmatpush2.bf16.msra.mxu0 0
    %2270 = vmatprep.subr.bf16.mxu0 0
    %2271 = vmatpush2.bf16.msra.mxu0 0
    %2272 = vmatprep.subr.bf16.mxu0 0
    %2273 = vmatpush2.bf16.msra.mxu0 0
    %2274 = vmatprep.subr.bf16.mxu0 0
    %2275 = vmatpush2.bf16.msra.mxu0 0
    %2276 = vmatprep.subr.bf16.mxu0 0
    %2277 = vmatpush2.bf16.msra.mxu0 0
    %2278 = vmatprep.subr.bf16.mxu0 0
    %2279 = vmatpush2.bf16.msra.mxu0 0
    %2280 = vmatprep.mubr.bf16.mxu0 0
    %2281 = vmatmul.mubr.bf16.gmra.mxu0 0
    %v2282 = vpop.f32.mrf.mxu0
    %v2283 = vadd.f32 0.0, %v2282
    %v2284 = vpop.f32.mrf.mxu0
    %v2285 = vadd.f32 0.0, %v2284
    %v2286 = vpop.f32.mrf.mxu0
    %v2287 = vpop.f32.mrf.mxu0
    %2288 = vdwg.mxu0
    %2289 = vmatprep.subr.bf16.mxu0 %v2215
    %2290 = vmatpush1.bf16.msra.mxu0 %v2214
    %2291 = vmatprep.subr.bf16.mxu0 %v2211
    %2292 = vmatpush1.bf16.msra.mxu0 %v2210
    %2293 = vmatprep.subr.bf16.mxu0 %v2207
    %2294 = vmatpush1.bf16.msra.mxu0 %v2206
    %2295 = vmatprep.subr.bf16.mxu0 %v2203
    %2296 = vmatpush1.bf16.msra.mxu0 %v2202
    %2297 = vmatprep.subr.bf16.mxu0 %v2199
    %2298 = vmatpush1.bf16.msra.mxu0 %v2198
    %2299 = vmatprep.subr.bf16.mxu0 %v2195
    %2300 = vmatpush1.bf16.msra.mxu0 %v2194
    %2301 = vmatprep.subr.bf16.mxu0 %v2191
    %2302 = vmatpush1.bf16.msra.mxu0 %v2190
    %2303 = vmatprep.subr.bf16.mxu0 %v2187
    %2304 = vmatpush1.bf16.msra.mxu0 %v2186
    %2305 = vmatprep.subr.bf16.mxu0 0
    %2306 = vmatpush2.bf16.msra.mxu0 0
    %2307 = vmatprep.subr.bf16.mxu0 0
    %2308 = vmatpush2.bf16.msra.mxu0 0
    %2309 = vmatprep.subr.bf16.mxu0 0
    %2310 = vmatpush2.bf16.msra.mxu0 0
    %2311 = vmatprep.subr.bf16.mxu0 0
    %2312 = vmatpush2.bf16.msra.mxu0 0
    %2313 = vmatprep.subr.bf16.mxu0 0
    %2314 = vmatpush2.bf16.msra.mxu0 0
    %2315 = vmatprep.subr.bf16.mxu0 0
    %2316 = vmatpush2.bf16.msra.mxu0 0
    %2317 = vmatprep.subr.bf16.mxu0 0
    %2318 = vmatpush2.bf16.msra.mxu0 0
    %2319 = vmatprep.subr.bf16.mxu0 0
    %2320 = vmatpush2.bf16.msra.mxu0 0
    %2321 = vmatprep.mubr.bf16.mxu0 0
    %2322 = vmatmul.mubr.bf16.gmra.mxu0 0
    %v2323 = vpop.f32.mrf.mxu0
    %v2324 = vadd.f32 0.0, %v2323
    %v2325 = vpop.f32.mrf.mxu0
    %v2326 = vadd.f32 0.0, %v2325
    %v2327 = vpop.f32.mrf.mxu0
    %v2328 = vpop.f32.mrf.mxu0
    %2329 = vdwg.mxu0
    %v2330 = vadd.f32 %v2052, %v2283
    %v2331 = vadd.f32 %v2053, %v2285
    %v2332 = vadd.f32 %v2054, %v2324
    %v2333 = vadd.f32 %v2055, %v2326
    %v2334 = vxor.u32 %v2330, 2147483648
    %v2335 = vmul.f32 %v2334, 1.442695
    %v2336 = vpow.pop %v2335
    %v2337 = vadd.f32 %v2336, 1.0
    %v2338 = vrcp.pop %v2337
    %v2339 = vmul.f32 1.0, %v2338
    %v2340 = vxor.u32 %v2331, 2147483648
    %v2341 = vmul.f32 %v2340, 1.442695
    %v2342 = vpow.pop %v2341
    %v2343 = vadd.f32 %v2342, 1.0
    %v2344 = vrcp.pop %v2343
    %v2345 = vmul.f32 1.0, %v2344
    %v2346 = vtanh.pop %v2332
    %v2347 = vxor.u32 %v2333, 2147483648
    %v2348 = vmul.f32 %v2347, 1.442695
    %v2349 = vpow.pop %v2348
    %v2350 = vadd.f32 %v2349, 1.0
    %v2351 = vrcp.pop %v2350
    %v2352 = vmul.f32 1.0, %v2351
    %v2353 = vmul.f32 %v2345, 0.0
    %v2354 = vmul.f32 %v2339, %v2346
    %v2355 = vadd.f32 %v2353, %v2354
    %v2356 = vtanh.pop %v2355
    %v2357 = vmul.f32 %v2352, %v2356
    %v2358 = vpack.c.bf16 %v2357, %v2357
    %v2359 = vpack.c.bf16 0.0, 0.0
    %v2360 = vld [vmem:[%s4] sm:$0xff]
    %v2361 = vld [vmem:[%s4 + $0x8] sm:$0xff]
    %v2362 = vld [vmem:[%s4 + $0x10] sm:$0xff]
    %v2363 = vld [vmem:[%s4 + $0x18] sm:$0xff]
    %v2364 = vld [vmem:[%s4 + $0x20] sm:$0xff]
    %v2365 = vld [vmem:[%s4 + $0x28] sm:$0xff]
    %v2366 = vld [vmem:[%s4 + $0x30] sm:$0xff]
    %v2367 = vld [vmem:[%s4 + $0x38] sm:$0xff]
    %v2368 = vld [vmem:[%s4 + $0x40] sm:$0xff]
    %v2369 = vld [vmem:[%s4 + $0x48] sm:$0xff]
    %v2370 = vld [vmem:[%s4 + $0x50] sm:$0xff]
    %v2371 = vld [vmem:[%s4 + $0x58] sm:$0xff]
    %v2372 = vld [vmem:[%s4 + $0x60] sm:$0xff]
    %v2373 = vld [vmem:[%s4 + $0x68] sm:$0xff]
    %v2374 = vld [vmem:[%s4 + $0x70] sm:$0xff]
    %v2375 = vld [vmem:[%s4 + $0x78] sm:$0xff]
    %v2376 = vld [vmem:[%s4 + $0x80] sm:$0xff]
    %v2377 = vld [vmem:[%s4 + $0x88] sm:$0xff]
    %v2378 = vld [vmem:[%s4 + $0x90] sm:$0xff]
    %v2379 = vld [vmem:[%s4 + $0x98] sm:$0xff]
    %v2380 = vld [vmem:[%s4 + $0xa0] sm:$0xff]
    %v2381 = vld [vmem:[%s4 + $0xa8] sm:$0xff]
    %v2382 = vld [vmem:[%s4 + $0xb0] sm:$0xff]
    %v2383 = vld [vmem:[%s4 + $0xb8] sm:$0xff]
    %v2384 = vld [vmem:[%s4 + $0xc0] sm:$0xff]
    %v2385 = vld [vmem:[%s4 + $0xc8] sm:$0xff]
    %v2386 = vld [vmem:[%s4 + $0xd0] sm:$0xff]
    %v2387 = vld [vmem:[%s4 + $0xd8] sm:$0xff]
    %v2388 = vld [vmem:[%s4 + $0xe0] sm:$0xff]
    %v2389 = vld [vmem:[%s4 + $0xe8] sm:$0xff]
    %v2390 = vld [vmem:[%s4 + $0xf0] sm:$0xff]
    %v2391 = vld [vmem:[%s4 + $0xf8] sm:$0xff]
    %v2392 = vld [vmem:[%s4 + $0x100] sm:$0xff]
    %v2393 = vld [vmem:[%s4 + $0x108] sm:$0xff]
    %v2394 = vld [vmem:[%s4 + $0x110] sm:$0xff]
    %v2395 = vld [vmem:[%s4 + $0x118] sm:$0xff]
    %v2396 = vld [vmem:[%s4 + $0x120] sm:$0xff]
    %v2397 = vld [vmem:[%s4 + $0x128] sm:$0xff]
    %v2398 = vld [vmem:[%s4 + $0x130] sm:$0xff]
    %v2399 = vld [vmem:[%s4 + $0x138] sm:$0xff]
    %v2400 = vld [vmem:[%s4 + $0x140] sm:$0xff]
    %v2401 = vld [vmem:[%s4 + $0x148] sm:$0xff]
    %v2402 = vld [vmem:[%s4 + $0x150] sm:$0xff]
    %v2403 = vld [vmem:[%s4 + $0x158] sm:$0xff]
    %v2404 = vld [vmem:[%s4 + $0x160] sm:$0xff]
    %v2405 = vld [vmem:[%s4 + $0x168] sm:$0xff]
    %v2406 = vld [vmem:[%s4 + $0x170] sm:$0xff]
    %v2407 = vld [vmem:[%s4 + $0x178] sm:$0xff]
    %v2408 = vld [vmem:[%s4 + $0x180] sm:$0xff]
    %v2409 = vld [vmem:[%s4 + $0x188] sm:$0xff]
    %v2410 = vld [vmem:[%s4 + $0x190] sm:$0xff]
    %v2411 = vld [vmem:[%s4 + $0x198] sm:$0xff]
    %v2412 = vld [vmem:[%s4 + $0x1a0] sm:$0xff]
    %v2413 = vld [vmem:[%s4 + $0x1a8] sm:$0xff]
    %v2414 = vld [vmem:[%s4 + $0x1b0] sm:$0xff]
    %v2415 = vld [vmem:[%s4 + $0x1b8] sm:$0xff]
    %v2416 = vld [vmem:[%s4 + $0x1c0] sm:$0xff]
    %v2417 = vld [vmem:[%s4 + $0x1c8] sm:$0xff]
    %v2418 = vld [vmem:[%s4 + $0x1d0] sm:$0xff]
    %v2419 = vld [vmem:[%s4 + $0x1d8] sm:$0xff]
    %v2420 = vld [vmem:[%s4 + $0x1e0] sm:$0xff]
    %v2421 = vld [vmem:[%s4 + $0x1e8] sm:$0xff]
    %v2422 = vld [vmem:[%s4 + $0x1f0] sm:$0xff]
    %v2423 = vld [vmem:[%s4 + $0x1f8] sm:$0xff]
    %v2488 = vunpack.c.l.b16 %v2360
    %v2489 = vunpack.c.h.b16 %v2360
    %v2490 = vunpack.c.l.b16 %v2361
    %v2491 = vunpack.c.h.b16 %v2361
    %v2492 = vunpack.c.l.b16 %v2362
    %v2493 = vunpack.c.h.b16 %v2362
    %v2494 = vunpack.c.l.b16 %v2363
    %v2495 = vunpack.c.h.b16 %v2363
    %v2496 = vunpack.c.l.b16 %v2364
    %v2497 = vunpack.c.h.b16 %v2364
    %v2498 = vunpack.c.l.b16 %v2365
    %v2499 = vunpack.c.h.b16 %v2365
    %v2500 = vunpack.c.l.b16 %v2366
    %v2501 = vunpack.c.h.b16 %v2366
    %v2502 = vunpack.c.l.b16 %v2367
    %v2503 = vunpack.c.h.b16 %v2367
    %v2504 = vunpack.c.l.b16 %v2368
    %v2505 = vunpack.c.h.b16 %v2368
    %v2506 = vunpack.c.l.b16 %v2369
    %v2507 = vunpack.c.h.b16 %v2369
    %v2508 = vunpack.c.l.b16 %v2370
    %v2509 = vunpack.c.h.b16 %v2370
    %v2510 = vunpack.c.l.b16 %v2371
    %v2511 = vunpack.c.h.b16 %v2371
    %v2512 = vunpack.c.l.b16 %v2372
    %v2513 = vunpack.c.h.b16 %v2372
    %v2514 = vunpack.c.l.b16 %v2373
    %v2515 = vunpack.c.h.b16 %v2373
    %v2516 = vunpack.c.l.b16 %v2374
    %v2517 = vunpack.c.h.b16 %v2374
    %v2518 = vunpack.c.l.b16 %v2375
    %v2519 = vunpack.c.h.b16 %v2375
    %v2520 = vunpack.c.l.b16 %v2376
    %v2521 = vunpack.c.h.b16 %v2376
    %v2522 = vunpack.c.l.b16 %v2377
    %v2523 = vunpack.c.h.b16 %v2377
    %v2524 = vunpack.c.l.b16 %v2378
    %v2525 = vunpack.c.h.b16 %v2378
    %v2526 = vunpack.c.l.b16 %v2379
    %v2527 = vunpack.c.h.b16 %v2379
    %v2528 = vunpack.c.l.b16 %v2380
    %v2529 = vunpack.c.h.b16 %v2380
    %v2530 = vunpack.c.l.b16 %v2381
    %v2531 = vunpack.c.h.b16 %v2381
    %v2532 = vunpack.c.l.b16 %v2382
    %v2533 = vunpack.c.h.b16 %v2382
    %v2534 = vunpack.c.l.b16 %v2383
    %v2535 = vunpack.c.h.b16 %v2383
    %v2536 = vunpack.c.l.b16 %v2384
    %v2537 = vunpack.c.h.b16 %v2384
    %v2538 = vunpack.c.l.b16 %v2385
    %v2539 = vunpack.c.h.b16 %v2385
    %v2540 = vunpack.c.l.b16 %v2386
    %v2541 = vunpack.c.h.b16 %v2386
    %v2542 = vunpack.c.l.b16 %v2387
    %v2543 = vunpack.c.h.b16 %v2387
    %v2544 = vunpack.c.l.b16 %v2388
    %v2545 = vunpack.c.h.b16 %v2388
    %v2546 = vunpack.c.l.b16 %v2389
    %v2547 = vunpack.c.h.b16 %v2389
    %v2548 = vunpack.c.l.b16 %v2390
    %v2549 = vunpack.c.h.b16 %v2390
    %v2550 = vunpack.c.l.b16 %v2391
    %v2551 = vunpack.c.h.b16 %v2391
    %v2552 = vunpack.c.l.b16 %v2392
    %v2553 = vunpack.c.h.b16 %v2392
    %v2554 = vunpack.c.l.b16 %v2393
    %v2555 = vunpack.c.h.b16 %v2393
    %v2556 = vunpack.c.l.b16 %v2394
    %v2557 = vunpack.c.h.b16 %v2394
    %v2558 = vunpack.c.l.b16 %v2395
    %v2559 = vunpack.c.h.b16 %v2395
    %v2560 = vunpack.c.l.b16 %v2396
    %v2561 = vunpack.c.h.b16 %v2396
    %v2562 = vunpack.c.l.b16 %v2397
    %v2563 = vunpack.c.h.b16 %v2397
    %v2564 = vunpack.c.l.b16 %v2398
    %v2565 = vunpack.c.h.b16 %v2398
    %v2566 = vunpack.c.l.b16 %v2399
    %v2567 = vunpack.c.h.b16 %v2399
    %v2568 = vunpack.c.l.b16 %v2400
    %v2569 = vunpack.c.h.b16 %v2400
    %v2570 = vunpack.c.l.b16 %v2401
    %v2571 = vunpack.c.h.b16 %v2401
    %v2572 = vunpack.c.l.b16 %v2402
    %v2573 = vunpack.c.h.b16 %v2402
    %v2574 = vunpack.c.l.b16 %v2403
    %v2575 = vunpack.c.h.b16 %v2403
    %v2576 = vunpack.c.l.b16 %v2404
    %v2577 = vunpack.c.h.b16 %v2404
    %v2578 = vunpack.c.l.b16 %v2405
    %v2579 = vunpack.c.h.b16 %v2405
    %v2580 = vunpack.c.l.b16 %v2406
    %v2581 = vunpack.c.h.b16 %v2406
    %v2582 = vunpack.c.l.b16 %v2407
    %v2583 = vunpack.c.h.b16 %v2407
    %v2584 = vunpack.c.l.b16 %v2408
    %v2585 = vunpack.c.h.b16 %v2408
    %v2586 = vunpack.c.l.b16 %v2409
    %v2587 = vunpack.c.h.b16 %v2409
    %v2588 = vunpack.c.l.b16 %v2410
    %v2589 = vunpack.c.h.b16 %v2410
    %v2590 = vunpack.c.l.b16 %v2411
    %v2591 = vunpack.c.h.b16 %v2411
    %v2592 = vunpack.c.l.b16 %v2412
    %v2593 = vunpack.c.h.b16 %v2412
    %v2594 = vunpack.c.l.b16 %v2413
    %v2595 = vunpack.c.h.b16 %v2413
    %v2596 = vunpack.c.l.b16 %v2414
    %v2597 = vunpack.c.h.b16 %v2414
    %v2598 = vunpack.c.l.b16 %v2415
    %v2599 = vunpack.c.h.b16 %v2415
    %v2600 = vunpack.c.l.b16 %v2416
    %v2601 = vunpack.c.h.b16 %v2416
    %v2602 = vunpack.c.l.b16 %v2417
    %v2603 = vunpack.c.h.b16 %v2417
    %v2604 = vunpack.c.l.b16 %v2418
    %v2605 = vunpack.c.h.b16 %v2418
    %v2606 = vunpack.c.l.b16 %v2419
    %v2607 = vunpack.c.h.b16 %v2419
    %v2608 = vunpack.c.l.b16 %v2420
    %v2609 = vunpack.c.h.b16 %v2420
    %v2610 = vunpack.c.l.b16 %v2421
    %v2611 = vunpack.c.h.b16 %v2421
    %v2612 = vunpack.c.l.b16 %v2422
    %v2613 = vunpack.c.h.b16 %v2422
    %v2614 = vunpack.c.l.b16 %v2423
    %v2615 = vunpack.c.h.b16 %v2423
    %v2616 = vpack.c.b16 %v2492, %v2488
    %v2617 = vpack.c.b16 %v2493, %v2489
    %v2618 = vpack.c.b16 %v2494, %v2490
    %v2619 = vpack.c.b16 %v2495, %v2491
    %v2620 = vpack.c.b16 %v2500, %v2496
    %v2621 = vpack.c.b16 %v2501, %v2497
    %v2622 = vpack.c.b16 %v2502, %v2498
    %v2623 = vpack.c.b16 %v2503, %v2499
    %v2624 = vpack.c.b16 %v2508, %v2504
    %v2625 = vpack.c.b16 %v2509, %v2505
    %v2626 = vpack.c.b16 %v2510, %v2506
    %v2627 = vpack.c.b16 %v2511, %v2507
    %v2628 = vpack.c.b16 %v2516, %v2512
    %v2629 = vpack.c.b16 %v2517, %v2513
    %v2630 = vpack.c.b16 %v2518, %v2514
    %v2631 = vpack.c.b16 %v2519, %v2515
    %v2632 = vpack.c.b16 %v2524, %v2520
    %v2633 = vpack.c.b16 %v2525, %v2521
    %v2634 = vpack.c.b16 %v2526, %v2522
    %v2635 = vpack.c.b16 %v2527, %v2523
    %v2636 = vpack.c.b16 %v2532, %v2528
    %v2637 = vpack.c.b16 %v2533, %v2529
    %v2638 = vpack.c.b16 %v2534, %v2530
    %v2639 = vpack.c.b16 %v2535, %v2531
    %v2640 = vpack.c.b16 %v2540, %v2536
    %v2641 = vpack.c.b16 %v2541, %v2537
    %v2642 = vpack.c.b16 %v2542, %v2538
    %v2643 = vpack.c.b16 %v2543, %v2539
    %v2644 = vpack.c.b16 %v2548, %v2544
    %v2645 = vpack.c.b16 %v2549, %v2545
    %v2646 = vpack.c.b16 %v2550, %v2546
    %v2647 = vpack.c.b16 %v2551, %v2547
    %v2648 = vpack.c.b16 %v2556, %v2552
    %v2649 = vpack.c.b16 %v2557, %v2553
    %v2650 = vpack.c.b16 %v2558, %v2554
    %v2651 = vpack.c.b16 %v2559, %v2555
    %v2652 = vpack.c.b16 %v2564, %v2560
    %v2653 = vpack.c.b16 %v2565, %v2561
    %v2654 = vpack.c.b16 %v2566, %v2562
    %v2655 = vpack.c.b16 %v2567, %v2563
    %v2656 = vpack.c.b16 %v2572, %v2568
    %v2657 = vpack.c.b16 %v2573, %v2569
    %v2658 = vpack.c.b16 %v2574, %v2570
    %v2659 = vpack.c.b16 %v2575, %v2571
    %v2660 = vpack.c.b16 %v2580, %v2576
    %v2661 = vpack.c.b16 %v2581, %v2577
    %v2662 = vpack.c.b16 %v2582, %v2578
    %v2663 = vpack.c.b16 %v2583, %v2579
    %v2664 = vpack.c.b16 %v2588, %v2584
    %v2665 = vpack.c.b16 %v2589, %v2585
    %v2666 = vpack.c.b16 %v2590, %v2586
    %v2667 = vpack.c.b16 %v2591, %v2587
    %v2668 = vpack.c.b16 %v2596, %v2592
    %v2669 = vpack.c.b16 %v2597, %v2593
    %v2670 = vpack.c.b16 %v2598, %v2594
    %v2671 = vpack.c.b16 %v2599, %v2595
    %v2672 = vpack.c.b16 %v2604, %v2600
    %v2673 = vpack.c.b16 %v2605, %v2601
    %v2674 = vpack.c.b16 %v2606, %v2602
    %v2675 = vpack.c.b16 %v2607, %v2603
    %v2676 = vpack.c.b16 %v2612, %v2608
    %v2677 = vpack.c.b16 %v2613, %v2609
    %v2678 = vpack.c.b16 %v2614, %v2610
    %v2679 = vpack.c.b16 %v2615, %v2611
    %2744 = vmatprep.subr.bf16.mxu0 %v2645
    %2745 = vmatpush1.bf16.msra.mxu0 %v2644
    %2746 = vmatprep.subr.bf16.mxu0 %v2641
    %2747 = vmatpush1.bf16.msra.mxu0 %v2640
    %2748 = vmatprep.subr.bf16.mxu0 %v2637
    %2749 = vmatpush1.bf16.msra.mxu0 %v2636
    %2750 = vmatprep.subr.bf16.mxu0 %v2633
    %2751 = vmatpush1.bf16.msra.mxu0 %v2632
    %2752 = vmatprep.subr.bf16.mxu0 %v2629
    %2753 = vmatpush1.bf16.msra.mxu0 %v2628
    %2754 = vmatprep.subr.bf16.mxu0 %v2625
    %2755 = vmatpush1.bf16.msra.mxu0 %v2624
    %2756 = vmatprep.subr.bf16.mxu0 %v2621
    %2757 = vmatpush1.bf16.msra.mxu0 %v2620
    %2758 = vmatprep.subr.bf16.mxu0 %v2617
    %2759 = vmatpush1.bf16.msra.mxu0 %v2616
    %2760 = vmatprep.subr.bf16.mxu0 %v2677
    %2761 = vmatpush2.bf16.msra.mxu0 %v2676
    %2762 = vmatprep.subr.bf16.mxu0 %v2673
    %2763 = vmatpush2.bf16.msra.mxu0 %v2672
    %2764 = vmatprep.subr.bf16.mxu0 %v2669
    %2765 = vmatpush2.bf16.msra.mxu0 %v2668
    %2766 = vmatprep.subr.bf16.mxu0 %v2665
    %2767 = vmatpush2.bf16.msra.mxu0 %v2664
    %2768 = vmatprep.subr.bf16.mxu0 %v2661
    %2769 = vmatpush2.bf16.msra.mxu0 %v2660
    %2770 = vmatprep.subr.bf16.mxu0 %v2657
    %2771 = vmatpush2.bf16.msra.mxu0 %v2656
    %2772 = vmatprep.subr.bf16.mxu0 %v2653
    %2773 = vmatpush2.bf16.msra.mxu0 %v2652
    %2774 = vmatprep.subr.bf16.mxu0 %v2649
    %2775 = vmatpush2.bf16.msra.mxu0 %v2648
    %2776 = vmatprep.mubr.bf16.mxu0 %v2359
    %2777 = vmatmul.mubr.bf16.gmra.mxu0 %v2358
    %v2778 = vpop.f32.mrf.mxu0
    %v2779 = vadd.f32 %v2035, %v2778
    %v2780 = vpop.f32.mrf.mxu0
    %v2781 = vadd.f32 %v2039, %v2780
    %v2782 = vpop.f32.mrf.mxu0
    %v2783 = vpop.f32.mrf.mxu0
    %2784 = vdwg.mxu0
    %2785 = vmatprep.subr.bf16.mxu0 %v2647
    %2786 = vmatpush1.bf16.msra.mxu0 %v2646
    %2787 = vmatprep.subr.bf16.mxu0 %v2643
    %2788 = vmatpush1.bf16.msra.mxu0 %v2642
    %2789 = vmatprep.subr.bf16.mxu0 %v2639
    %2790 = vmatpush1.bf16.msra.mxu0 %v2638
    %2791 = vmatprep.subr.bf16.mxu0 %v2635
    %2792 = vmatpush1.bf16.msra.mxu0 %v2634
    %2793 = vmatprep.subr.bf16.mxu0 %v2631
    %2794 = vmatpush1.bf16.msra.mxu0 %v2630
    %2795 = vmatprep.subr.bf16.mxu0 %v2627
    %2796 = vmatpush1.bf16.msra.mxu0 %v2626
    %2797 = vmatprep.subr.bf16.mxu0 %v2623
    %2798 = vmatpush1.bf16.msra.mxu0 %v2622
    %2799 = vmatprep.subr.bf16.mxu0 %v2619
    %2800 = vmatpush1.bf16.msra.mxu0 %v2618
    %2801 = vmatprep.subr.bf16.mxu0 %v2679
    %2802 = vmatpush2.bf16.msra.mxu0 %v2678
    %2803 = vmatprep.subr.bf16.mxu0 %v2675
    %2804 = vmatpush2.bf16.msra.mxu0 %v2674
    %2805 = vmatprep.subr.bf16.mxu0 %v2671
    %2806 = vmatpush2.bf16.msra.mxu0 %v2670
    %2807 = vmatprep.subr.bf16.mxu0 %v2667
    %2808 = vmatpush2.bf16.msra.mxu0 %v2666
    %2809 = vmatprep.subr.bf16.mxu0 %v2663
    %2810 = vmatpush2.bf16.msra.mxu0 %v2662
    %2811 = vmatprep.subr.bf16.mxu0 %v2659
    %2812 = vmatpush2.bf16.msra.mxu0 %v2658
    %2813 = vmatprep.subr.bf16.mxu0 %v2655
    %2814 = vmatpush2.bf16.msra.mxu0 %v2654
    %2815 = vmatprep.subr.bf16.mxu0 %v2651
    %2816 = vmatpush2.bf16.msra.mxu0 %v2650
    %2817 = vmatprep.mubr.bf16.mxu0 %v2359
    %2818 = vmatmul.mubr.bf16.gmra.mxu0 %v2358
    %v2819 = vpop.f32.mrf.mxu0
    %v2820 = vadd.f32 %v2043, %v2819
    %v2821 = vpop.f32.mrf.mxu0
    %v2822 = vadd.f32 %v2047, %v2821
    %v2823 = vpop.f32.mrf.mxu0
    %v2824 = vpop.f32.mrf.mxu0
    %2825 = vdwg.mxu0
    %v2826 = vxor.u32 %v2779, 2147483648
    %v2827 = vmul.f32 %v2826, 1.442695
    %v2828 = vpow.pop %v2827
    %v2829 = vadd.f32 %v2828, 1.0
    %v2830 = vrcp.pop %v2829
    %v2831 = vmul.f32 1.0, %v2830
    %v2832 = vxor.u32 %v2781, 2147483648
    %v2833 = vmul.f32 %v2832, 1.442695
    %v2834 = vpow.pop %v2833
    %v2835 = vadd.f32 %v2834, 1.0
    %v2836 = vrcp.pop %v2835
    %v2837 = vmul.f32 1.0, %v2836
    %v2838 = vtanh.pop %v2820
    %v2839 = vxor.u32 %v2822, 2147483648
    %v2840 = vmul.f32 %v2839, 1.442695
    %v2841 = vpow.pop %v2840
    %v2842 = vadd.f32 %v2841, 1.0
    %v2843 = vrcp.pop %v2842
    %v2844 = vmul.f32 1.0, %v2843
    %v2845 = vmul.f32 %v2837, 0.0
    %v2846 = vmul.f32 %v2831, %v2838
    %v2847 = vadd.f32 %v2845, %v2846
    %v2848 = vtanh.pop %v2847
    %v2849 = vmul.f32 %v2844, %v2848
    %v2850 = vld [vmem:[#allocation2] sm:$0xc]
    %v2851 = vld [vmem:[#allocation2 + $0x8] sm:$0xc]
    %v2852 = vld [vmem:[#allocation2 + $0x10] sm:$0xc]
    %v2853 = vld [vmem:[#allocation2 + $0x18] sm:$0xc]
    %2854 = vmatprep.subr.bf16.mxu0 %v2213
    %2855 = vmatpush1.bf16.msra.mxu0 %v2212
    %2856 = vmatprep.subr.bf16.mxu0 %v2209
    %2857 = vmatpush1.bf16.msra.mxu0 %v2208
    %2858 = vmatprep.subr.bf16.mxu0 %v2205
    %2859 = vmatpush1.bf16.msra.mxu0 %v2204
    %2860 = vmatprep.subr.bf16.mxu0 %v2201
    %2861 = vmatpush1.bf16.msra.mxu0 %v2200
    %2862 = vmatprep.subr.bf16.mxu0 %v2197
    %2863 = vmatpush1.bf16.msra.mxu0 %v2196
    %2864 = vmatprep.subr.bf16.mxu0 %v2193
    %2865 = vmatpush1.bf16.msra.mxu0 %v2192
    %2866 = vmatprep.subr.bf16.mxu0 %v2189
    %2867 = vmatpush1.bf16.msra.mxu0 %v2188
    %2868 = vmatprep.subr.bf16.mxu0 %v2185
    %2869 = vmatpush1.bf16.msra.mxu0 %v2184
    %2870 = vmatprep.subr.bf16.mxu0 0
    %2871 = vmatpush2.bf16.msra.mxu0 0
    %2872 = vmatprep.subr.bf16.mxu0 0
    %2873 = vmatpush2.bf16.msra.mxu0 0
    %2874 = vmatprep.subr.bf16.mxu0 0
    %2875 = vmatpush2.bf16.msra.mxu0 0
    %2876 = vmatprep.subr.bf16.mxu0 0
    %2877 = vmatpush2.bf16.msra.mxu0 0
    %2878 = vmatprep.subr.bf16.mxu0 0
    %2879 = vmatpush2.bf16.msra.mxu0 0
    %2880 = vmatprep.subr.bf16.mxu0 0
    %2881 = vmatpush2.bf16.msra.mxu0 0
    %2882 = vmatprep.subr.bf16.mxu0 0
    %2883 = vmatpush2.bf16.msra.mxu0 0
    %2884 = vmatprep.subr.bf16.mxu0 0
    %2885 = vmatpush2.bf16.msra.mxu0 0
    %2886 = vmatprep.mubr.bf16.mxu0 0
    %2887 = vmatmul.mubr.bf16.gmra.mxu0 %v2358
    %v2888 = vpop.f32.mrf.mxu0
    %v2889 = vadd.f32 0.0, %v2888
    %v2890 = vpop.f32.mrf.mxu0
    %v2891 = vadd.f32 0.0, %v2890
    %v2892 = vpop.f32.mrf.mxu0
    %v2893 = vpop.f32.mrf.mxu0
    %2894 = vdwg.mxu0
    %2895 = vmatprep.subr.bf16.mxu0 %v2215
    %2896 = vmatpush1.bf16.msra.mxu0 %v2214
    %2897 = vmatprep.subr.bf16.mxu0 %v2211
    %2898 = vmatpush1.bf16.msra.mxu0 %v2210
    %2899 = vmatprep.subr.bf16.mxu0 %v2207
    %2900 = vmatpush1.bf16.msra.mxu0 %v2206
    %2901 = vmatprep.subr.bf16.mxu0 %v2203
    %2902 = vmatpush1.bf16.msra.mxu0 %v2202
    %2903 = vmatprep.subr.bf16.mxu0 %v2199
    %2904 = vmatpush1.bf16.msra.mxu0 %v2198
    %2905 = vmatprep.subr.bf16.mxu0 %v2195
    %2906 = vmatpush1.bf16.msra.mxu0 %v2194
    %2907 = vmatprep.subr.bf16.mxu0 %v2191
    %2908 = vmatpush1.bf16.msra.mxu0 %v2190
    %2909 = vmatprep.subr.bf16.mxu0 %v2187
    %2910 = vmatpush1.bf16.msra.mxu0 %v2186
    %2911 = vmatprep.subr.bf16.mxu0 0
    %2912 = vmatpush2.bf16.msra.mxu0 0
    %2913 = vmatprep.subr.bf16.mxu0 0
    %2914 = vmatpush2.bf16.msra.mxu0 0
    %2915 = vmatprep.subr.bf16.mxu0 0
    %2916 = vmatpush2.bf16.msra.mxu0 0
    %2917 = vmatprep.subr.bf16.mxu0 0
    %2918 = vmatpush2.bf16.msra.mxu0 0
    %2919 = vmatprep.subr.bf16.mxu0 0
    %2920 = vmatpush2.bf16.msra.mxu0 0
    %2921 = vmatprep.subr.bf16.mxu0 0
    %2922 = vmatpush2.bf16.msra.mxu0 0
    %2923 = vmatprep.subr.bf16.mxu0 0
    %2924 = vmatpush2.bf16.msra.mxu0 0
    %2925 = vmatprep.subr.bf16.mxu0 0
    %2926 = vmatpush2.bf16.msra.mxu0 0
    %2927 = vmatprep.mubr.bf16.mxu0 0
    %2928 = vmatmul.mubr.bf16.gmra.mxu0 %v2358
    %v2929 = vpop.f32.mrf.mxu0
    %v2930 = vadd.f32 0.0, %v2929
    %v2931 = vpop.f32.mrf.mxu0
    %v2932 = vadd.f32 0.0, %v2931
    %v2933 = vpop.f32.mrf.mxu0
    %v2934 = vpop.f32.mrf.mxu0
    %2935 = vdwg.mxu0
    %v2940 = vrot.slane %v2889, 6
    %v2941 = vrot.slane %v2891, 6
    %v2942 = vrot.slane %v2930, 6
    %v2943 = vrot.slane %v2932, 6
    %v2948 = vadd.f32 %v2850, %v2940
    %v2949 = vadd.f32 %v2851, %v2941
    %v2950 = vadd.f32 %v2852, %v2942
    %v2951 = vadd.f32 %v2853, %v2943
    %v2952 = vxor.u32 %v2948, 2147483648
    %v2953 = vmul.f32 %v2952, 1.442695
    %v2954 = vpow.pop %v2953
    %v2955 = vadd.f32 %v2954, 1.0
    %v2956 = vrcp.pop %v2955
    %v2957 = vmul.f32 1.0, %v2956
    %v2958 = vxor.u32 %v2949, 2147483648
    %v2959 = vmul.f32 %v2958, 1.442695
    %v2960 = vpow.pop %v2959
    %v2961 = vadd.f32 %v2960, 1.0
    %v2962 = vrcp.pop %v2961
    %v2963 = vmul.f32 1.0, %v2962
    %v2964 = vtanh.pop %v2950
    %v2965 = vxor.u32 %v2951, 2147483648
    %v2966 = vmul.f32 %v2965, 1.442695
    %v2967 = vpow.pop %v2966
    %v2968 = vadd.f32 %v2967, 1.0
    %v2969 = vrcp.pop %v2968
    %v2970 = vmul.f32 1.0, %v2969
    %v2972 = vrot.slane %v2355, 6
    %v2974 = vmul.f32 %v2963, %v2972
    %v2975 = vmul.f32 %v2957, %v2964
    %v2976 = vadd.f32 %v2974, %v2975
    %v2977 = vtanh.pop %v2976
    %v2978 = vmul.f32 %v2970, %v2977
    %v2980 = vrot.slane %v2849, 6
    %v2982 = vpack.c.bf16 %v2978, %v2978
    %v2983 = vpack.c.bf16 %v2980, %v2980
    %v2986 = vrot.slane %v2982, 1
    %v2987 = vrot.slane %v2983, 1
    %2990 = vmatprep.subr.bf16.mxu0 %v2645
    %2991 = vmatpush1.bf16.msra.mxu0 %v2644
    %2992 = vmatprep.subr.bf16.mxu0 %v2641
    %2993 = vmatpush1.bf16.msra.mxu0 %v2640
    %2994 = vmatprep.subr.bf16.mxu0 %v2637
    %2995 = vmatpush1.bf16.msra.mxu0 %v2636
    %2996 = vmatprep.subr.bf16.mxu0 %v2633
    %2997 = vmatpush1.bf16.msra.mxu0 %v2632
    %2998 = vmatprep.subr.bf16.mxu0 %v2629
    %2999 = vmatpush1.bf16.msra.mxu0 %v2628
    %3000 = vmatprep.subr.bf16.mxu0 %v2625
    %3001 = vmatpush1.bf16.msra.mxu0 %v2624
    %3002 = vmatprep.subr.bf16.mxu0 %v2621
    %3003 = vmatpush1.bf16.msra.mxu0 %v2620
    %3004 = vmatprep.subr.bf16.mxu0 %v2617
    %3005 = vmatpush1.bf16.msra.mxu0 %v2616
    %3006 = vmatprep.subr.bf16.mxu0 %v2677
    %3007 = vmatpush2.bf16.msra.mxu0 %v2676
    %3008 = vmatprep.subr.bf16.mxu0 %v2673
    %3009 = vmatpush2.bf16.msra.mxu0 %v2672
    %3010 = vmatprep.subr.bf16.mxu0 %v2669
    %3011 = vmatpush2.bf16.msra.mxu0 %v2668
    %3012 = vmatprep.subr.bf16.mxu0 %v2665
    %3013 = vmatpush2.bf16.msra.mxu0 %v2664
    %3014 = vmatprep.subr.bf16.mxu0 %v2661
    %3015 = vmatpush2.bf16.msra.mxu0 %v2660
    %3016 = vmatprep.subr.bf16.mxu0 %v2657
    %3017 = vmatpush2.bf16.msra.mxu0 %v2656
    %3018 = vmatprep.subr.bf16.mxu0 %v2653
    %3019 = vmatpush2.bf16.msra.mxu0 %v2652
    %3020 = vmatprep.subr.bf16.mxu0 %v2649
    %3021 = vmatpush2.bf16.msra.mxu0 %v2648
    %3022 = vmatprep.mubr.bf16.mxu0 %v2987
    %3023 = vmatmul.mubr.bf16.gmra.mxu0 %v2986
    %v3024 = vpop.f32.mrf.mxu0
    %v3025 = vadd.f32 %v2035, %v3024
    %v3026 = vpop.f32.mrf.mxu0
    %v3027 = vadd.f32 %v2039, %v3026
    %v3028 = vpop.f32.mrf.mxu0
    %v3029 = vpop.f32.mrf.mxu0
    %3030 = vdwg.mxu0
    %3031 = vmatprep.subr.bf16.mxu0 %v2647
    %3032 = vmatpush1.bf16.msra.mxu0 %v2646
    %3033 = vmatprep.subr.bf16.mxu0 %v2643
    %3034 = vmatpush1.bf16.msra.mxu0 %v2642
    %3035 = vmatprep.subr.bf16.mxu0 %v2639
    %3036 = vmatpush1.bf16.msra.mxu0 %v2638
    %3037 = vmatprep.subr.bf16.mxu0 %v2635
    %3038 = vmatpush1.bf16.msra.mxu0 %v2634
    %3039 = vmatprep.subr.bf16.mxu0 %v2631
    %3040 = vmatpush1.bf16.msra.mxu0 %v2630
    %3041 = vmatprep.subr.bf16.mxu0 %v2627
    %3042 = vmatpush1.bf16.msra.mxu0 %v2626
    %3043 = vmatprep.subr.bf16.mxu0 %v2623
    %3044 = vmatpush1.bf16.msra.mxu0 %v2622
    %3045 = vmatprep.subr.bf16.mxu0 %v2619
    %3046 = vmatpush1.bf16.msra.mxu0 %v2618
    %3047 = vmatprep.subr.bf16.mxu0 %v2679
    %3048 = vmatpush2.bf16.msra.mxu0 %v2678
    %3049 = vmatprep.subr.bf16.mxu0 %v2675
    %3050 = vmatpush2.bf16.msra.mxu0 %v2674
    %3051 = vmatprep.subr.bf16.mxu0 %v2671
    %3052 = vmatpush2.bf16.msra.mxu0 %v2670
    %3053 = vmatprep.subr.bf16.mxu0 %v2667
    %3054 = vmatpush2.bf16.msra.mxu0 %v2666
    %3055 = vmatprep.subr.bf16.mxu0 %v2663
    %3056 = vmatpush2.bf16.msra.mxu0 %v2662
    %3057 = vmatprep.subr.bf16.mxu0 %v2659
    %3058 = vmatpush2.bf16.msra.mxu0 %v2658
    %3059 = vmatprep.subr.bf16.mxu0 %v2655
    %3060 = vmatpush2.bf16.msra.mxu0 %v2654
    %3061 = vmatprep.subr.bf16.mxu0 %v2651
    %3062 = vmatpush2.bf16.msra.mxu0 %v2650
    %3063 = vmatprep.mubr.bf16.mxu0 %v2987
    %3064 = vmatmul.mubr.bf16.gmra.mxu0 %v2986
    %v3065 = vpop.f32.mrf.mxu0
    %v3066 = vadd.f32 %v2043, %v3065
    %v3067 = vpop.f32.mrf.mxu0
    %v3068 = vadd.f32 %v2047, %v3067
    %v3069 = vpop.f32.mrf.mxu0
    %v3070 = vpop.f32.mrf.mxu0
    %3071 = vdwg.mxu0
    %v3072 = vxor.u32 %v3025, 2147483648
    %v3073 = vmul.f32 %v3072, 1.442695
    %v3074 = vpow.pop %v3073
    %v3075 = vadd.f32 %v3074, 1.0
    %v3076 = vrcp.pop %v3075
    %v3077 = vmul.f32 1.0, %v3076
    %v3078 = vxor.u32 %v3027, 2147483648
    %v3079 = vmul.f32 %v3078, 1.442695
    %v3080 = vpow.pop %v3079
    %v3081 = vadd.f32 %v3080, 1.0
    %v3082 = vrcp.pop %v3081
    %v3083 = vmul.f32 1.0, %v3082
    %v3084 = vtanh.pop %v3066
    %v3085 = vxor.u32 %v3068, 2147483648
    %v3086 = vmul.f32 %v3085, 1.442695
    %v3087 = vpow.pop %v3086
    %v3088 = vadd.f32 %v3087, 1.0
    %v3089 = vrcp.pop %v3088
    %v3090 = vmul.f32 1.0, %v3089
    %v3091 = vmul.f32 %v3083, %v2847
    %v3092 = vmul.f32 %v3077, %v3084
    %v3093 = vadd.f32 %v3091, %v3092
    %v3094 = vtanh.pop %v3093
    %v3095 = vmul.f32 %v3090, %v3094
    %v3096 = vld [vmem:[#allocation2] sm:$0x30]
    %v3097 = vld [vmem:[#allocation2 + $0x8] sm:$0x30]
    %v3098 = vld [vmem:[#allocation2 + $0x10] sm:$0x30]
    %v3099 = vld [vmem:[#allocation2 + $0x18] sm:$0x30]
    %3100 = vmatprep.subr.bf16.mxu0 %v2213
    %3101 = vmatpush1.bf16.msra.mxu0 %v2212
    %3102 = vmatprep.subr.bf16.mxu0 %v2209
    %3103 = vmatpush1.bf16.msra.mxu0 %v2208
    %3104 = vmatprep.subr.bf16.mxu0 %v2205
    %3105 = vmatpush1.bf16.msra.mxu0 %v2204
    %3106 = vmatprep.subr.bf16.mxu0 %v2201
    %3107 = vmatpush1.bf16.msra.mxu0 %v2200
    %3108 = vmatprep.subr.bf16.mxu0 %v2197
    %3109 = vmatpush1.bf16.msra.mxu0 %v2196
    %3110 = vmatprep.subr.bf16.mxu0 %v2193
    %3111 = vmatpush1.bf16.msra.mxu0 %v2192
    %3112 = vmatprep.subr.bf16.mxu0 %v2189
    %3113 = vmatpush1.bf16.msra.mxu0 %v2188
    %3114 = vmatprep.subr.bf16.mxu0 %v2185
    %3115 = vmatpush1.bf16.msra.mxu0 %v2184
    %3116 = vmatprep.subr.bf16.mxu0 0
    %3117 = vmatpush2.bf16.msra.mxu0 0
    %3118 = vmatprep.subr.bf16.mxu0 0
    %3119 = vmatpush2.bf16.msra.mxu0 0
    %3120 = vmatprep.subr.bf16.mxu0 0
    %3121 = vmatpush2.bf16.msra.mxu0 0
    %3122 = vmatprep.subr.bf16.mxu0 0
    %3123 = vmatpush2.bf16.msra.mxu0 0
    %3124 = vmatprep.subr.bf16.mxu0 0
    %3125 = vmatpush2.bf16.msra.mxu0 0
    %3126 = vmatprep.subr.bf16.mxu0 0
    %3127 = vmatpush2.bf16.msra.mxu0 0
    %3128 = vmatprep.subr.bf16.mxu0 0
    %3129 = vmatpush2.bf16.msra.mxu0 0
    %3130 = vmatprep.subr.bf16.mxu0 0
    %3131 = vmatpush2.bf16.msra.mxu0 0
    %3132 = vmatprep.mubr.bf16.mxu0 0
    %3133 = vmatmul.mubr.bf16.gmra.mxu0 %v2986
    %v3134 = vpop.f32.mrf.mxu0
    %v3135 = vadd.f32 0.0, %v3134
    %v3136 = vpop.f32.mrf.mxu0
    %v3137 = vadd.f32 0.0, %v3136
    %v3138 = vpop.f32.mrf.mxu0
    %v3139 = vpop.f32.mrf.mxu0
    %3140 = vdwg.mxu0
    %3141 = vmatprep.subr.bf16.mxu0 %v2215
    %3142 = vmatpush1.bf16.msra.mxu0 %v2214
    %3143 = vmatprep.subr.bf16.mxu0 %v2211
    %3144 = vmatpush1.bf16.msra.mxu0 %v2210
    %3145 = vmatprep.subr.bf16.mxu0 %v2207
    %3146 = vmatpush1.bf16.msra.mxu0 %v2206
    %3147 = vmatprep.subr.bf16.mxu0 %v2203
    %3148 = vmatpush1.bf16.msra.mxu0 %v2202
    %3149 = vmatprep.subr.bf16.mxu0 %v2199
    %3150 = vmatpush1.bf16.msra.mxu0 %v2198
    %3151 = vmatprep.subr.bf16.mxu0 %v2195
    %3152 = vmatpush1.bf16.msra.mxu0 %v2194
    %3153 = vmatprep.subr.bf16.mxu0 %v2191
    %3154 = vmatpush1.bf16.msra.mxu0 %v2190
    %3155 = vmatprep.subr.bf16.mxu0 %v2187
    %3156 = vmatpush1.bf16.msra.mxu0 %v2186
    %3157 = vmatprep.subr.bf16.mxu0 0
    %3158 = vmatpush2.bf16.msra.mxu0 0
    %3159 = vmatprep.subr.bf16.mxu0 0
    %3160 = vmatpush2.bf16.msra.mxu0 0
    %3161 = vmatprep.subr.bf16.mxu0 0
    %3162 = vmatpush2.bf16.msra.mxu0 0
    %3163 = vmatprep.subr.bf16.mxu0 0
    %3164 = vmatpush2.bf16.msra.mxu0 0
    %3165 = vmatprep.subr.bf16.mxu0 0
    %3166 = vmatpush2.bf16.msra.mxu0 0
    %3167 = vmatprep.subr.bf16.mxu0 0
    %3168 = vmatpush2.bf16.msra.mxu0 0
    %3169 = vmatprep.subr.bf16.mxu0 0
    %3170 = vmatpush2.bf16.msra.mxu0 0
    %3171 = vmatprep.subr.bf16.mxu0 0
    %3172 = vmatpush2.bf16.msra.mxu0 0
    %3173 = vmatprep.mubr.bf16.mxu0 0
    %3174 = vmatmul.mubr.bf16.gmra.mxu0 %v2986
    %v3175 = vpop.f32.mrf.mxu0
    %v3176 = vadd.f32 0.0, %v3175
    %v3177 = vpop.f32.mrf.mxu0
    %v3178 = vadd.f32 0.0, %v3177
    %v3179 = vpop.f32.mrf.mxu0
    %v3180 = vpop.f32.mrf.mxu0
    %3181 = vdwg.mxu0
    %v3186 = vrot.slane %v3135, 4
    %v3187 = vrot.slane %v3137, 4
    %v3188 = vrot.slane %v3176, 4
    %v3189 = vrot.slane %v3178, 4
    %v3194 = vadd.f32 %v3096, %v3186
    %v3195 = vadd.f32 %v3097, %v3187
    %v3196 = vadd.f32 %v3098, %v3188
    %v3197 = vadd.f32 %v3099, %v3189
    %v3198 = vxor.u32 %v3194, 2147483648
    %v3199 = vmul.f32 %v3198, 1.442695
    %v3200 = vpow.pop %v3199
    %v3201 = vadd.f32 %v3200, 1.0
    %v3202 = vrcp.pop %v3201
    %v3203 = vmul.f32 1.0, %v3202
    %v3204 = vxor.u32 %v3195, 2147483648
    %v3205 = vmul.f32 %v3204, 1.442695
    %v3206 = vpow.pop %v3205
    %v3207 = vadd.f32 %v3206, 1.0
    %v3208 = vrcp.pop %v3207
    %v3209 = vmul.f32 1.0, %v3208
    %v3210 = vtanh.pop %v3196
    %v3211 = vxor.u32 %v3197, 2147483648
    %v3212 = vmul.f32 %v3211, 1.442695
    %v3213 = vpow.pop %v3212
    %v3214 = vadd.f32 %v3213, 1.0
    %v3215 = vrcp.pop %v3214
    %v3216 = vmul.f32 1.0, %v3215
    %v3218 = vrot.slane %v2976, 6
    %v3220 = vmul.f32 %v3209, %v3218
    %v3221 = vmul.f32 %v3203, %v3210
    %v3222 = vadd.f32 %v3220, %v3221
    %v3223 = vtanh.pop %v3222
    %v3224 = vmul.f32 %v3216, %v3223
    %v3226 = vrot.slane %v3095, 4
    %v3228 = vpack.c.bf16 %v3224, %v3224
    %v3229 = vpack.c.bf16 %v3226, %v3226
    %v3232 = vrot.slane %v3228, 2
    %v3233 = vrot.slane %v3229, 2
    %3236 = vmatprep.subr.bf16.mxu0 %v2645
    %3237 = vmatpush1.bf16.msra.mxu0 %v2644
    %3238 = vmatprep.subr.bf16.mxu0 %v2641
    %3239 = vmatpush1.bf16.msra.mxu0 %v2640
    %3240 = vmatprep.subr.bf16.mxu0 %v2637
    %3241 = vmatpush1.bf16.msra.mxu0 %v2636
    %3242 = vmatprep.subr.bf16.mxu0 %v2633
    %3243 = vmatpush1.bf16.msra.mxu0 %v2632
    %3244 = vmatprep.subr.bf16.mxu0 %v2629
    %3245 = vmatpush1.bf16.msra.mxu0 %v2628
    %3246 = vmatprep.subr.bf16.mxu0 %v2625
    %3247 = vmatpush1.bf16.msra.mxu0 %v2624
    %3248 = vmatprep.subr.bf16.mxu0 %v2621
    %3249 = vmatpush1.bf16.msra.mxu0 %v2620
    %3250 = vmatprep.subr.bf16.mxu0 %v2617
    %3251 = vmatpush1.bf16.msra.mxu0 %v2616
    %3252 = vmatprep.subr.bf16.mxu0 %v2677
    %3253 = vmatpush2.bf16.msra.mxu0 %v2676
    %3254 = vmatprep.subr.bf16.mxu0 %v2673
    %3255 = vmatpush2.bf16.msra.mxu0 %v2672
    %3256 = vmatprep.subr.bf16.mxu0 %v2669
    %3257 = vmatpush2.bf16.msra.mxu0 %v2668
    %3258 = vmatprep.subr.bf16.mxu0 %v2665
    %3259 = vmatpush2.bf16.msra.mxu0 %v2664
    %3260 = vmatprep.subr.bf16.mxu0 %v2661
    %3261 = vmatpush2.bf16.msra.mxu0 %v2660
    %3262 = vmatprep.subr.bf16.mxu0 %v2657
    %3263 = vmatpush2.bf16.msra.mxu0 %v2656
    %3264 = vmatprep.subr.bf16.mxu0 %v2653
    %3265 = vmatpush2.bf16.msra.mxu0 %v2652
    %3266 = vmatprep.subr.bf16.mxu0 %v2649
    %3267 = vmatpush2.bf16.msra.mxu0 %v2648
    %3268 = vmatprep.mubr.bf16.mxu0 %v3233
    %3269 = vmatmul.mubr.bf16.gmra.mxu0 %v3232
    %v3270 = vpop.f32.mrf.mxu0
    %v3271 = vadd.f32 %v2035, %v3270
    %v3272 = vpop.f32.mrf.mxu0
    %v3273 = vadd.f32 %v2039, %v3272
    %v3274 = vpop.f32.mrf.mxu0
    %v3275 = vpop.f32.mrf.mxu0
    %3276 = vdwg.mxu0
    %3277 = vmatprep.subr.bf16.mxu0 %v2647
    %3278 = vmatpush1.bf16.msra.mxu0 %v2646
    %3279 = vmatprep.subr.bf16.mxu0 %v2643
    %3280 = vmatpush1.bf16.msra.mxu0 %v2642
    %3281 = vmatprep.subr.bf16.mxu0 %v2639
    %3282 = vmatpush1.bf16.msra.mxu0 %v2638
    %3283 = vmatprep.subr.bf16.mxu0 %v2635
    %3284 = vmatpush1.bf16.msra.mxu0 %v2634
    %3285 = vmatprep.subr.bf16.mxu0 %v2631
    %3286 = vmatpush1.bf16.msra.mxu0 %v2630
    %3287 = vmatprep.subr.bf16.mxu0 %v2627
    %3288 = vmatpush1.bf16.msra.mxu0 %v2626
    %3289 = vmatprep.subr.bf16.mxu0 %v2623
    %3290 = vmatpush1.bf16.msra.mxu0 %v2622
    %3291 = vmatprep.subr.bf16.mxu0 %v2619
    %3292 = vmatpush1.bf16.msra.mxu0 %v2618
    %3293 = vmatprep.subr.bf16.mxu0 %v2679
    %3294 = vmatpush2.bf16.msra.mxu0 %v2678
    %3295 = vmatprep.subr.bf16.mxu0 %v2675
    %3296 = vmatpush2.bf16.msra.mxu0 %v2674
    %3297 = vmatprep.subr.bf16.mxu0 %v2671
    %3298 = vmatpush2.bf16.msra.mxu0 %v2670
    %3299 = vmatprep.subr.bf16.mxu0 %v2667
    %3300 = vmatpush2.bf16.msra.mxu0 %v2666
    %3301 = vmatprep.subr.bf16.mxu0 %v2663
    %3302 = vmatpush2.bf16.msra.mxu0 %v2662
    %3303 = vmatprep.subr.bf16.mxu0 %v2659
    %3304 = vmatpush2.bf16.msra.mxu0 %v2658
    %3305 = vmatprep.subr.bf16.mxu0 %v2655
    %3306 = vmatpush2.bf16.msra.mxu0 %v2654
    %3307 = vmatprep.subr.bf16.mxu0 %v2651
    %3308 = vmatpush2.bf16.msra.mxu0 %v2650
    %3309 = vmatprep.mubr.bf16.mxu0 %v3233
    %3310 = vmatmul.mubr.bf16.gmra.mxu0 %v3232
    %v3311 = vpop.f32.mrf.mxu0
    %v3312 = vadd.f32 %v2043, %v3311
    %v3313 = vpop.f32.mrf.mxu0
    %v3314 = vadd.f32 %v2047, %v3313
    %v3315 = vpop.f32.mrf.mxu0
    %v3316 = vpop.f32.mrf.mxu0
    %3317 = vdwg.mxu0
    %v3318 = vxor.u32 %v3271, 2147483648
    %v3319 = vmul.f32 %v3318, 1.442695
    %v3320 = vpow.pop %v3319
    %v3321 = vadd.f32 %v3320, 1.0
    %v3322 = vrcp.pop %v3321
    %v3323 = vmul.f32 1.0, %v3322
    %v3324 = vxor.u32 %v3273, 2147483648
    %v3325 = vmul.f32 %v3324, 1.442695
    %v3326 = vpow.pop %v3325
    %v3327 = vadd.f32 %v3326, 1.0
    %v3328 = vrcp.pop %v3327
    %v3329 = vmul.f32 1.0, %v3328
    %v3330 = vtanh.pop %v3312
    %v3331 = vxor.u32 %v3314, 2147483648
    %v3332 = vmul.f32 %v3331, 1.442695
    %v3333 = vpow.pop %v3332
    %v3334 = vadd.f32 %v3333, 1.0
    %v3335 = vrcp.pop %v3334
    %v3336 = vmul.f32 1.0, %v3335
    %v3337 = vmul.f32 %v3329, %v3093
    %v3338 = vmul.f32 %v3323, %v3330
    %v3339 = vadd.f32 %v3337, %v3338
    %v3340 = vtanh.pop %v3339
    %v3341 = vmul.f32 %v3336, %v3340
    %v3342 = vld [vmem:[#allocation2] sm:$0xc0]
    %v3343 = vld [vmem:[#allocation2 + $0x8] sm:$0xc0]
    %v3344 = vld [vmem:[#allocation2 + $0x10] sm:$0xc0]
    %v3345 = vld [vmem:[#allocation2 + $0x18] sm:$0xc0]
    %3346 = vmatprep.subr.bf16.mxu0 %v2213
    %3347 = vmatpush1.bf16.msra.mxu0 %v2212
    %3348 = vmatprep.subr.bf16.mxu0 %v2209
    %3349 = vmatpush1.bf16.msra.mxu0 %v2208
    %3350 = vmatprep.subr.bf16.mxu0 %v2205
    %3351 = vmatpush1.bf16.msra.mxu0 %v2204
    %3352 = vmatprep.subr.bf16.mxu0 %v2201
    %3353 = vmatpush1.bf16.msra.mxu0 %v2200
    %3354 = vmatprep.subr.bf16.mxu0 %v2197
    %3355 = vmatpush1.bf16.msra.mxu0 %v2196
    %3356 = vmatprep.subr.bf16.mxu0 %v2193
    %3357 = vmatpush1.bf16.msra.mxu0 %v2192
    %3358 = vmatprep.subr.bf16.mxu0 %v2189
    %3359 = vmatpush1.bf16.msra.mxu0 %v2188
    %3360 = vmatprep.subr.bf16.mxu0 %v2185
    %3361 = vmatpush1.bf16.msra.mxu0 %v2184
    %3362 = vmatprep.subr.bf16.mxu0 0
    %3363 = vmatpush2.bf16.msra.mxu0 0
    %3364 = vmatprep.subr.bf16.mxu0 0
    %3365 = vmatpush2.bf16.msra.mxu0 0
    %3366 = vmatprep.subr.bf16.mxu0 0
    %3367 = vmatpush2.bf16.msra.mxu0 0
    %3368 = vmatprep.subr.bf16.mxu0 0
    %3369 = vmatpush2.bf16.msra.mxu0 0
    %3370 = vmatprep.subr.bf16.mxu0 0
    %3371 = vmatpush2.bf16.msra.mxu0 0
    %3372 = vmatprep.subr.bf16.mxu0 0
    %3373 = vmatpush2.bf16.msra.mxu0 0
    %3374 = vmatprep.subr.bf16.mxu0 0
    %3375 = vmatpush2.bf16.msra.mxu0 0
    %3376 = vmatprep.subr.bf16.mxu0 0
    %3377 = vmatpush2.bf16.msra.mxu0 0
    %3378 = vmatprep.mubr.bf16.mxu0 0
    %3379 = vmatmul.mubr.bf16.gmra.mxu0 %v3232
    %v3380 = vpop.f32.mrf.mxu0
    %v3381 = vadd.f32 0.0, %v3380
    %v3382 = vpop.f32.mrf.mxu0
    %v3383 = vadd.f32 0.0, %v3382
    %v3384 = vpop.f32.mrf.mxu0
    %v3385 = vpop.f32.mrf.mxu0
    %3386 = vdwg.mxu0
    %3387 = vmatprep.subr.bf16.mxu0 %v2215
    %3388 = vmatpush1.bf16.msra.mxu0 %v2214
    %3389 = vmatprep.subr.bf16.mxu0 %v2211
    %3390 = vmatpush1.bf16.msra.mxu0 %v2210
    %3391 = vmatprep.subr.bf16.mxu0 %v2207
    %3392 = vmatpush1.bf16.msra.mxu0 %v2206
    %3393 = vmatprep.subr.bf16.mxu0 %v2203
    %3394 = vmatpush1.bf16.msra.mxu0 %v2202
    %3395 = vmatprep.subr.bf16.mxu0 %v2199
    %3396 = vmatpush1.bf16.msra.mxu0 %v2198
    %3397 = vmatprep.subr.bf16.mxu0 %v2195
    %3398 = vmatpush1.bf16.msra.mxu0 %v2194
    %3399 = vmatprep.subr.bf16.mxu0 %v2191
    %3400 = vmatpush1.bf16.msra.mxu0 %v2190
    %3401 = vmatprep.subr.bf16.mxu0 %v2187
    %3402 = vmatpush1.bf16.msra.mxu0 %v2186
    %3403 = vmatprep.subr.bf16.mxu0 0
    %3404 = vmatpush2.bf16.msra.mxu0 0
    %3405 = vmatprep.subr.bf16.mxu0 0
    %3406 = vmatpush2.bf16.msra.mxu0 0
    %3407 = vmatprep.subr.bf16.mxu0 0
    %3408 = vmatpush2.bf16.msra.mxu0 0
    %3409 = vmatprep.subr.bf16.mxu0 0
    %3410 = vmatpush2.bf16.msra.mxu0 0
    %3411 = vmatprep.subr.bf16.mxu0 0
    %3412 = vmatpush2.bf16.msra.mxu0 0
    %3413 = vmatprep.subr.bf16.mxu0 0
    %3414 = vmatpush2.bf16.msra.mxu0 0
    %3415 = vmatprep.subr.bf16.mxu0 0
    %3416 = vmatpush2.bf16.msra.mxu0 0
    %3417 = vmatprep.subr.bf16.mxu0 0
    %3418 = vmatpush2.bf16.msra.mxu0 0
    %3419 = vmatprep.mubr.bf16.mxu0 0
    %3420 = vmatmul.mubr.bf16.gmra.mxu0 %v3232
    %v3421 = vpop.f32.mrf.mxu0
    %v3422 = vadd.f32 0.0, %v3421
    %v3423 = vpop.f32.mrf.mxu0
    %v3424 = vadd.f32 0.0, %v3423
    %v3425 = vpop.f32.mrf.mxu0
    %v3426 = vpop.f32.mrf.mxu0
    %3427 = vdwg.mxu0
    %v3432 = vrot.slane %v3381, 2
    %v3433 = vrot.slane %v3383, 2
    %v3434 = vrot.slane %v3422, 2
    %v3435 = vrot.slane %v3424, 2
    %v3440 = vadd.f32 %v3342, %v3432
    %v3441 = vadd.f32 %v3343, %v3433
    %v3442 = vadd.f32 %v3344, %v3434
    %v3443 = vadd.f32 %v3345, %v3435
    %v3444 = vxor.u32 %v3440, 2147483648
    %v3445 = vmul.f32 %v3444, 1.442695
    %v3446 = vpow.pop %v3445
    %v3447 = vadd.f32 %v3446, 1.0
    %v3448 = vrcp.pop %v3447
    %v3449 = vmul.f32 1.0, %v3448
    %v3450 = vxor.u32 %v3441, 2147483648
    %v3451 = vmul.f32 %v3450, 1.442695
    %v3452 = vpow.pop %v3451
    %v3453 = vadd.f32 %v3452, 1.0
    %v3454 = vrcp.pop %v3453
    %v3455 = vmul.f32 1.0, %v3454
    %v3456 = vtanh.pop %v3442
    %v3457 = vxor.u32 %v3443, 2147483648
    %v3458 = vmul.f32 %v3457, 1.442695
    %v3459 = vpow.pop %v3458
    %v3460 = vadd.f32 %v3459, 1.0
    %v3461 = vrcp.pop %v3460
    %v3462 = vmul.f32 1.0, %v3461
    %v3464 = vrot.slane %v3222, 6
    %v3466 = vmul.f32 %v3455, %v3464
    %v3467 = vmul.f32 %v3449, %v3456
    %v3468 = vadd.f32 %v3466, %v3467
    %v3469 = vtanh.pop %v3468
    %v3470 = vmul.f32 %v3462, %v3469
    %v3472 = vrot.slane %v3341, 2
    %v3474 = vpack.c.bf16 %v3470, %v3470
    %v3475 = vpack.c.bf16 %v3472, %v3472
    %v3478 = vrot.slane %v3474, 3
    %v3479 = vrot.slane %v3475, 3
    %3482 = vmatprep.subr.bf16.mxu0 %v2645
    %3483 = vmatpush1.bf16.msra.mxu0 %v2644
    %3484 = vmatprep.subr.bf16.mxu0 %v2641
    %3485 = vmatpush1.bf16.msra.mxu0 %v2640
    %3486 = vmatprep.subr.bf16.mxu0 %v2637
    %3487 = vmatpush1.bf16.msra.mxu0 %v2636
    %3488 = vmatprep.subr.bf16.mxu0 %v2633
    %3489 = vmatpush1.bf16.msra.mxu0 %v2632
    %3490 = vmatprep.subr.bf16.mxu0 %v2629
    %3491 = vmatpush1.bf16.msra.mxu0 %v2628
    %3492 = vmatprep.subr.bf16.mxu0 %v2625
    %3493 = vmatpush1.bf16.msra.mxu0 %v2624
    %3494 = vmatprep.subr.bf16.mxu0 %v2621
    %3495 = vmatpush1.bf16.msra.mxu0 %v2620
    %3496 = vmatprep.subr.bf16.mxu0 %v2617
    %3497 = vmatpush1.bf16.msra.mxu0 %v2616
    %3498 = vmatprep.subr.bf16.mxu0 %v2677
    %3499 = vmatpush2.bf16.msra.mxu0 %v2676
    %3500 = vmatprep.subr.bf16.mxu0 %v2673
    %3501 = vmatpush2.bf16.msra.mxu0 %v2672
    %3502 = vmatprep.subr.bf16.mxu0 %v2669
    %3503 = vmatpush2.bf16.msra.mxu0 %v2668
    %3504 = vmatprep.subr.bf16.mxu0 %v2665
    %3505 = vmatpush2.bf16.msra.mxu0 %v2664
    %3506 = vmatprep.subr.bf16.mxu0 %v2661
    %3507 = vmatpush2.bf16.msra.mxu0 %v2660
    %3508 = vmatprep.subr.bf16.mxu0 %v2657
    %3509 = vmatpush2.bf16.msra.mxu0 %v2656
    %3510 = vmatprep.subr.bf16.mxu0 %v2653
    %3511 = vmatpush2.bf16.msra.mxu0 %v2652
    %3512 = vmatprep.subr.bf16.mxu0 %v2649
    %3513 = vmatpush2.bf16.msra.mxu0 %v2648
    %3514 = vmatprep.mubr.bf16.mxu0 %v3479
    %3515 = vmatmul.mubr.bf16.gmra.mxu0 %v3478
    %v3516 = vpop.f32.mrf.mxu0
    %v3517 = vadd.f32 %v2035, %v3516
    %v3518 = vpop.f32.mrf.mxu0
    %v3519 = vadd.f32 %v2039, %v3518
    %v3520 = vpop.f32.mrf.mxu0
    %v3521 = vpop.f32.mrf.mxu0
    %3522 = vdwg.mxu0
    %3523 = vmatprep.subr.bf16.mxu0 %v2647
    %3524 = vmatpush1.bf16.msra.mxu0 %v2646
    %3525 = vmatprep.subr.bf16.mxu0 %v2643
    %3526 = vmatpush1.bf16.msra.mxu0 %v2642
    %3527 = vmatprep.subr.bf16.mxu0 %v2639
    %3528 = vmatpush1.bf16.msra.mxu0 %v2638
    %3529 = vmatprep.subr.bf16.mxu0 %v2635
    %3530 = vmatpush1.bf16.msra.mxu0 %v2634
    %3531 = vmatprep.subr.bf16.mxu0 %v2631
    %3532 = vmatpush1.bf16.msra.mxu0 %v2630
    %3533 = vmatprep.subr.bf16.mxu0 %v2627
    %3534 = vmatpush1.bf16.msra.mxu0 %v2626
    %3535 = vmatprep.subr.bf16.mxu0 %v2623
    %3536 = vmatpush1.bf16.msra.mxu0 %v2622
    %3537 = vmatprep.subr.bf16.mxu0 %v2619
    %3538 = vmatpush1.bf16.msra.mxu0 %v2618
    %3539 = vmatprep.subr.bf16.mxu0 %v2679
    %3540 = vmatpush2.bf16.msra.mxu0 %v2678
    %3541 = vmatprep.subr.bf16.mxu0 %v2675
    %3542 = vmatpush2.bf16.msra.mxu0 %v2674
    %3543 = vmatprep.subr.bf16.mxu0 %v2671
    %3544 = vmatpush2.bf16.msra.mxu0 %v2670
    %3545 = vmatprep.subr.bf16.mxu0 %v2667
    %3546 = vmatpush2.bf16.msra.mxu0 %v2666
    %3547 = vmatprep.subr.bf16.mxu0 %v2663
    %3548 = vmatpush2.bf16.msra.mxu0 %v2662
    %3549 = vmatprep.subr.bf16.mxu0 %v2659
    %3550 = vmatpush2.bf16.msra.mxu0 %v2658
    %3551 = vmatprep.subr.bf16.mxu0 %v2655
    %3552 = vmatpush2.bf16.msra.mxu0 %v2654
    %3553 = vmatprep.subr.bf16.mxu0 %v2651
    %3554 = vmatpush2.bf16.msra.mxu0 %v2650
    %3555 = vmatprep.mubr.bf16.mxu0 %v3479
    %3556 = vmatmul.mubr.bf16.gmra.mxu0 %v3478
    %v3557 = vpop.f32.mrf.mxu0
    %v3558 = vadd.f32 %v2043, %v3557
    %v3559 = vpop.f32.mrf.mxu0
    %v3560 = vadd.f32 %v2047, %v3559
    %v3561 = vpop.f32.mrf.mxu0
    %v3562 = vpop.f32.mrf.mxu0
    %3563 = vdwg.mxu0
    %v3564 = vxor.u32 %v3517, 2147483648
    %v3565 = vmul.f32 %v3564, 1.442695
    %v3566 = vpow.pop %v3565
    %v3567 = vadd.f32 %v3566, 1.0
    %v3568 = vrcp.pop %v3567
    %v3569 = vmul.f32 1.0, %v3568
    %v3570 = vxor.u32 %v3519, 2147483648
    %v3571 = vmul.f32 %v3570, 1.442695
    %v3572 = vpow.pop %v3571
    %v3573 = vadd.f32 %v3572, 1.0
    %v3574 = vrcp.pop %v3573
    %v3575 = vmul.f32 1.0, %v3574
    %v3576 = vtanh.pop %v3558
    %v3577 = vxor.u32 %v3560, 2147483648
    %v3578 = vmul.f32 %v3577, 1.442695
    %v3579 = vpow.pop %v3578
    %v3580 = vadd.f32 %v3579, 1.0
    %v3581 = vrcp.pop %v3580
    %v3582 = vmul.f32 1.0, %v3581
    %v3583 = vmul.f32 %v3575, %v3339
    %v3584 = vmul.f32 %v3569, %v3576
    %v3585 = vadd.f32 %v3583, %v3584
    %v3586 = vtanh.pop %v3585
    %v3587 = vmul.f32 %v3582, %v3586
    %v3588 = vld [vmem:[#allocation2 + $0x20] sm:$0x3]
    %v3589 = vld [vmem:[#allocation2 + $0x28] sm:$0x3]
    %v3590 = vld [vmem:[#allocation2 + $0x30] sm:$0x3]
    %v3591 = vld [vmem:[#allocation2 + $0x38] sm:$0x3]
    %3592 = vmatprep.subr.bf16.mxu0 %v2213
    %3593 = vmatpush1.bf16.msra.mxu0 %v2212
    %3594 = vmatprep.subr.bf16.mxu0 %v2209
    %3595 = vmatpush1.bf16.msra.mxu0 %v2208
    %3596 = vmatprep.subr.bf16.mxu0 %v2205
    %3597 = vmatpush1.bf16.msra.mxu0 %v2204
    %3598 = vmatprep.subr.bf16.mxu0 %v2201
    %3599 = vmatpush1.bf16.msra.mxu0 %v2200
    %3600 = vmatprep.subr.bf16.mxu0 %v2197
    %3601 = vmatpush1.bf16.msra.mxu0 %v2196
    %3602 = vmatprep.subr.bf16.mxu0 %v2193
    %3603 = vmatpush1.bf16.msra.mxu0 %v2192
    %3604 = vmatprep.subr.bf16.mxu0 %v2189
    %3605 = vmatpush1.bf16.msra.mxu0 %v2188
    %3606 = vmatprep.subr.bf16.mxu0 %v2185
    %3607 = vmatpush1.bf16.msra.mxu0 %v2184
    %3608 = vmatprep.subr.bf16.mxu0 0
    %3609 = vmatpush2.bf16.msra.mxu0 0
    %3610 = vmatprep.subr.bf16.mxu0 0
    %3611 = vmatpush2.bf16.msra.mxu0 0
    %3612 = vmatprep.subr.bf16.mxu0 0
    %3613 = vmatpush2.bf16.msra.mxu0 0
    %3614 = vmatprep.subr.bf16.mxu0 0
    %3615 = vmatpush2.bf16.msra.mxu0 0
    %3616 = vmatprep.subr.bf16.mxu0 0
    %3617 = vmatpush2.bf16.msra.mxu0 0
    %3618 = vmatprep.subr.bf16.mxu0 0
    %3619 = vmatpush2.bf16.msra.mxu0 0
    %3620 = vmatprep.subr.bf16.mxu0 0
    %3621 = vmatpush2.bf16.msra.mxu0 0
    %3622 = vmatprep.subr.bf16.mxu0 0
    %3623 = vmatpush2.bf16.msra.mxu0 0
    %3624 = vmatprep.mubr.bf16.mxu0 0
    %3625 = vmatmul.mubr.bf16.gmra.mxu0 %v3478
    %v3626 = vpop.f32.mrf.mxu0
    %v3627 = vadd.f32 0.0, %v3626
    %v3628 = vpop.f32.mrf.mxu0
    %v3629 = vadd.f32 0.0, %v3628
    %v3630 = vpop.f32.mrf.mxu0
    %v3631 = vpop.f32.mrf.mxu0
    %3632 = vdwg.mxu0
    %3633 = vmatprep.subr.bf16.mxu0 %v2215
    %3634 = vmatpush1.bf16.msra.mxu0 %v2214
    %3635 = vmatprep.subr.bf16.mxu0 %v2211
    %3636 = vmatpush1.bf16.msra.mxu0 %v2210
    %3637 = vmatprep.subr.bf16.mxu0 %v2207
    %3638 = vmatpush1.bf16.msra.mxu0 %v2206
    %3639 = vmatprep.subr.bf16.mxu0 %v2203
    %3640 = vmatpush1.bf16.msra.mxu0 %v2202
    %3641 = vmatprep.subr.bf16.mxu0 %v2199
    %3642 = vmatpush1.bf16.msra.mxu0 %v2198
    %3643 = vmatprep.subr.bf16.mxu0 %v2195
    %3644 = vmatpush1.bf16.msra.mxu0 %v2194
    %3645 = vmatprep.subr.bf16.mxu0 %v2191
    %3646 = vmatpush1.bf16.msra.mxu0 %v2190
    %3647 = vmatprep.subr.bf16.mxu0 %v2187
    %3648 = vmatpush1.bf16.msra.mxu0 %v2186
    %3649 = vmatprep.subr.bf16.mxu0 0
    %3650 = vmatpush2.bf16.msra.mxu0 0
    %3651 = vmatprep.subr.bf16.mxu0 0
    %3652 = vmatpush2.bf16.msra.mxu0 0
    %3653 = vmatprep.subr.bf16.mxu0 0
    %3654 = vmatpush2.bf16.msra.mxu0 0
    %3655 = vmatprep.subr.bf16.mxu0 0
    %3656 = vmatpush2.bf16.msra.mxu0 0
    %3657 = vmatprep.subr.bf16.mxu0 0
    %3658 = vmatpush2.bf16.msra.mxu0 0
    %3659 = vmatprep.subr.bf16.mxu0 0
    %3660 = vmatpush2.bf16.msra.mxu0 0
    %3661 = vmatprep.subr.bf16.mxu0 0
    %3662 = vmatpush2.bf16.msra.mxu0 0
    %3663 = vmatprep.subr.bf16.mxu0 0
    %3664 = vmatpush2.bf16.msra.mxu0 0
    %3665 = vmatprep.mubr.bf16.mxu0 0
    %3666 = vmatmul.mubr.bf16.gmra.mxu0 %v3478
    %v3667 = vpop.f32.mrf.mxu0
    %v3668 = vadd.f32 0.0, %v3667
    %v3669 = vpop.f32.mrf.mxu0
    %v3670 = vadd.f32 0.0, %v3669
    %v3671 = vpop.f32.mrf.mxu0
    %v3672 = vpop.f32.mrf.mxu0
    %3673 = vdwg.mxu0
    %v3674 = vadd.f32 %v3588, %v3627
    %v3675 = vadd.f32 %v3589, %v3629
    %v3676 = vadd.f32 %v3590, %v3668
    %v3677 = vadd.f32 %v3591, %v3670
    %v3678 = vxor.u32 %v3674, 2147483648
    %v3679 = vmul.f32 %v3678, 1.442695
    %v3680 = vpow.pop %v3679
    %v3681 = vadd.f32 %v3680, 1.0
    %v3682 = vrcp.pop %v3681
    %v3683 = vmul.f32 1.0, %v3682
    %v3684 = vxor.u32 %v3675, 2147483648
    %v3685 = vmul.f32 %v3684, 1.442695
    %v3686 = vpow.pop %v3685
    %v3687 = vadd.f32 %v3686, 1.0
    %v3688 = vrcp.pop %v3687
    %v3689 = vmul.f32 1.0, %v3688
    %v3690 = vtanh.pop %v3676
    %v3691 = vxor.u32 %v3677, 2147483648
    %v3692 = vmul.f32 %v3691, 1.442695
    %v3693 = vpow.pop %v3692
    %v3694 = vadd.f32 %v3693, 1.0
    %v3695 = vrcp.pop %v3694
    %v3696 = vmul.f32 1.0, %v3695
    %v3698 = vrot.slane %v3468, 6
    %v3700 = vmul.f32 %v3689, %v3698
    %v3701 = vmul.f32 %v3683, %v3690
    %v3702 = vadd.f32 %v3700, %v3701
    %v3703 = vtanh.pop %v3702
    %v3704 = vmul.f32 %v3696, %v3703
    %v3705 = vpack.c.bf16 %v3704, %v3704
    %v3706 = vpack.c.bf16 %v3587, %v3587
    %3707 = vmatprep.subr.bf16.mxu0 %v2645
    %3708 = vmatpush1.bf16.msra.mxu0 %v2644
    %3709 = vmatprep.subr.bf16.mxu0 %v2641
    %3710 = vmatpush1.bf16.msra.mxu0 %v2640
    %3711 = vmatprep.subr.bf16.mxu0 %v2637
    %3712 = vmatpush1.bf16.msra.mxu0 %v2636
    %3713 = vmatprep.subr.bf16.mxu0 %v2633
    %3714 = vmatpush1.bf16.msra.mxu0 %v2632
    %3715 = vmatprep.subr.bf16.mxu0 %v2629
    %3716 = vmatpush1.bf16.msra.mxu0 %v2628
    %3717 = vmatprep.subr.bf16.mxu0 %v2625
    %3718 = vmatpush1.bf16.msra.mxu0 %v2624
    %3719 = vmatprep.subr.bf16.mxu0 %v2621
    %3720 = vmatpush1.bf16.msra.mxu0 %v2620
    %3721 = vmatprep.subr.bf16.mxu0 %v2617
    %3722 = vmatpush1.bf16.msra.mxu0 %v2616
    %3723 = vmatprep.subr.bf16.mxu0 %v2677
    %3724 = vmatpush2.bf16.msra.mxu0 %v2676
    %3725 = vmatprep.subr.bf16.mxu0 %v2673
    %3726 = vmatpush2.bf16.msra.mxu0 %v2672
    %3727 = vmatprep.subr.bf16.mxu0 %v2669
    %3728 = vmatpush2.bf16.msra.mxu0 %v2668
    %3729 = vmatprep.subr.bf16.mxu0 %v2665
    %3730 = vmatpush2.bf16.msra.mxu0 %v2664
    %3731 = vmatprep.subr.bf16.mxu0 %v2661
    %3732 = vmatpush2.bf16.msra.mxu0 %v2660
    %3733 = vmatprep.subr.bf16.mxu0 %v2657
    %3734 = vmatpush2.bf16.msra.mxu0 %v2656
    %3735 = vmatprep.subr.bf16.mxu0 %v2653
    %3736 = vmatpush2.bf16.msra.mxu0 %v2652
    %3737 = vmatprep.subr.bf16.mxu0 %v2649
    %3738 = vmatpush2.bf16.msra.mxu0 %v2648
    %3739 = vmatprep.mubr.bf16.mxu0 %v3706
    %3740 = vmatmul.mubr.bf16.gmra.mxu0 %v3705
    %v3741 = vpop.f32.mrf.mxu0
    %v3742 = vadd.f32 %v2035, %v3741
    %v3743 = vpop.f32.mrf.mxu0
    %v3744 = vadd.f32 %v2039, %v3743
    %v3745 = vpop.f32.mrf.mxu0
    %v3746 = vpop.f32.mrf.mxu0
    %3747 = vdwg.mxu0
    %3748 = vmatprep.subr.bf16.mxu0 %v2647
    %3749 = vmatpush1.bf16.msra.mxu0 %v2646
    %3750 = vmatprep.subr.bf16.mxu0 %v2643
    %3751 = vmatpush1.bf16.msra.mxu0 %v2642
    %3752 = vmatprep.subr.bf16.mxu0 %v2639
    %3753 = vmatpush1.bf16.msra.mxu0 %v2638
    %3754 = vmatprep.subr.bf16.mxu0 %v2635
    %3755 = vmatpush1.bf16.msra.mxu0 %v2634
    %3756 = vmatprep.subr.bf16.mxu0 %v2631
    %3757 = vmatpush1.bf16.msra.mxu0 %v2630
    %3758 = vmatprep.subr.bf16.mxu0 %v2627
    %3759 = vmatpush1.bf16.msra.mxu0 %v2626
    %3760 = vmatprep.subr.bf16.mxu0 %v2623
    %3761 = vmatpush1.bf16.msra.mxu0 %v2622
    %3762 = vmatprep.subr.bf16.mxu0 %v2619
    %3763 = vmatpush1.bf16.msra.mxu0 %v2618
    %3764 = vmatprep.subr.bf16.mxu0 %v2679
    %3765 = vmatpush2.bf16.msra.mxu0 %v2678
    %3766 = vmatprep.subr.bf16.mxu0 %v2675
    %3767 = vmatpush2.bf16.msra.mxu0 %v2674
    %3768 = vmatprep.subr.bf16.mxu0 %v2671
    %3769 = vmatpush2.bf16.msra.mxu0 %v2670
    %3770 = vmatprep.subr.bf16.mxu0 %v2667
    %3771 = vmatpush2.bf16.msra.mxu0 %v2666
    %3772 = vmatprep.subr.bf16.mxu0 %v2663
    %3773 = vmatpush2.bf16.msra.mxu0 %v2662
    %3774 = vmatprep.subr.bf16.mxu0 %v2659
    %3775 = vmatpush2.bf16.msra.mxu0 %v2658
    %3776 = vmatprep.subr.bf16.mxu0 %v2655
    %3777 = vmatpush2.bf16.msra.mxu0 %v2654
    %3778 = vmatprep.subr.bf16.mxu0 %v2651
    %3779 = vmatpush2.bf16.msra.mxu0 %v2650
    %3780 = vmatprep.mubr.bf16.mxu0 %v3706
    %3781 = vmatmul.mubr.bf16.gmra.mxu0 %v3705
    %v3782 = vpop.f32.mrf.mxu0
    %v3783 = vadd.f32 %v2043, %v3782
    %v3784 = vpop.f32.mrf.mxu0
    %v3785 = vadd.f32 %v2047, %v3784
    %v3786 = vpop.f32.mrf.mxu0
    %v3787 = vpop.f32.mrf.mxu0
    %3788 = vdwg.mxu0
    %v3789 = vxor.u32 %v3742, 2147483648
    %v3790 = vmul.f32 %v3789, 1.442695
    %v3791 = vpow.pop %v3790
    %v3792 = vadd.f32 %v3791, 1.0
    %v3793 = vrcp.pop %v3792
    %v3794 = vmul.f32 1.0, %v3793
    %v3795 = vxor.u32 %v3744, 2147483648
    %v3796 = vmul.f32 %v3795, 1.442695
    %v3797 = vpow.pop %v3796
    %v3798 = vadd.f32 %v3797, 1.0
    %v3799 = vrcp.pop %v3798
    %v3800 = vmul.f32 1.0, %v3799
    %v3801 = vtanh.pop %v3783
    %v3802 = vxor.u32 %v3785, 2147483648
    %v3803 = vmul.f32 %v3802, 1.442695
    %v3804 = vpow.pop %v3803
    %v3805 = vadd.f32 %v3804, 1.0
    %v3806 = vrcp.pop %v3805
    %v3807 = vmul.f32 1.0, %v3806
    %v3808 = vmul.f32 %v3800, %v3585
    %v3809 = vmul.f32 %v3794, %v3801
    %v3810 = vadd.f32 %v3808, %v3809
    %v3811 = vtanh.pop %v3810
    %v3812 = vmul.f32 %v3807, %v3811
    %v3813 = vld [vmem:[#allocation2 + $0x20] sm:$0xc]
    %v3814 = vld [vmem:[#allocation2 + $0x28] sm:$0xc]
    %v3815 = vld [vmem:[#allocation2 + $0x30] sm:$0xc]
    %v3816 = vld [vmem:[#allocation2 + $0x38] sm:$0xc]
    %3817 = vmatprep.subr.bf16.mxu0 %v2213
    %3818 = vmatpush1.bf16.msra.mxu0 %v2212
    %3819 = vmatprep.subr.bf16.mxu0 %v2209
    %3820 = vmatpush1.bf16.msra.mxu0 %v2208
    %3821 = vmatprep.subr.bf16.mxu0 %v2205
    %3822 = vmatpush1.bf16.msra.mxu0 %v2204
    %3823 = vmatprep.subr.bf16.mxu0 %v2201
    %3824 = vmatpush1.bf16.msra.mxu0 %v2200
    %3825 = vmatprep.subr.bf16.mxu0 %v2197
    %3826 = vmatpush1.bf16.msra.mxu0 %v2196
    %3827 = vmatprep.subr.bf16.mxu0 %v2193
    %3828 = vmatpush1.bf16.msra.mxu0 %v2192
    %3829 = vmatprep.subr.bf16.mxu0 %v2189
    %3830 = vmatpush1.bf16.msra.mxu0 %v2188
    %3831 = vmatprep.subr.bf16.mxu0 %v2185
    %3832 = vmatpush1.bf16.msra.mxu0 %v2184
    %3833 = vmatprep.subr.bf16.mxu0 0
    %3834 = vmatpush2.bf16.msra.mxu0 0
    %3835 = vmatprep.subr.bf16.mxu0 0
    %3836 = vmatpush2.bf16.msra.mxu0 0
    %3837 = vmatprep.subr.bf16.mxu0 0
    %3838 = vmatpush2.bf16.msra.mxu0 0
    %3839 = vmatprep.subr.bf16.mxu0 0
    %3840 = vmatpush2.bf16.msra.mxu0 0
    %3841 = vmatprep.subr.bf16.mxu0 0
    %3842 = vmatpush2.bf16.msra.mxu0 0
    %3843 = vmatprep.subr.bf16.mxu0 0
    %3844 = vmatpush2.bf16.msra.mxu0 0
    %3845 = vmatprep.subr.bf16.mxu0 0
    %3846 = vmatpush2.bf16.msra.mxu0 0
    %3847 = vmatprep.subr.bf16.mxu0 0
    %3848 = vmatpush2.bf16.msra.mxu0 0
    %3849 = vmatprep.mubr.bf16.mxu0 0
    %3850 = vmatmul.mubr.bf16.gmra.mxu0 %v3705
    %v3851 = vpop.f32.mrf.mxu0
    %v3852 = vadd.f32 0.0, %v3851
    %v3853 = vpop.f32.mrf.mxu0
    %v3854 = vadd.f32 0.0, %v3853
    %v3855 = vpop.f32.mrf.mxu0
    %v3856 = vpop.f32.mrf.mxu0
    %3857 = vdwg.mxu0
    %3858 = vmatprep.subr.bf16.mxu0 %v2215
    %3859 = vmatpush1.bf16.msra.mxu0 %v2214
    %3860 = vmatprep.subr.bf16.mxu0 %v2211
    %3861 = vmatpush1.bf16.msra.mxu0 %v2210
    %3862 = vmatprep.subr.bf16.mxu0 %v2207
    %3863 = vmatpush1.bf16.msra.mxu0 %v2206
    %3864 = vmatprep.subr.bf16.mxu0 %v2203
    %3865 = vmatpush1.bf16.msra.mxu0 %v2202
    %3866 = vmatprep.subr.bf16.mxu0 %v2199
    %3867 = vmatpush1.bf16.msra.mxu0 %v2198
    %3868 = vmatprep.subr.bf16.mxu0 %v2195
    %3869 = vmatpush1.bf16.msra.mxu0 %v2194
    %3870 = vmatprep.subr.bf16.mxu0 %v2191
    %3871 = vmatpush1.bf16.msra.mxu0 %v2190
    %3872 = vmatprep.subr.bf16.mxu0 %v2187
    %3873 = vmatpush1.bf16.msra.mxu0 %v2186
    %3874 = vmatprep.subr.bf16.mxu0 0
    %3875 = vmatpush2.bf16.msra.mxu0 0
    %3876 = vmatprep.subr.bf16.mxu0 0
    %3877 = vmatpush2.bf16.msra.mxu0 0
    %3878 = vmatprep.subr.bf16.mxu0 0
    %3879 = vmatpush2.bf16.msra.mxu0 0
    %3880 = vmatprep.subr.bf16.mxu0 0
    %3881 = vmatpush2.bf16.msra.mxu0 0
    %3882 = vmatprep.subr.bf16.mxu0 0
    %3883 = vmatpush2.bf16.msra.mxu0 0
    %3884 = vmatprep.subr.bf16.mxu0 0
    %3885 = vmatpush2.bf16.msra.mxu0 0
    %3886 = vmatprep.subr.bf16.mxu0 0
    %3887 = vmatpush2.bf16.msra.mxu0 0
    %3888 = vmatprep.subr.bf16.mxu0 0
    %3889 = vmatpush2.bf16.msra.mxu0 0
    %3890 = vmatprep.mubr.bf16.mxu0 0
    %3891 = vmatmul.mubr.bf16.gmra.mxu0 %v3705
    %v3892 = vpop.f32.mrf.mxu0
    %v3893 = vadd.f32 0.0, %v3892
    %v3894 = vpop.f32.mrf.mxu0
    %v3895 = vadd.f32 0.0, %v3894
    %v3896 = vpop.f32.mrf.mxu0
    %v3897 = vpop.f32.mrf.mxu0
    %3898 = vdwg.mxu0
    %v3903 = vrot.slane %v3852, 6
    %v3904 = vrot.slane %v3854, 6
    %v3905 = vrot.slane %v3893, 6
    %v3906 = vrot.slane %v3895, 6
    %v3911 = vadd.f32 %v3813, %v3903
    %v3912 = vadd.f32 %v3814, %v3904
    %v3913 = vadd.f32 %v3815, %v3905
    %v3914 = vadd.f32 %v3816, %v3906
    %v3915 = vxor.u32 %v3911, 2147483648
    %v3916 = vmul.f32 %v3915, 1.442695
    %v3917 = vpow.pop %v3916
    %v3918 = vadd.f32 %v3917, 1.0
    %v3919 = vrcp.pop %v3918
    %v3920 = vmul.f32 1.0, %v3919
    %v3921 = vxor.u32 %v3912, 2147483648
    %v3922 = vmul.f32 %v3921, 1.442695
    %v3923 = vpow.pop %v3922
    %v3924 = vadd.f32 %v3923, 1.0
    %v3925 = vrcp.pop %v3924
    %v3926 = vmul.f32 1.0, %v3925
    %v3927 = vtanh.pop %v3913
    %v3928 = vxor.u32 %v3914, 2147483648
    %v3929 = vmul.f32 %v3928, 1.442695
    %v3930 = vpow.pop %v3929
    %v3931 = vadd.f32 %v3930, 1.0
    %v3932 = vrcp.pop %v3931
    %v3933 = vmul.f32 1.0, %v3932
    %v3935 = vrot.slane %v3702, 6
    %v3937 = vmul.f32 %v3926, %v3935
    %v3938 = vmul.f32 %v3920, %v3927
    %v3939 = vadd.f32 %v3937, %v3938
    %v3940 = vtanh.pop %v3939
    %v3941 = vmul.f32 %v3933, %v3940
    %v3943 = vrot.slane %v3812, 6
    %v3945 = vpack.c.bf16 %v3941, %v3941
    %v3946 = vpack.c.bf16 %v3943, %v3943
    %v3949 = vrot.slane %v3945, 1
    %v3950 = vrot.slane %v3946, 1
    %3953 = vmatprep.subr.bf16.mxu0 %v2645
    %3954 = vmatpush1.bf16.msra.mxu0 %v2644
    %3955 = vmatprep.subr.bf16.mxu0 %v2641
    %3956 = vmatpush1.bf16.msra.mxu0 %v2640
    %3957 = vmatprep.subr.bf16.mxu0 %v2637
    %3958 = vmatpush1.bf16.msra.mxu0 %v2636
    %3959 = vmatprep.subr.bf16.mxu0 %v2633
    %3960 = vmatpush1.bf16.msra.mxu0 %v2632
    %3961 = vmatprep.subr.bf16.mxu0 %v2629
    %3962 = vmatpush1.bf16.msra.mxu0 %v2628
    %3963 = vmatprep.subr.bf16.mxu0 %v2625
    %3964 = vmatpush1.bf16.msra.mxu0 %v2624
    %3965 = vmatprep.subr.bf16.mxu0 %v2621
    %3966 = vmatpush1.bf16.msra.mxu0 %v2620
    %3967 = vmatprep.subr.bf16.mxu0 %v2617
    %3968 = vmatpush1.bf16.msra.mxu0 %v2616
    %3969 = vmatprep.subr.bf16.mxu0 %v2677
    %3970 = vmatpush2.bf16.msra.mxu0 %v2676
    %3971 = vmatprep.subr.bf16.mxu0 %v2673
    %3972 = vmatpush2.bf16.msra.mxu0 %v2672
    %3973 = vmatprep.subr.bf16.mxu0 %v2669
    %3974 = vmatpush2.bf16.msra.mxu0 %v2668
    %3975 = vmatprep.subr.bf16.mxu0 %v2665
    %3976 = vmatpush2.bf16.msra.mxu0 %v2664
    %3977 = vmatprep.subr.bf16.mxu0 %v2661
    %3978 = vmatpush2.bf16.msra.mxu0 %v2660
    %3979 = vmatprep.subr.bf16.mxu0 %v2657
    %3980 = vmatpush2.bf16.msra.mxu0 %v2656
    %3981 = vmatprep.subr.bf16.mxu0 %v2653
    %3982 = vmatpush2.bf16.msra.mxu0 %v2652
    %3983 = vmatprep.subr.bf16.mxu0 %v2649
    %3984 = vmatpush2.bf16.msra.mxu0 %v2648
    %3985 = vmatprep.mubr.bf16.mxu0 %v3950
    %3986 = vmatmul.mubr.bf16.gmra.mxu0 %v3949
    %v3987 = vpop.f32.mrf.mxu0
    %v3988 = vadd.f32 %v2035, %v3987
    %v3989 = vpop.f32.mrf.mxu0
    %v3990 = vadd.f32 %v2039, %v3989
    %v3991 = vpop.f32.mrf.mxu0
    %v3992 = vpop.f32.mrf.mxu0
    %3993 = vdwg.mxu0
    %3994 = vmatprep.subr.bf16.mxu0 %v2647
    %3995 = vmatpush1.bf16.msra.mxu0 %v2646
    %3996 = vmatprep.subr.bf16.mxu0 %v2643
    %3997 = vmatpush1.bf16.msra.mxu0 %v2642
    %3998 = vmatprep.subr.bf16.mxu0 %v2639
    %3999 = vmatpush1.bf16.msra.mxu0 %v2638
    %4000 = vmatprep.subr.bf16.mxu0 %v2635
    %4001 = vmatpush1.bf16.msra.mxu0 %v2634
    %4002 = vmatprep.subr.bf16.mxu0 %v2631
    %4003 = vmatpush1.bf16.msra.mxu0 %v2630
    %4004 = vmatprep.subr.bf16.mxu0 %v2627
    %4005 = vmatpush1.bf16.msra.mxu0 %v2626
    %4006 = vmatprep.subr.bf16.mxu0 %v2623
    %4007 = vmatpush1.bf16.msra.mxu0 %v2622
    %4008 = vmatprep.subr.bf16.mxu0 %v2619
    %4009 = vmatpush1.bf16.msra.mxu0 %v2618
    %4010 = vmatprep.subr.bf16.mxu0 %v2679
    %4011 = vmatpush2.bf16.msra.mxu0 %v2678
    %4012 = vmatprep.subr.bf16.mxu0 %v2675
    %4013 = vmatpush2.bf16.msra.mxu0 %v2674
    %4014 = vmatprep.subr.bf16.mxu0 %v2671
    %4015 = vmatpush2.bf16.msra.mxu0 %v2670
    %4016 = vmatprep.subr.bf16.mxu0 %v2667
    %4017 = vmatpush2.bf16.msra.mxu0 %v2666
    %4018 = vmatprep.subr.bf16.mxu0 %v2663
    %4019 = vmatpush2.bf16.msra.mxu0 %v2662
    %4020 = vmatprep.subr.bf16.mxu0 %v2659
    %4021 = vmatpush2.bf16.msra.mxu0 %v2658
    %4022 = vmatprep.subr.bf16.mxu0 %v2655
    %4023 = vmatpush2.bf16.msra.mxu0 %v2654
    %4024 = vmatprep.subr.bf16.mxu0 %v2651
    %4025 = vmatpush2.bf16.msra.mxu0 %v2650
    %4026 = vmatprep.mubr.bf16.mxu0 %v3950
    %4027 = vmatmul.mubr.bf16.gmra.mxu0 %v3949
    %v4028 = vpop.f32.mrf.mxu0
    %v4029 = vadd.f32 %v2043, %v4028
    %v4030 = vpop.f32.mrf.mxu0
    %v4031 = vadd.f32 %v2047, %v4030
    %v4032 = vpop.f32.mrf.mxu0
    %v4033 = vpop.f32.mrf.mxu0
    %4034 = vdwg.mxu0
    %v4035 = vxor.u32 %v3988, 2147483648
    %v4036 = vmul.f32 %v4035, 1.442695
    %v4037 = vpow.pop %v4036
    %v4038 = vadd.f32 %v4037, 1.0
    %v4039 = vrcp.pop %v4038
    %v4040 = vmul.f32 1.0, %v4039
    %v4041 = vxor.u32 %v3990, 2147483648
    %v4042 = vmul.f32 %v4041, 1.442695
    %v4043 = vpow.pop %v4042
    %v4044 = vadd.f32 %v4043, 1.0
    %v4045 = vrcp.pop %v4044
    %v4046 = vmul.f32 1.0, %v4045
    %v4047 = vtanh.pop %v4029
    %v4048 = vxor.u32 %v4031, 2147483648
    %v4049 = vmul.f32 %v4048, 1.442695
    %v4050 = vpow.pop %v4049
    %v4051 = vadd.f32 %v4050, 1.0
    %v4052 = vrcp.pop %v4051
    %v4053 = vmul.f32 1.0, %v4052
    %v4054 = vmul.f32 %v4046, %v3810
    %v4055 = vmul.f32 %v4040, %v4047
    %v4056 = vadd.f32 %v4054, %v4055
    %v4057 = vtanh.pop %v4056
    %v4058 = vmul.f32 %v4053, %v4057
    %v4059 = vld [vmem:[#allocation2 + $0x20] sm:$0x30]
    %v4060 = vld [vmem:[#allocation2 + $0x28] sm:$0x30]
    %v4061 = vld [vmem:[#allocation2 + $0x30] sm:$0x30]
    %v4062 = vld [vmem:[#allocation2 + $0x38] sm:$0x30]
    %4063 = vmatprep.subr.bf16.mxu0 %v2213
    %4064 = vmatpush1.bf16.msra.mxu0 %v2212
    %4065 = vmatprep.subr.bf16.mxu0 %v2209
    %4066 = vmatpush1.bf16.msra.mxu0 %v2208
    %4067 = vmatprep.subr.bf16.mxu0 %v2205
    %4068 = vmatpush1.bf16.msra.mxu0 %v2204
    %4069 = vmatprep.subr.bf16.mxu0 %v2201
    %4070 = vmatpush1.bf16.msra.mxu0 %v2200
    %4071 = vmatprep.subr.bf16.mxu0 %v2197
    %4072 = vmatpush1.bf16.msra.mxu0 %v2196
    %4073 = vmatprep.subr.bf16.mxu0 %v2193
    %4074 = vmatpush1.bf16.msra.mxu0 %v2192
    %4075 = vmatprep.subr.bf16.mxu0 %v2189
    %4076 = vmatpush1.bf16.msra.mxu0 %v2188
    %4077 = vmatprep.subr.bf16.mxu0 %v2185
    %4078 = vmatpush1.bf16.msra.mxu0 %v2184
    %4079 = vmatprep.subr.bf16.mxu0 0
    %4080 = vmatpush2.bf16.msra.mxu0 0
    %4081 = vmatprep.subr.bf16.mxu0 0
    %4082 = vmatpush2.bf16.msra.mxu0 0
    %4083 = vmatprep.subr.bf16.mxu0 0
    %4084 = vmatpush2.bf16.msra.mxu0 0
    %4085 = vmatprep.subr.bf16.mxu0 0
    %4086 = vmatpush2.bf16.msra.mxu0 0
    %4087 = vmatprep.subr.bf16.mxu0 0
    %4088 = vmatpush2.bf16.msra.mxu0 0
    %4089 = vmatprep.subr.bf16.mxu0 0
    %4090 = vmatpush2.bf16.msra.mxu0 0
    %4091 = vmatprep.subr.bf16.mxu0 0
    %4092 = vmatpush2.bf16.msra.mxu0 0
    %4093 = vmatprep.subr.bf16.mxu0 0
    %4094 = vmatpush2.bf16.msra.mxu0 0
    %4095 = vmatprep.mubr.bf16.mxu0 0
    %4096 = vmatmul.mubr.bf16.gmra.mxu0 %v3949
    %v4097 = vpop.f32.mrf.mxu0
    %v4098 = vadd.f32 0.0, %v4097
    %v4099 = vpop.f32.mrf.mxu0
    %v4100 = vadd.f32 0.0, %v4099
    %v4101 = vpop.f32.mrf.mxu0
    %v4102 = vpop.f32.mrf.mxu0
    %4103 = vdwg.mxu0
    %4104 = vmatprep.subr.bf16.mxu0 %v2215
    %4105 = vmatpush1.bf16.msra.mxu0 %v2214
    %4106 = vmatprep.subr.bf16.mxu0 %v2211
    %4107 = vmatpush1.bf16.msra.mxu0 %v2210
    %4108 = vmatprep.subr.bf16.mxu0 %v2207
    %4109 = vmatpush1.bf16.msra.mxu0 %v2206
    %4110 = vmatprep.subr.bf16.mxu0 %v2203
    %4111 = vmatpush1.bf16.msra.mxu0 %v2202
    %4112 = vmatprep.subr.bf16.mxu0 %v2199
    %4113 = vmatpush1.bf16.msra.mxu0 %v2198
    %4114 = vmatprep.subr.bf16.mxu0 %v2195
    %4115 = vmatpush1.bf16.msra.mxu0 %v2194
    %4116 = vmatprep.subr.bf16.mxu0 %v2191
    %4117 = vmatpush1.bf16.msra.mxu0 %v2190
    %4118 = vmatprep.subr.bf16.mxu0 %v2187
    %4119 = vmatpush1.bf16.msra.mxu0 %v2186
    %4120 = vmatprep.subr.bf16.mxu0 0
    %4121 = vmatpush2.bf16.msra.mxu0 0
    %4122 = vmatprep.subr.bf16.mxu0 0
    %4123 = vmatpush2.bf16.msra.mxu0 0
    %4124 = vmatprep.subr.bf16.mxu0 0
    %4125 = vmatpush2.bf16.msra.mxu0 0
    %4126 = vmatprep.subr.bf16.mxu0 0
    %4127 = vmatpush2.bf16.msra.mxu0 0
    %4128 = vmatprep.subr.bf16.mxu0 0
    %4129 = vmatpush2.bf16.msra.mxu0 0
    %4130 = vmatprep.subr.bf16.mxu0 0
    %4131 = vmatpush2.bf16.msra.mxu0 0
    %4132 = vmatprep.subr.bf16.mxu0 0
    %4133 = vmatpush2.bf16.msra.mxu0 0
    %4134 = vmatprep.subr.bf16.mxu0 0
    %4135 = vmatpush2.bf16.msra.mxu0 0
    %4136 = vmatprep.mubr.bf16.mxu0 0
    %4137 = vmatmul.mubr.bf16.gmra.mxu0 %v3949
    %v4138 = vpop.f32.mrf.mxu0
    %v4139 = vadd.f32 0.0, %v4138
    %v4140 = vpop.f32.mrf.mxu0
    %v4141 = vadd.f32 0.0, %v4140
    %v4142 = vpop.f32.mrf.mxu0
    %v4143 = vpop.f32.mrf.mxu0
    %4144 = vdwg.mxu0
    %v4149 = vrot.slane %v4098, 4
    %v4150 = vrot.slane %v4100, 4
    %v4151 = vrot.slane %v4139, 4
    %v4152 = vrot.slane %v4141, 4
    %v4157 = vadd.f32 %v4059, %v4149
    %v4158 = vadd.f32 %v4060, %v4150
    %v4159 = vadd.f32 %v4061, %v4151
    %v4160 = vadd.f32 %v4062, %v4152
    %v4161 = vxor.u32 %v4157, 2147483648
    %v4162 = vmul.f32 %v4161, 1.442695
    %v4163 = vpow.pop %v4162
    %v4164 = vadd.f32 %v4163, 1.0
    %v4165 = vrcp.pop %v4164
    %v4166 = vmul.f32 1.0, %v4165
    %v4167 = vxor.u32 %v4158, 2147483648
    %v4168 = vmul.f32 %v4167, 1.442695
    %v4169 = vpow.pop %v4168
    %v4170 = vadd.f32 %v4169, 1.0
    %v4171 = vrcp.pop %v4170
    %v4172 = vmul.f32 1.0, %v4171
    %v4173 = vtanh.pop %v4159
    %v4174 = vxor.u32 %v4160, 2147483648
    %v4175 = vmul.f32 %v4174, 1.442695
    %v4176 = vpow.pop %v4175
    %v4177 = vadd.f32 %v4176, 1.0
    %v4178 = vrcp.pop %v4177
    %v4179 = vmul.f32 1.0, %v4178
    %v4181 = vrot.slane %v3939, 6
    %v4183 = vmul.f32 %v4172, %v4181
    %v4184 = vmul.f32 %v4166, %v4173
    %v4185 = vadd.f32 %v4183, %v4184
    %v4186 = vtanh.pop %v4185
    %v4187 = vmul.f32 %v4179, %v4186
    %v4189 = vrot.slane %v4058, 4
    %v4191 = vpack.c.bf16 %v4187, %v4187
    %v4192 = vpack.c.bf16 %v4189, %v4189
    %v4195 = vrot.slane %v4191, 2
    %v4196 = vrot.slane %v4192, 2
    %4199 = vmatprep.subr.bf16.mxu0 %v2645
    %4200 = vmatpush1.bf16.msra.mxu0 %v2644
    %4201 = vmatprep.subr.bf16.mxu0 %v2641
    %4202 = vmatpush1.bf16.msra.mxu0 %v2640
    %4203 = vmatprep.subr.bf16.mxu0 %v2637
    %4204 = vmatpush1.bf16.msra.mxu0 %v2636
    %4205 = vmatprep.subr.bf16.mxu0 %v2633
    %4206 = vmatpush1.bf16.msra.mxu0 %v2632
    %4207 = vmatprep.subr.bf16.mxu0 %v2629
    %4208 = vmatpush1.bf16.msra.mxu0 %v2628
    %4209 = vmatprep.subr.bf16.mxu0 %v2625
    %4210 = vmatpush1.bf16.msra.mxu0 %v2624
    %4211 = vmatprep.subr.bf16.mxu0 %v2621
    %4212 = vmatpush1.bf16.msra.mxu0 %v2620
    %4213 = vmatprep.subr.bf16.mxu0 %v2617
    %4214 = vmatpush1.bf16.msra.mxu0 %v2616
    %4215 = vmatprep.subr.bf16.mxu0 %v2677
    %4216 = vmatpush2.bf16.msra.mxu0 %v2676
    %4217 = vmatprep.subr.bf16.mxu0 %v2673
    %4218 = vmatpush2.bf16.msra.mxu0 %v2672
    %4219 = vmatprep.subr.bf16.mxu0 %v2669
    %4220 = vmatpush2.bf16.msra.mxu0 %v2668
    %4221 = vmatprep.subr.bf16.mxu0 %v2665
    %4222 = vmatpush2.bf16.msra.mxu0 %v2664
    %4223 = vmatprep.subr.bf16.mxu0 %v2661
    %4224 = vmatpush2.bf16.msra.mxu0 %v2660
    %4225 = vmatprep.subr.bf16.mxu0 %v2657
    %4226 = vmatpush2.bf16.msra.mxu0 %v2656
    %4227 = vmatprep.subr.bf16.mxu0 %v2653
    %4228 = vmatpush2.bf16.msra.mxu0 %v2652
    %4229 = vmatprep.subr.bf16.mxu0 %v2649
    %4230 = vmatpush2.bf16.msra.mxu0 %v2648
    %4231 = vmatprep.mubr.bf16.mxu0 %v4196
    %4232 = vmatmul.mubr.bf16.gmra.mxu0 %v4195
    %v4233 = vpop.f32.mrf.mxu0
    %v4234 = vadd.f32 %v2035, %v4233
    %v4235 = vpop.f32.mrf.mxu0
    %v4236 = vadd.f32 %v2039, %v4235
    %v4237 = vpop.f32.mrf.mxu0
    %v4238 = vpop.f32.mrf.mxu0
    %4239 = vdwg.mxu0
    %4240 = vmatprep.subr.bf16.mxu0 %v2647
    %4241 = vmatpush1.bf16.msra.mxu0 %v2646
    %4242 = vmatprep.subr.bf16.mxu0 %v2643
    %4243 = vmatpush1.bf16.msra.mxu0 %v2642
    %4244 = vmatprep.subr.bf16.mxu0 %v2639
    %4245 = vmatpush1.bf16.msra.mxu0 %v2638
    %4246 = vmatprep.subr.bf16.mxu0 %v2635
    %4247 = vmatpush1.bf16.msra.mxu0 %v2634
    %4248 = vmatprep.subr.bf16.mxu0 %v2631
    %4249 = vmatpush1.bf16.msra.mxu0 %v2630
    %4250 = vmatprep.subr.bf16.mxu0 %v2627
    %4251 = vmatpush1.bf16.msra.mxu0 %v2626
    %4252 = vmatprep.subr.bf16.mxu0 %v2623
    %4253 = vmatpush1.bf16.msra.mxu0 %v2622
    %4254 = vmatprep.subr.bf16.mxu0 %v2619
    %4255 = vmatpush1.bf16.msra.mxu0 %v2618
    %4256 = vmatprep.subr.bf16.mxu0 %v2679
    %4257 = vmatpush2.bf16.msra.mxu0 %v2678
    %4258 = vmatprep.subr.bf16.mxu0 %v2675
    %4259 = vmatpush2.bf16.msra.mxu0 %v2674
    %4260 = vmatprep.subr.bf16.mxu0 %v2671
    %4261 = vmatpush2.bf16.msra.mxu0 %v2670
    %4262 = vmatprep.subr.bf16.mxu0 %v2667
    %4263 = vmatpush2.bf16.msra.mxu0 %v2666
    %4264 = vmatprep.subr.bf16.mxu0 %v2663
    %4265 = vmatpush2.bf16.msra.mxu0 %v2662
    %4266 = vmatprep.subr.bf16.mxu0 %v2659
    %4267 = vmatpush2.bf16.msra.mxu0 %v2658
    %4268 = vmatprep.subr.bf16.mxu0 %v2655
    %4269 = vmatpush2.bf16.msra.mxu0 %v2654
    %4270 = vmatprep.subr.bf16.mxu0 %v2651
    %4271 = vmatpush2.bf16.msra.mxu0 %v2650
    %4272 = vmatprep.mubr.bf16.mxu0 %v4196
    %4273 = vmatmul.mubr.bf16.gmra.mxu0 %v4195
    %v4274 = vpop.f32.mrf.mxu0
    %v4275 = vadd.f32 %v2043, %v4274
    %v4276 = vpop.f32.mrf.mxu0
    %v4277 = vadd.f32 %v2047, %v4276
    %v4278 = vpop.f32.mrf.mxu0
    %v4279 = vpop.f32.mrf.mxu0
    %4280 = vdwg.mxu0
    %v4281 = vxor.u32 %v4234, 2147483648
    %v4282 = vmul.f32 %v4281, 1.442695
    %v4283 = vpow.pop %v4282
    %v4284 = vadd.f32 %v4283, 1.0
    %v4285 = vrcp.pop %v4284
    %v4286 = vmul.f32 1.0, %v4285
    %v4287 = vxor.u32 %v4236, 2147483648
    %v4288 = vmul.f32 %v4287, 1.442695
    %v4289 = vpow.pop %v4288
    %v4290 = vadd.f32 %v4289, 1.0
    %v4291 = vrcp.pop %v4290
    %v4292 = vmul.f32 1.0, %v4291
    %v4293 = vtanh.pop %v4275
    %v4294 = vxor.u32 %v4277, 2147483648
    %v4295 = vmul.f32 %v4294, 1.442695
    %v4296 = vpow.pop %v4295
    %v4297 = vadd.f32 %v4296, 1.0
    %v4298 = vrcp.pop %v4297
    %v4299 = vmul.f32 1.0, %v4298
    %v4300 = vmul.f32 %v4292, %v4056
    %v4301 = vmul.f32 %v4286, %v4293
    %v4302 = vadd.f32 %v4300, %v4301
    %v4303 = vtanh.pop %v4302
    %v4304 = vmul.f32 %v4299, %v4303
    %v4305 = vld [vmem:[#allocation2 + $0x20] sm:$0xc0]
    %v4306 = vld [vmem:[#allocation2 + $0x28] sm:$0xc0]
    %v4307 = vld [vmem:[#allocation2 + $0x30] sm:$0xc0]
    %v4308 = vld [vmem:[#allocation2 + $0x38] sm:$0xc0]
    %4309 = vmatprep.subr.bf16.mxu0 %v2213
    %4310 = vmatpush1.bf16.msra.mxu0 %v2212
    %4311 = vmatprep.subr.bf16.mxu0 %v2209
    %4312 = vmatpush1.bf16.msra.mxu0 %v2208
    %4313 = vmatprep.subr.bf16.mxu0 %v2205
    %4314 = vmatpush1.bf16.msra.mxu0 %v2204
    %4315 = vmatprep.subr.bf16.mxu0 %v2201
    %4316 = vmatpush1.bf16.msra.mxu0 %v2200
    %4317 = vmatprep.subr.bf16.mxu0 %v2197
    %4318 = vmatpush1.bf16.msra.mxu0 %v2196
    %4319 = vmatprep.subr.bf16.mxu0 %v2193
    %4320 = vmatpush1.bf16.msra.mxu0 %v2192
    %4321 = vmatprep.subr.bf16.mxu0 %v2189
    %4322 = vmatpush1.bf16.msra.mxu0 %v2188
    %4323 = vmatprep.subr.bf16.mxu0 %v2185
    %4324 = vmatpush1.bf16.msra.mxu0 %v2184
    %4325 = vmatprep.subr.bf16.mxu0 0
    %4326 = vmatpush2.bf16.msra.mxu0 0
    %4327 = vmatprep.subr.bf16.mxu0 0
    %4328 = vmatpush2.bf16.msra.mxu0 0
    %4329 = vmatprep.subr.bf16.mxu0 0
    %4330 = vmatpush2.bf16.msra.mxu0 0
    %4331 = vmatprep.subr.bf16.mxu0 0
    %4332 = vmatpush2.bf16.msra.mxu0 0
    %4333 = vmatprep.subr.bf16.mxu0 0
    %4334 = vmatpush2.bf16.msra.mxu0 0
    %4335 = vmatprep.subr.bf16.mxu0 0
    %4336 = vmatpush2.bf16.msra.mxu0 0
    %4337 = vmatprep.subr.bf16.mxu0 0
    %4338 = vmatpush2.bf16.msra.mxu0 0
    %4339 = vmatprep.subr.bf16.mxu0 0
    %4340 = vmatpush2.bf16.msra.mxu0 0
    %4341 = vmatprep.mubr.bf16.mxu0 0
    %4342 = vmatmul.mubr.bf16.gmra.mxu0 %v4195
    %v4343 = vpop.f32.mrf.mxu0
    %v4344 = vadd.f32 0.0, %v4343
    %v4345 = vpop.f32.mrf.mxu0
    %v4346 = vadd.f32 0.0, %v4345
    %v4347 = vpop.f32.mrf.mxu0
    %v4348 = vpop.f32.mrf.mxu0
    %4349 = vdwg.mxu0
    %4350 = vmatprep.subr.bf16.mxu0 %v2215
    %4351 = vmatpush1.bf16.msra.mxu0 %v2214
    %4352 = vmatprep.subr.bf16.mxu0 %v2211
    %4353 = vmatpush1.bf16.msra.mxu0 %v2210
    %4354 = vmatprep.subr.bf16.mxu0 %v2207
    %4355 = vmatpush1.bf16.msra.mxu0 %v2206
    %4356 = vmatprep.subr.bf16.mxu0 %v2203
    %4357 = vmatpush1.bf16.msra.mxu0 %v2202
    %4358 = vmatprep.subr.bf16.mxu0 %v2199
    %4359 = vmatpush1.bf16.msra.mxu0 %v2198
    %4360 = vmatprep.subr.bf16.mxu0 %v2195
    %4361 = vmatpush1.bf16.msra.mxu0 %v2194
    %4362 = vmatprep.subr.bf16.mxu0 %v2191
    %4363 = vmatpush1.bf16.msra.mxu0 %v2190
    %4364 = vmatprep.subr.bf16.mxu0 %v2187
    %4365 = vmatpush1.bf16.msra.mxu0 %v2186
    %4366 = vmatprep.subr.bf16.mxu0 0
    %4367 = vmatpush2.bf16.msra.mxu0 0
    %4368 = vmatprep.subr.bf16.mxu0 0
    %4369 = vmatpush2.bf16.msra.mxu0 0
    %4370 = vmatprep.subr.bf16.mxu0 0
    %4371 = vmatpush2.bf16.msra.mxu0 0
    %4372 = vmatprep.subr.bf16.mxu0 0
    %4373 = vmatpush2.bf16.msra.mxu0 0
    %4374 = vmatprep.subr.bf16.mxu0 0
    %4375 = vmatpush2.bf16.msra.mxu0 0
    %4376 = vmatprep.subr.bf16.mxu0 0
    %4377 = vmatpush2.bf16.msra.mxu0 0
    %4378 = vmatprep.subr.bf16.mxu0 0
    %4379 = vmatpush2.bf16.msra.mxu0 0
    %4380 = vmatprep.subr.bf16.mxu0 0
    %4381 = vmatpush2.bf16.msra.mxu0 0
    %4382 = vmatprep.mubr.bf16.mxu0 0
    %4383 = vmatmul.mubr.bf16.gmra.mxu0 %v4195
    %v4384 = vpop.f32.mrf.mxu0
    %v4385 = vadd.f32 0.0, %v4384
    %v4386 = vpop.f32.mrf.mxu0
    %v4387 = vadd.f32 0.0, %v4386
    %v4388 = vpop.f32.mrf.mxu0
    %v4389 = vpop.f32.mrf.mxu0
    %4390 = vdwg.mxu0
    %v4395 = vrot.slane %v4344, 2
    %v4396 = vrot.slane %v4346, 2
    %v4397 = vrot.slane %v4385, 2
    %v4398 = vrot.slane %v4387, 2
    %v4403 = vadd.f32 %v4305, %v4395
    %v4404 = vadd.f32 %v4306, %v4396
    %v4405 = vadd.f32 %v4307, %v4397
    %v4406 = vadd.f32 %v4308, %v4398
    %v4407 = vxor.u32 %v4403, 2147483648
    %v4408 = vmul.f32 %v4407, 1.442695
    %v4409 = vpow.pop %v4408
    %v4410 = vadd.f32 %v4409, 1.0
    %v4411 = vrcp.pop %v4410
    %v4412 = vmul.f32 1.0, %v4411
    %v4413 = vxor.u32 %v4404, 2147483648
    %v4414 = vmul.f32 %v4413, 1.442695
    %v4415 = vpow.pop %v4414
    %v4416 = vadd.f32 %v4415, 1.0
    %v4417 = vrcp.pop %v4416
    %v4418 = vmul.f32 1.0, %v4417
    %v4419 = vtanh.pop %v4405
    %v4420 = vxor.u32 %v4406, 2147483648
    %v4421 = vmul.f32 %v4420, 1.442695
    %v4422 = vpow.pop %v4421
    %v4423 = vadd.f32 %v4422, 1.0
    %v4424 = vrcp.pop %v4423
    %v4425 = vmul.f32 1.0, %v4424
    %v4427 = vrot.slane %v4185, 6
    %v4429 = vmul.f32 %v4418, %v4427
    %v4430 = vmul.f32 %v4412, %v4419
    %v4431 = vadd.f32 %v4429, %v4430
    %v4432 = vtanh.pop %v4431
    %v4433 = vmul.f32 %v4425, %v4432
    %v4435 = vrot.slane %v4304, 2
    %v4437 = vpack.c.bf16 %v4433, %v4433
    %v4438 = vpack.c.bf16 %v4435, %v4435
    %v4441 = vrot.slane %v4437, 3
    %v4442 = vrot.slane %v4438, 3
    %4445 = vmatprep.subr.bf16.mxu0 %v2645
    %4446 = vmatpush1.bf16.msra.mxu0 %v2644
    %4447 = vmatprep.subr.bf16.mxu0 %v2641
    %4448 = vmatpush1.bf16.msra.mxu0 %v2640
    %4449 = vmatprep.subr.bf16.mxu0 %v2637
    %4450 = vmatpush1.bf16.msra.mxu0 %v2636
    %4451 = vmatprep.subr.bf16.mxu0 %v2633
    %4452 = vmatpush1.bf16.msra.mxu0 %v2632
    %4453 = vmatprep.subr.bf16.mxu0 %v2629
    %4454 = vmatpush1.bf16.msra.mxu0 %v2628
    %4455 = vmatprep.subr.bf16.mxu0 %v2625
    %4456 = vmatpush1.bf16.msra.mxu0 %v2624
    %4457 = vmatprep.subr.bf16.mxu0 %v2621
    %4458 = vmatpush1.bf16.msra.mxu0 %v2620
    %4459 = vmatprep.subr.bf16.mxu0 %v2617
    %4460 = vmatpush1.bf16.msra.mxu0 %v2616
    %4461 = vmatprep.subr.bf16.mxu0 %v2677
    %4462 = vmatpush2.bf16.msra.mxu0 %v2676
    %4463 = vmatprep.subr.bf16.mxu0 %v2673
    %4464 = vmatpush2.bf16.msra.mxu0 %v2672
    %4465 = vmatprep.subr.bf16.mxu0 %v2669
    %4466 = vmatpush2.bf16.msra.mxu0 %v2668
    %4467 = vmatprep.subr.bf16.mxu0 %v2665
    %4468 = vmatpush2.bf16.msra.mxu0 %v2664
    %4469 = vmatprep.subr.bf16.mxu0 %v2661
    %4470 = vmatpush2.bf16.msra.mxu0 %v2660
    %4471 = vmatprep.subr.bf16.mxu0 %v2657
    %4472 = vmatpush2.bf16.msra.mxu0 %v2656
    %4473 = vmatprep.subr.bf16.mxu0 %v2653
    %4474 = vmatpush2.bf16.msra.mxu0 %v2652
    %4475 = vmatprep.subr.bf16.mxu0 %v2649
    %4476 = vmatpush2.bf16.msra.mxu0 %v2648
    %4477 = vmatprep.mubr.bf16.mxu0 %v4442
    %4478 = vmatmul.mubr.bf16.gmra.mxu0 %v4441
    %v4479 = vpop.f32.mrf.mxu0
    %v4480 = vadd.f32 %v2035, %v4479
    %v4481 = vpop.f32.mrf.mxu0
    %v4482 = vadd.f32 %v2039, %v4481
    %v4483 = vpop.f32.mrf.mxu0
    %v4484 = vpop.f32.mrf.mxu0
    %4485 = vdwg.mxu0
    %4486 = vmatprep.subr.bf16.mxu0 %v2647
    %4487 = vmatpush1.bf16.msra.mxu0 %v2646
    %4488 = vmatprep.subr.bf16.mxu0 %v2643
    %4489 = vmatpush1.bf16.msra.mxu0 %v2642
    %4490 = vmatprep.subr.bf16.mxu0 %v2639
    %4491 = vmatpush1.bf16.msra.mxu0 %v2638
    %4492 = vmatprep.subr.bf16.mxu0 %v2635
    %4493 = vmatpush1.bf16.msra.mxu0 %v2634
    %4494 = vmatprep.subr.bf16.mxu0 %v2631
    %4495 = vmatpush1.bf16.msra.mxu0 %v2630
    %4496 = vmatprep.subr.bf16.mxu0 %v2627
    %4497 = vmatpush1.bf16.msra.mxu0 %v2626
    %4498 = vmatprep.subr.bf16.mxu0 %v2623
    %4499 = vmatpush1.bf16.msra.mxu0 %v2622
    %4500 = vmatprep.subr.bf16.mxu0 %v2619
    %4501 = vmatpush1.bf16.msra.mxu0 %v2618
    %4502 = vmatprep.subr.bf16.mxu0 %v2679
    %4503 = vmatpush2.bf16.msra.mxu0 %v2678
    %4504 = vmatprep.subr.bf16.mxu0 %v2675
    %4505 = vmatpush2.bf16.msra.mxu0 %v2674
    %4506 = vmatprep.subr.bf16.mxu0 %v2671
    %4507 = vmatpush2.bf16.msra.mxu0 %v2670
    %4508 = vmatprep.subr.bf16.mxu0 %v2667
    %4509 = vmatpush2.bf16.msra.mxu0 %v2666
    %4510 = vmatprep.subr.bf16.mxu0 %v2663
    %4511 = vmatpush2.bf16.msra.mxu0 %v2662
    %4512 = vmatprep.subr.bf16.mxu0 %v2659
    %4513 = vmatpush2.bf16.msra.mxu0 %v2658
    %4514 = vmatprep.subr.bf16.mxu0 %v2655
    %4515 = vmatpush2.bf16.msra.mxu0 %v2654
    %4516 = vmatprep.subr.bf16.mxu0 %v2651
    %4517 = vmatpush2.bf16.msra.mxu0 %v2650
    %4518 = vmatprep.mubr.bf16.mxu0 %v4442
    %4519 = vmatmul.mubr.bf16.gmra.mxu0 %v4441
    %v4520 = vpop.f32.mrf.mxu0
    %v4521 = vadd.f32 %v2043, %v4520
    %v4522 = vpop.f32.mrf.mxu0
    %v4523 = vadd.f32 %v2047, %v4522
    %v4524 = vpop.f32.mrf.mxu0
    %v4525 = vpop.f32.mrf.mxu0
    %4526 = vdwg.mxu0
    %v4527 = vxor.u32 %v4480, 2147483648
    %v4528 = vmul.f32 %v4527, 1.442695
    %v4529 = vpow.pop %v4528
    %v4530 = vadd.f32 %v4529, 1.0
    %v4531 = vrcp.pop %v4530
    %v4532 = vmul.f32 1.0, %v4531
    %v4533 = vxor.u32 %v4482, 2147483648
    %v4534 = vmul.f32 %v4533, 1.442695
    %v4535 = vpow.pop %v4534
    %v4536 = vadd.f32 %v4535, 1.0
    %v4537 = vrcp.pop %v4536
    %v4538 = vmul.f32 1.0, %v4537
    %v4539 = vtanh.pop %v4521
    %v4540 = vxor.u32 %v4523, 2147483648
    %v4541 = vmul.f32 %v4540, 1.442695
    %v4542 = vpow.pop %v4541
    %v4543 = vadd.f32 %v4542, 1.0
    %v4544 = vrcp.pop %v4543
    %v4545 = vmul.f32 1.0, %v4544
    %v4546 = vmul.f32 %v4538, %v4302
    %v4547 = vmul.f32 %v4532, %v4539
    %v4548 = vadd.f32 %v4546, %v4547
    %v4549 = vtanh.pop %v4548
    %v4550 = vmul.f32 %v4545, %v4549
    %v4552 = vrot.slane %v4550, 2
    %v4554 = vpack.c.bf16 %v4552, %v4552
    %v4555 = vld [vmem:[#allocation8] sm:$0xff]
    %v4556 = vld [vmem:[#allocation8 + $0x8] sm:$0xff]
    %v4557 = vld [vmem:[#allocation8 + $0x10] sm:$0xff]
    %v4558 = vld [vmem:[#allocation8 + $0x18] sm:$0xff]
    %v4559 = vld [vmem:[#allocation8 + $0x20] sm:$0xff]
    %v4560 = vld [vmem:[#allocation8 + $0x28] sm:$0xff]
    %v4561 = vld [vmem:[#allocation8 + $0x30] sm:$0xff]
    %v4562 = vld [vmem:[#allocation8 + $0x38] sm:$0xff]
    %v4563 = vld [vmem:[#allocation8 + $0x40] sm:$0xff]
    %v4564 = vld [vmem:[#allocation8 + $0x48] sm:$0xff]
    %v4565 = vld [vmem:[#allocation8 + $0x50] sm:$0xff]
    %v4566 = vld [vmem:[#allocation8 + $0x58] sm:$0xff]
    %v4567 = vld [vmem:[#allocation8 + $0x60] sm:$0xff]
    %v4568 = vld [vmem:[#allocation8 + $0x68] sm:$0xff]
    %v4569 = vld [vmem:[#allocation8 + $0x70] sm:$0xff]
    %v4570 = vld [vmem:[#allocation8 + $0x78] sm:$0xff]
    %v4571 = vld [vmem:[#allocation8 + $0x80] sm:$0xff]
    %v4572 = vld [vmem:[#allocation8 + $0x88] sm:$0xff]
    %v4573 = vld [vmem:[#allocation8 + $0x90] sm:$0xff]
    %v4574 = vld [vmem:[#allocation8 + $0x98] sm:$0xff]
    %v4575 = vld [vmem:[#allocation8 + $0xa0] sm:$0xff]
    %v4576 = vld [vmem:[#allocation8 + $0xa8] sm:$0xff]
    %v4577 = vld [vmem:[#allocation8 + $0xb0] sm:$0xff]
    %v4578 = vld [vmem:[#allocation8 + $0xb8] sm:$0xff]
    %v4579 = vld [vmem:[#allocation8 + $0xc0] sm:$0xff]
    %v4580 = vld [vmem:[#allocation8 + $0xc8] sm:$0xff]
    %v4581 = vld [vmem:[#allocation8 + $0xd0] sm:$0xff]
    %v4582 = vld [vmem:[#allocation8 + $0xd8] sm:$0xff]
    %v4583 = vld [vmem:[#allocation8 + $0xe0] sm:$0xff]
    %v4584 = vld [vmem:[#allocation8 + $0xe8] sm:$0xff]
    %v4585 = vld [vmem:[#allocation8 + $0xf0] sm:$0xff]
    %v4586 = vld [vmem:[#allocation8 + $0xf8] sm:$0xff]
    %v4587 = vld [vmem:[#allocation8 + $0x100] sm:$0xff]
    %v4588 = vld [vmem:[#allocation8 + $0x108] sm:$0xff]
    %v4589 = vld [vmem:[#allocation8 + $0x110] sm:$0xff]
    %v4590 = vld [vmem:[#allocation8 + $0x118] sm:$0xff]
    %v4591 = vld [vmem:[#allocation8 + $0x120] sm:$0xff]
    %v4592 = vld [vmem:[#allocation8 + $0x128] sm:$0xff]
    %v4593 = vld [vmem:[#allocation8 + $0x130] sm:$0xff]
    %v4594 = vld [vmem:[#allocation8 + $0x138] sm:$0xff]
    %v4595 = vld [vmem:[#allocation8 + $0x140] sm:$0xff]
    %v4596 = vld [vmem:[#allocation8 + $0x148] sm:$0xff]
    %v4597 = vld [vmem:[#allocation8 + $0x150] sm:$0xff]
    %v4598 = vld [vmem:[#allocation8 + $0x158] sm:$0xff]
    %v4599 = vld [vmem:[#allocation8 + $0x160] sm:$0xff]
    %v4600 = vld [vmem:[#allocation8 + $0x168] sm:$0xff]
    %v4601 = vld [vmem:[#allocation8 + $0x170] sm:$0xff]
    %v4602 = vld [vmem:[#allocation8 + $0x178] sm:$0xff]
    %v4603 = vld [vmem:[#allocation8 + $0x180] sm:$0xff]
    %v4604 = vld [vmem:[#allocation8 + $0x188] sm:$0xff]
    %v4605 = vld [vmem:[#allocation8 + $0x190] sm:$0xff]
    %v4606 = vld [vmem:[#allocation8 + $0x198] sm:$0xff]
    %v4607 = vld [vmem:[#allocation8 + $0x1a0] sm:$0xff]
    %v4608 = vld [vmem:[#allocation8 + $0x1a8] sm:$0xff]
    %v4609 = vld [vmem:[#allocation8 + $0x1b0] sm:$0xff]
    %v4610 = vld [vmem:[#allocation8 + $0x1b8] sm:$0xff]
    %v4611 = vld [vmem:[#allocation8 + $0x1c0] sm:$0xff]
    %v4612 = vld [vmem:[#allocation8 + $0x1c8] sm:$0xff]
    %v4613 = vld [vmem:[#allocation8 + $0x1d0] sm:$0xff]
    %v4614 = vld [vmem:[#allocation8 + $0x1d8] sm:$0xff]
    %v4615 = vld [vmem:[#allocation8 + $0x1e0] sm:$0xff]
    %v4616 = vld [vmem:[#allocation8 + $0x1e8] sm:$0xff]
    %v4617 = vld [vmem:[#allocation8 + $0x1f0] sm:$0xff]
    %v4618 = vld [vmem:[#allocation8 + $0x1f8] sm:$0xff]
    %v4619 = vld [vmem:[%s7] sm:$0xf]
    %v4621 = vlaneseq
    %v4622 = vshrl.u32 %v4621, 7
    %v4623 = vsub.s32 0, %v4622
    %v4624 = vrot.slane %v4619, %v4623
    %v4625 = vlaneseq
    %v4626 = vshrl.u32 %v4625, 7
    %v4627 = vsub.s32 1, %v4626
    %v4628 = vrot.slane %v4619, %v4627
    %v4629 = vlaneseq
    %v4630 = vshrl.u32 %v4629, 7
    %v4631 = vsub.s32 2, %v4630
    %v4632 = vrot.slane %v4619, %v4631
    %v4633 = vlaneseq
    %v4634 = vshrl.u32 %v4633, 7
    %v4635 = vsub.s32 3, %v4634
    %v4636 = vrot.slane %v4619, %v4635
    %v4642 = vrot.slane %v4554, 3
    %v4708 = vunpack.c.l.b16 %v4555
    %v4709 = vunpack.c.h.b16 %v4555
    %v4710 = vunpack.c.l.b16 %v4556
    %v4711 = vunpack.c.h.b16 %v4556
    %v4712 = vunpack.c.l.b16 %v4557
    %v4713 = vunpack.c.h.b16 %v4557
    %v4714 = vunpack.c.l.b16 %v4558
    %v4715 = vunpack.c.h.b16 %v4558
    %v4716 = vunpack.c.l.b16 %v4559
    %v4717 = vunpack.c.h.b16 %v4559
    %v4718 = vunpack.c.l.b16 %v4560
    %v4719 = vunpack.c.h.b16 %v4560
    %v4720 = vunpack.c.l.b16 %v4561
    %v4721 = vunpack.c.h.b16 %v4561
    %v4722 = vunpack.c.l.b16 %v4562
    %v4723 = vunpack.c.h.b16 %v4562
    %v4724 = vunpack.c.l.b16 %v4563
    %v4725 = vunpack.c.h.b16 %v4563
    %v4726 = vunpack.c.l.b16 %v4564
    %v4727 = vunpack.c.h.b16 %v4564
    %v4728 = vunpack.c.l.b16 %v4565
    %v4729 = vunpack.c.h.b16 %v4565
    %v4730 = vunpack.c.l.b16 %v4566
    %v4731 = vunpack.c.h.b16 %v4566
    %v4732 = vunpack.c.l.b16 %v4567
    %v4733 = vunpack.c.h.b16 %v4567
    %v4734 = vunpack.c.l.b16 %v4568
    %v4735 = vunpack.c.h.b16 %v4568
    %v4736 = vunpack.c.l.b16 %v4569
    %v4737 = vunpack.c.h.b16 %v4569
    %v4738 = vunpack.c.l.b16 %v4570
    %v4739 = vunpack.c.h.b16 %v4570
    %v4740 = vunpack.c.l.b16 %v4571
    %v4741 = vunpack.c.h.b16 %v4571
    %v4742 = vunpack.c.l.b16 %v4572
    %v4743 = vunpack.c.h.b16 %v4572
    %v4744 = vunpack.c.l.b16 %v4573
    %v4745 = vunpack.c.h.b16 %v4573
    %v4746 = vunpack.c.l.b16 %v4574
    %v4747 = vunpack.c.h.b16 %v4574
    %v4748 = vunpack.c.l.b16 %v4575
    %v4749 = vunpack.c.h.b16 %v4575
    %v4750 = vunpack.c.l.b16 %v4576
    %v4751 = vunpack.c.h.b16 %v4576
    %v4752 = vunpack.c.l.b16 %v4577
    %v4753 = vunpack.c.h.b16 %v4577
    %v4754 = vunpack.c.l.b16 %v4578
    %v4755 = vunpack.c.h.b16 %v4578
    %v4756 = vunpack.c.l.b16 %v4579
    %v4757 = vunpack.c.h.b16 %v4579
    %v4758 = vunpack.c.l.b16 %v4580
    %v4759 = vunpack.c.h.b16 %v4580
    %v4760 = vunpack.c.l.b16 %v4581
    %v4761 = vunpack.c.h.b16 %v4581
    %v4762 = vunpack.c.l.b16 %v4582
    %v4763 = vunpack.c.h.b16 %v4582
    %v4764 = vunpack.c.l.b16 %v4583
    %v4765 = vunpack.c.h.b16 %v4583
    %v4766 = vunpack.c.l.b16 %v4584
    %v4767 = vunpack.c.h.b16 %v4584
    %v4768 = vunpack.c.l.b16 %v4585
    %v4769 = vunpack.c.h.b16 %v4585
    %v4770 = vunpack.c.l.b16 %v4586
    %v4771 = vunpack.c.h.b16 %v4586
    %v4772 = vunpack.c.l.b16 %v4587
    %v4773 = vunpack.c.h.b16 %v4587
    %v4774 = vunpack.c.l.b16 %v4588
    %v4775 = vunpack.c.h.b16 %v4588
    %v4776 = vunpack.c.l.b16 %v4589
    %v4777 = vunpack.c.h.b16 %v4589
    %v4778 = vunpack.c.l.b16 %v4590
    %v4779 = vunpack.c.h.b16 %v4590
    %v4780 = vunpack.c.l.b16 %v4591
    %v4781 = vunpack.c.h.b16 %v4591
    %v4782 = vunpack.c.l.b16 %v4592
    %v4783 = vunpack.c.h.b16 %v4592
    %v4784 = vunpack.c.l.b16 %v4593
    %v4785 = vunpack.c.h.b16 %v4593
    %v4786 = vunpack.c.l.b16 %v4594
    %v4787 = vunpack.c.h.b16 %v4594
    %v4788 = vunpack.c.l.b16 %v4595
    %v4789 = vunpack.c.h.b16 %v4595
    %v4790 = vunpack.c.l.b16 %v4596
    %v4791 = vunpack.c.h.b16 %v4596
    %v4792 = vunpack.c.l.b16 %v4597
    %v4793 = vunpack.c.h.b16 %v4597
    %v4794 = vunpack.c.l.b16 %v4598
    %v4795 = vunpack.c.h.b16 %v4598
    %v4796 = vunpack.c.l.b16 %v4599
    %v4797 = vunpack.c.h.b16 %v4599
    %v4798 = vunpack.c.l.b16 %v4600
    %v4799 = vunpack.c.h.b16 %v4600
    %v4800 = vunpack.c.l.b16 %v4601
    %v4801 = vunpack.c.h.b16 %v4601
    %v4802 = vunpack.c.l.b16 %v4602
    %v4803 = vunpack.c.h.b16 %v4602
    %v4804 = vunpack.c.l.b16 %v4603
    %v4805 = vunpack.c.h.b16 %v4603
    %v4806 = vunpack.c.l.b16 %v4604
    %v4807 = vunpack.c.h.b16 %v4604
    %v4808 = vunpack.c.l.b16 %v4605
    %v4809 = vunpack.c.h.b16 %v4605
    %v4810 = vunpack.c.l.b16 %v4606
    %v4811 = vunpack.c.h.b16 %v4606
    %v4812 = vunpack.c.l.b16 %v4607
    %v4813 = vunpack.c.h.b16 %v4607
    %v4814 = vunpack.c.l.b16 %v4608
    %v4815 = vunpack.c.h.b16 %v4608
    %v4816 = vunpack.c.l.b16 %v4609
    %v4817 = vunpack.c.h.b16 %v4609
    %v4818 = vunpack.c.l.b16 %v4610
    %v4819 = vunpack.c.h.b16 %v4610
    %v4820 = vunpack.c.l.b16 %v4611
    %v4821 = vunpack.c.h.b16 %v4611
    %v4822 = vunpack.c.l.b16 %v4612
    %v4823 = vunpack.c.h.b16 %v4612
    %v4824 = vunpack.c.l.b16 %v4613
    %v4825 = vunpack.c.h.b16 %v4613
    %v4826 = vunpack.c.l.b16 %v4614
    %v4827 = vunpack.c.h.b16 %v4614
    %v4828 = vunpack.c.l.b16 %v4615
    %v4829 = vunpack.c.h.b16 %v4615
    %v4830 = vunpack.c.l.b16 %v4616
    %v4831 = vunpack.c.h.b16 %v4616
    %v4832 = vunpack.c.l.b16 %v4617
    %v4833 = vunpack.c.h.b16 %v4617
    %v4834 = vunpack.c.l.b16 %v4618
    %v4835 = vunpack.c.h.b16 %v4618
    %v4836 = vpack.c.b16 %v4712, %v4708
    %v4837 = vpack.c.b16 %v4713, %v4709
    %v4838 = vpack.c.b16 %v4714, %v4710
    %v4839 = vpack.c.b16 %v4715, %v4711
    %v4840 = vpack.c.b16 %v4720, %v4716
    %v4841 = vpack.c.b16 %v4721, %v4717
    %v4842 = vpack.c.b16 %v4722, %v4718
    %v4843 = vpack.c.b16 %v4723, %v4719
    %v4844 = vpack.c.b16 %v4728, %v4724
    %v4845 = vpack.c.b16 %v4729, %v4725
    %v4846 = vpack.c.b16 %v4730, %v4726
    %v4847 = vpack.c.b16 %v4731, %v4727
    %v4848 = vpack.c.b16 %v4736, %v4732
    %v4849 = vpack.c.b16 %v4737, %v4733
    %v4850 = vpack.c.b16 %v4738, %v4734
    %v4851 = vpack.c.b16 %v4739, %v4735
    %v4852 = vpack.c.b16 %v4744, %v4740
    %v4853 = vpack.c.b16 %v4745, %v4741
    %v4854 = vpack.c.b16 %v4746, %v4742
    %v4855 = vpack.c.b16 %v4747, %v4743
    %v4856 = vpack.c.b16 %v4752, %v4748
    %v4857 = vpack.c.b16 %v4753, %v4749
    %v4858 = vpack.c.b16 %v4754, %v4750
    %v4859 = vpack.c.b16 %v4755, %v4751
    %v4860 = vpack.c.b16 %v4760, %v4756
    %v4861 = vpack.c.b16 %v4761, %v4757
    %v4862 = vpack.c.b16 %v4762, %v4758
    %v4863 = vpack.c.b16 %v4763, %v4759
    %v4864 = vpack.c.b16 %v4768, %v4764
    %v4865 = vpack.c.b16 %v4769, %v4765
    %v4866 = vpack.c.b16 %v4770, %v4766
    %v4867 = vpack.c.b16 %v4771, %v4767
    %v4868 = vpack.c.b16 %v4776, %v4772
    %v4869 = vpack.c.b16 %v4777, %v4773
    %v4870 = vpack.c.b16 %v4778, %v4774
    %v4871 = vpack.c.b16 %v4779, %v4775
    %v4872 = vpack.c.b16 %v4784, %v4780
    %v4873 = vpack.c.b16 %v4785, %v4781
    %v4874 = vpack.c.b16 %v4786, %v4782
    %v4875 = vpack.c.b16 %v4787, %v4783
    %v4876 = vpack.c.b16 %v4792, %v4788
    %v4877 = vpack.c.b16 %v4793, %v4789
    %v4878 = vpack.c.b16 %v4794, %v4790
    %v4879 = vpack.c.b16 %v4795, %v4791
    %v4880 = vpack.c.b16 %v4800, %v4796
    %v4881 = vpack.c.b16 %v4801, %v4797
    %v4882 = vpack.c.b16 %v4802, %v4798
    %v4883 = vpack.c.b16 %v4803, %v4799
    %v4884 = vpack.c.b16 %v4808, %v4804
    %v4885 = vpack.c.b16 %v4809, %v4805
    %v4886 = vpack.c.b16 %v4810, %v4806
    %v4887 = vpack.c.b16 %v4811, %v4807
    %v4888 = vpack.c.b16 %v4816, %v4812
    %v4889 = vpack.c.b16 %v4817, %v4813
    %v4890 = vpack.c.b16 %v4818, %v4814
    %v4891 = vpack.c.b16 %v4819, %v4815
    %v4892 = vpack.c.b16 %v4824, %v4820
    %v4893 = vpack.c.b16 %v4825, %v4821
    %v4894 = vpack.c.b16 %v4826, %v4822
    %v4895 = vpack.c.b16 %v4827, %v4823
    %v4896 = vpack.c.b16 %v4832, %v4828
    %v4897 = vpack.c.b16 %v4833, %v4829
    %v4898 = vpack.c.b16 %v4834, %v4830
    %v4899 = vpack.c.b16 %v4835, %v4831
    %4964 = vmatprep.subr.bf16.mxu0 %v4865
    %4965 = vmatpush1.bf16.msra.mxu0 %v4864
    %4966 = vmatprep.subr.bf16.mxu0 %v4861
    %4967 = vmatpush1.bf16.msra.mxu0 %v4860
    %4968 = vmatprep.subr.bf16.mxu0 %v4857
    %4969 = vmatpush1.bf16.msra.mxu0 %v4856
    %4970 = vmatprep.subr.bf16.mxu0 %v4853
    %4971 = vmatpush1.bf16.msra.mxu0 %v4852
    %4972 = vmatprep.subr.bf16.mxu0 %v4849
    %4973 = vmatpush1.bf16.msra.mxu0 %v4848
    %4974 = vmatprep.subr.bf16.mxu0 %v4845
    %4975 = vmatpush1.bf16.msra.mxu0 %v4844
    %4976 = vmatprep.subr.bf16.mxu0 %v4841
    %4977 = vmatpush1.bf16.msra.mxu0 %v4840
    %4978 = vmatprep.subr.bf16.mxu0 %v4837
    %4979 = vmatpush1.bf16.msra.mxu0 %v4836
    %4980 = vmatprep.subr.bf16.mxu0 %v4897
    %4981 = vmatpush2.bf16.msra.mxu0 %v4896
    %4982 = vmatprep.subr.bf16.mxu0 %v4893
    %4983 = vmatpush2.bf16.msra.mxu0 %v4892
    %4984 = vmatprep.subr.bf16.mxu0 %v4889
    %4985 = vmatpush2.bf16.msra.mxu0 %v4888
    %4986 = vmatprep.subr.bf16.mxu0 %v4885
    %4987 = vmatpush2.bf16.msra.mxu0 %v4884
    %4988 = vmatprep.subr.bf16.mxu0 %v4881
    %4989 = vmatpush2.bf16.msra.mxu0 %v4880
    %4990 = vmatprep.subr.bf16.mxu0 %v4877
    %4991 = vmatpush2.bf16.msra.mxu0 %v4876
    %4992 = vmatprep.subr.bf16.mxu0 %v4873
    %4993 = vmatpush2.bf16.msra.mxu0 %v4872
    %4994 = vmatprep.subr.bf16.mxu0 %v4869
    %4995 = vmatpush2.bf16.msra.mxu0 %v4868
    %4996 = vmatprep.mubr.bf16.mxu0 %v4642
    %4997 = vmatmul.mubr.bf16.gmra.mxu0 %v4441
    %v4998 = vpop.f32.mrf.mxu0
    %v4999 = vadd.f32 %v4624, %v4998
    %v5000 = vpop.f32.mrf.mxu0
    %v5001 = vadd.f32 %v4628, %v5000
    %v5002 = vpop.f32.mrf.mxu0
    %v5003 = vpop.f32.mrf.mxu0
    %5004 = vdwg.mxu0
    %5005 = vmatprep.subr.bf16.mxu0 %v4867
    %5006 = vmatpush1.bf16.msra.mxu0 %v4866
    %5007 = vmatprep.subr.bf16.mxu0 %v4863
    %5008 = vmatpush1.bf16.msra.mxu0 %v4862
    %5009 = vmatprep.subr.bf16.mxu0 %v4859
    %5010 = vmatpush1.bf16.msra.mxu0 %v4858
    %5011 = vmatprep.subr.bf16.mxu0 %v4855
    %5012 = vmatpush1.bf16.msra.mxu0 %v4854
    %5013 = vmatprep.subr.bf16.mxu0 %v4851
    %5014 = vmatpush1.bf16.msra.mxu0 %v4850
    %5015 = vmatprep.subr.bf16.mxu0 %v4847
    %5016 = vmatpush1.bf16.msra.mxu0 %v4846
    %5017 = vmatprep.subr.bf16.mxu0 %v4843
    %5018 = vmatpush1.bf16.msra.mxu0 %v4842
    %5019 = vmatprep.subr.bf16.mxu0 %v4839
    %5020 = vmatpush1.bf16.msra.mxu0 %v4838
    %5021 = vmatprep.subr.bf16.mxu0 %v4899
    %5022 = vmatpush2.bf16.msra.mxu0 %v4898
    %5023 = vmatprep.subr.bf16.mxu0 %v4895
    %5024 = vmatpush2.bf16.msra.mxu0 %v4894
    %5025 = vmatprep.subr.bf16.mxu0 %v4891
    %5026 = vmatpush2.bf16.msra.mxu0 %v4890
    %5027 = vmatprep.subr.bf16.mxu0 %v4887
    %5028 = vmatpush2.bf16.msra.mxu0 %v4886
    %5029 = vmatprep.subr.bf16.mxu0 %v4883
    %5030 = vmatpush2.bf16.msra.mxu0 %v4882
    %5031 = vmatprep.subr.bf16.mxu0 %v4879
    %5032 = vmatpush2.bf16.msra.mxu0 %v4878
    %5033 = vmatprep.subr.bf16.mxu0 %v4875
    %5034 = vmatpush2.bf16.msra.mxu0 %v4874
    %5035 = vmatprep.subr.bf16.mxu0 %v4871
    %5036 = vmatpush2.bf16.msra.mxu0 %v4870
    %5037 = vmatprep.mubr.bf16.mxu0 %v4642
    %5038 = vmatmul.mubr.bf16.gmra.mxu0 %v4441
    %v5039 = vpop.f32.mrf.mxu0
    %v5040 = vadd.f32 %v4632, %v5039
    %v5041 = vpop.f32.mrf.mxu0
    %v5042 = vadd.f32 %v4636, %v5041
    %v5043 = vpop.f32.mrf.mxu0
    %v5044 = vpop.f32.mrf.mxu0
    %5045 = vdwg.mxu0
    %vm5046 = vcmask 1041408
    %v5047 = vsel %vm5046, %v4999, -inf
    %v5048 = vsel %vm5046, %v5001, -inf
    %v5049 = vsel %vm5046, %v5040, -inf
    %v5050 = vsel %vm5046, %v5042, -inf
    %v5051 = vmax.f32 %v5047, %v5048
    %v5052 = vmax.f32 %v5049, %v5050
    %v5053 = vmax.f32 %v5051, %v5052
    %5054 = vmax.xlane.f32.xlu0 %v5053
    %v5055 = vpop.xlane.xlu0 %5054
    %v5056 = vsub.f32 %v4999, %v5055
    %v5057 = vsub.f32 %v5001, %v5055
    %v5058 = vsub.f32 %v5040, %v5055
    %v5059 = vsub.f32 %v5042, %v5055
    %v5060 = vmul.f32 %v5056, 1.442695
    %v5061 = vpow.pop %v5060
    %v5062 = vmul.f32 %v5057, 1.442695
    %v5063 = vpow.pop %v5062
    %v5064 = vmul.f32 %v5058, 1.442695
    %v5065 = vpow.pop %v5064
    %v5066 = vmul.f32 %v5059, 1.442695
    %v5067 = vpow.pop %v5066
    %v5068 = vsel %vm5046, %v5061, 0.0
    %v5069 = vsel %vm5046, %v5063, 0.0
    %v5070 = vadd.f32 %v5068, %v5069
    %v5071 = vsel %vm5046, %v5065, 0.0
    %v5072 = vadd.f32 %v5070, %v5071
    %v5073 = vsel %vm5046, %v5067, 0.0
    %v5074 = vadd.f32 %v5072, %v5073
    %5075 = vadd.xlane.f32.xlu0 %v5074
    %v5076 = vpop.xlane.xlu0 %5075
    %v5077 = vrcp.pop %v5076
    %v5078 = vmul.f32 %v5061, %v5077
    %v5079 = vmul.f32 %v5063, %v5077
    %v5080 = vmul.f32 %v5065, %v5077
    %v5081 = vmul.f32 %v5067, %v5077
    %v5082 = vsel %vm5046, %v5078, 0.0
    %v5083 = vsel %vm5046, %v5079, 0.0
    %v5084 = vadd.f32 %v5082, %v5083
    %v5085 = vsel %vm5046, %v5080, 0.0
    %v5086 = vadd.f32 %v5084, %v5085
    %v5087 = vsel %vm5046, %v5081, 0.0
    %v5088 = vadd.f32 %v5086, %v5087
    %5089 = vadd.xlane.f32.xlu0 %v5088
    %v5090 = vpop.xlane.xlu0 %5089
    %v5091 = vrot.slane %v5090, 4
    %v5092 = vadd.f32 %v5090, %v5091
    %v5093 = vrot.slane %v5092, 2
    %v5094 = vadd.f32 %v5092, %v5093
    %v5095 = vrot.slane %v5094, 1
    %v5096 = vadd.f32 %v5094, %v5095
    %s5097 = vtos %v5096
    %p5098 = scmp.gt.f32.partialorder %s5097, 1.0
    %s5099 = scalar_select %p5098, %s5097, 1.0
    %v5100 = vstv %s5099
    %v5101 = vrcp.pop %v5100
    %v5102 = vmul.f32 %v5078, %v5101
    %v5103 = vmul.f32 %v5079, %v5101
    %v5104 = vmul.f32 %v5080, %v5101
    %v5105 = vmul.f32 %v5081, %v5101
    %v5110 = vcombine.low %v5102, %v5103
    %v5111 = vcombine.low %v5104, %v5105
    %v5113 = vunpack.c.l.s4 1983009808
    %v5114 = vunpack.c.0.s8 %v5113
    %v5115 = vlaneseq
    %v5116 = vshrl.u32 %v5115, 7
    %v5117 = vsub.s32 %v5114, %v5116
    %v5118 = vrot.slane %v5110, %v5117
    %v5120 = vunpack.c.l.s4 1983009808
    %v5121 = vunpack.c.0.s8 %v5120
    %v5122 = vlaneseq
    %v5123 = vshrl.u32 %v5122, 7
    %v5124 = vsub.s32 %v5121, %v5123
    %v5125 = vrot.slane %v5111, %v5124
    %v5126 = vcombine.low %v5118, %v5125
    %5128 = vst [vmem:[#allocation9] sm:$0xff] %v5126
    // Predicated region
    $region46: #{deep_portfolio_forward.1} parent=1 // pred_check
      _
    $region47: #{deep_portfolio_forward.1} parent=1 // pred_check_branch
      %5130 = sbr.rel (0) target = $region49
    $region48: #{deep_portfolio_forward.1} parent=1 // pred_region
      %s5132 = ssub.s32 128, 128
      %5133 = vsyncadd [#allocation5], %s5132
      %s5135 = sshll.u32 [#allocation9], 4
      %s5136 = int_to_ptr.vmem [resolvable:$true] %s5135
      %5138 = dma.vmem_to_hbm [thread:$0]  %s5136, 128, %s8, [#allocation5]
    $region49: #{deep_portfolio_forward.1} parent=1 // pred_fallthru
      _
    // Predicated region
    $region50: #{deep_portfolio_forward.1} parent=1 // pred_check
      _
    $region51: #{deep_portfolio_forward.1} parent=1 // pred_check_branch
      %5140 = sbr.rel (0) target = $region53
    $region52: #{deep_portfolio_forward.1} parent=1 // pred_region
      %5141 = dma.done [#allocation5], 128
    $region53: #{deep_portfolio_forward.1} parent=1 // pred_fallthru
      _
    %5142 = vsyncpa [#allocation4], 1
    %5143 = vsyncpa [#allocation7], 1
    %5144 = vsyncpa [#allocation5], 1

</llo_original>
